<compile_context>
chip_gen: v7x
topology: tpu7x:2x2x1
jax: 0.10.0
libtpu: 0.0.40
codegen_flags: <defaults>
</compile_context>

<pallas_src>
import functools

import jax
import jax.numpy as jnp
from jax.experimental import pallas as pl
from jax.experimental.pallas import tpu as pltpu

NEG_SLOPE = 0.01   # nn.LeakyReLU default
BN_EPS = 1e-5      # nn.BatchNorm default eps
TILE_M = 256       # rows per grid step (keeps VMEM use batch-independent; ok for v7x)


# ----------------------------------------------------------------------------
# The single fused Pallas kernel
# ----------------------------------------------------------------------------
def _fused_matmul_kernel(*refs, has_res, has_g):
    """o = leaky_slope((a @ b) * scale + shift [+ r]) [@ g]   (slope per column)."""
    a_ref, b_ref, s_ref, t_ref, sl_ref = refs[:5]
    idx = 5
    r_ref = refs[idx] if has_res else None
    idx += int(has_res)
    g_ref = refs[idx] if has_g else None
    o_ref = refs[-1]

    acc = jnp.dot(a_ref[...], b_ref[...], preferred_element_type=jnp.float32)
    y = acc * s_ref[...] + t_ref[...]
    if has_res:
        y = y + r_ref[...]
    # per-column negative slope: 0.01 -> LeakyReLU, 1.0 -> identity
    y = jnp.where(y >= 0.0, y, sl_ref[...] * y)
    if has_g:
        # fused grouped 1x1 conv (block-diagonal matmul), f32 x f32
        y = jnp.dot(y, g_ref[...], preferred_element_type=jnp.float32)
    o_ref[...] = y


# ----------------------------------------------------------------------------
# Wrapper: M-tiled, software-pipelined pallas_call
# ----------------------------------------------------------------------------
def _round_up(x, m):
    return ((x + m - 1) // m) * m


def fused_matmul(a, pk, n_out, residual=None, gmat=None, tile_m=TILE_M):
    """act((a @ pk.b) * pk.s + pk.t [+ residual]) [@ gmat], sliced to (M, n_out)."""
    M, K = a.shape
    Kp, Np = pk["b"].shape
    if M > tile_m:
        tm, Mp = tile_m, _round_up(M, tile_m)
    else:
        Mp = _round_up(M, 8)
        tm = Mp

    a_p = jnp.pad(a.astype(jnp.bfloat16), ((0, Mp - M), (0, Kp - K)))

    has_res = residual is not None
    has_g = gmat is not None

    args = [a_p, pk["b"], pk["s"], pk["t"], pk["sl"]]
    in_specs = [
        pl.BlockSpec((tm, Kp), lambda i: (i, 0)),
        pl.BlockSpec((Kp, Np), lambda i: (0, 0)),
        pl.BlockSpec((1, Np), lambda i: (0, 0)),
        pl.BlockSpec((1, Np), lambda i: (0, 0)),
        pl.BlockSpec((1, Np), lambda i: (0, 0)),
    ]
    if has_res:
        r_p = jnp.pad(residual.astype(jnp.float32),
                      ((0, Mp - M), (0, Np - residual.shape[1])))
        args.append(r_p)
        in_specs.append(pl.BlockSpec((tm, Np), lambda i: (i, 0)))
    if has_g:
        Gp = gmat.shape[1]
        args.append(gmat)
        in_specs.append(pl.BlockSpec((Np, Gp), lambda i: (0, 0)))
        n_out_p = Gp
    else:
        n_out_p = Np

    out = pl.pallas_call(
        functools.partial(_fused_matmul_kernel, has_res=has_res, has_g=has_g),
        out_shape=jax.ShapeDtypeStruct((Mp, n_out_p), jnp.float32),
        grid=(Mp // tm,),
        in_specs=in_specs,
        out_specs=pl.BlockSpec((tm, n_out_p), lambda i: (i, 0)),
        compiler_params=pltpu.CompilerParams(
            dimension_semantics=("parallel",)),
    )(*args)
    return out[:M, :n_out]


# ----------------------------------------------------------------------------
# One-time weight packing (pad to (8,128), cast to bf16, fold BN, polyphase ConvT)
# ----------------------------------------------------------------------------
def _pack_weight(bmat, scale, shift, slope):
    K, N = bmat.shape
    Kp, Np = _round_up(K, 128), _round_up(N, 128)
    if jnp.ndim(slope) == 0:
        slope = jnp.full((N,), slope, jnp.float32)
    pad_row = lambda v: jnp.pad(v.astype(jnp.float32).reshape(1, N),
                                ((0, 0), (0, Np - N)))
    return dict(
        b=jnp.pad(bmat.astype(jnp.bfloat16), ((0, Kp - K), (0, Np - N))),
        s=pad_row(scale), t=pad_row(shift), sl=pad_row(slope))


# Polyphase taps for ConvT 5x5, stride 2, padding 2, output_padding 1:
#   out[2q]   = x[q-1]*w[4] + x[q]*w[2] + x[q+1]*w[0]      (even phase)
#   out[2q+1] =               x[q]*w[3] + x[q+1]*w[1]      (odd phase)
# patch tap m in {0,1,2} covers input index q-1+m (3x3 im2col, pad 1, stride 1).
_TAPS = ((4, 2, 0), (None, 3, 1))   # [phase][tap m] -> ConvT kernel index (None = 0)


def _polyphase_weight(w_iohw):
    """ConvT weight (ci, co, 5, 5) -> polyphase tensor (3, 3, ci, 2, 2, co)."""
    ci, co = w_iohw.shape[0], w_iohw.shape[1]
    wp = jnp.zeros((3, 3, ci, 2, 2, co), jnp.float32)
    for py in range(2):
        for my in range(3):
            ky = _TAPS[py][my]
            if ky is None:
                continue
            for px in range(2):
                for mx in range(3):
                    kx = _TAPS[px][mx]
                    if kx is None:
                        continue
                    wp = wp.at[my, mx, :, py, px, :].set(w_iohw[:, :, ky, kx])
    return wp


def _pack_upsample(blk):
    """Pack one UpsampleBlock: fused (conv1a||conv2a) polyphase matmul + conv1b."""
    w1a, w2a = blk["conv1a_w"], blk["conv2a_w"]            # (ci, co, 5, 5)
    ci, co = w1a.shape[0], w1a.shape[1]
    wp = jnp.concatenate([_polyphase_weight(w1a), _polyphase_weight(w2a)], axis=-1)
    bmat = wp.reshape(9 * ci, 4 * 2 * co)                  # cols: (phase, [b1|b2], co)
    s1a, t1a = blk["bn1a"]
    s2a, t2a = blk["bn2a"]
    scale = jnp.tile(jnp.concatenate([s1a, s2a]), 4)
    shift = jnp.tile(jnp.concatenate([t1a, t2a]), 4)
    slope = jnp.tile(jnp.concatenate([jnp.full((co,), NEG_SLOPE, jnp.float32),
                                      jnp.ones((co,), jnp.float32)]), 4)
    branches = _pack_weight(bmat, scale, shift, slope)

    w1b = blk["conv1b_w"]                                  # (co, co, 3, 3)
    b1b = jnp.transpose(w1b, (2, 3, 1, 0)).reshape(9 * co, co)
    s1b, t1b = blk["bn1b"]
    conv1b = _pack_weight(b1b, s1b, t1b, NEG_SLOPE)        # leaky applied post-residual
    return dict(branches=branches, conv1b=conv1b)


def _pack_gmat(gw, ci, n_rows):
    """Grouped 1x1 conv (group, ci//group, 1, 1) -> padded block-diag (n_rows, 128+)."""
    group, cpg = gw.shape[0], gw.shape[1]
    g = jnp.zeros((ci, group), jnp.float32)
    for i in range(group):
        g = g.at[i * cpg:(i + 1) * cpg, i].set(gw[i, :, 0, 0])
    Gp = _round_up(group, 128)
    return jnp.pad(g, ((0, n_rows - ci), (0, Gp - group)))


def pack_decoder_params(p):
    s1, t1 = p["fc_bn1"]
    s2, t2 = p["fc_bn2"]
    packed = dict(
        fc1=_pack_weight(p["fc1_w"].T, s1, p["fc1_b"] * s1 + t1, NEG_SLOPE),
        fc2=_pack_weight(p["fc2_w"].T, s2, p["fc2_b"] * s2 + t2, NEG_SLOPE),
        us1=_pack_upsample(p["us1"]),
        us2=_pack_upsample(p["us2"]),
    )
    n_rows = packed["us2"]["conv1b"]["b"].shape[1]          # padded conv1b output width
    packed["gmat"] = _pack_gmat(p["gconv_w"], p["us2"]["conv1b_w"].shape[0], n_rows)
    return packed


# ----------------------------------------------------------------------------
# Forward pass (XLA glue = im2col patch extraction + reshapes/transposes only)
# ----------------------------------------------------------------------------
def _im2col(x, kh, kw, stride, padding):
    """x: (N, H, W, C) -> (N*oh*ow, kh*kw*C) with (kh, kw, C) patch ordering."""
    if padding:
        x = jnp.pad(x, ((0, 0), (padding, padding), (padding, padding), (0, 0)))
    n, h, w, c = x.shape
    oh = (h - kh) // stride + 1
    ow = (w - kw) // stride + 1
    cols = []
    for i in range(kh):
        for j in range(kw):
            cols.append(x[:, i:i + stride * oh:stride, j:j + stride * ow:stride, :])
    p = jnp.stack(cols, axis=3)                     # (N, oh, ow, kh*kw, C)
    return p.reshape(n * oh * ow, kh * kw * c), (n, oh, ow)


def upsample_block_fwd(x, blk, *, co, tile_m, gmat=None, g_out=None):
    """UpsampleBlock (+ optionally the trailing grouped 1x1 conv fused in)."""
    n, h, w, ci = x.shape
    # --- both ConvT 5x5 s2 branches in ONE polyphase matmul (BN + act fused) ---
    cols, _ = _im2col(x, 3, 3, 1, 1)                              # (n*h*w, 9*ci)
    y = fused_matmul(cols, blk["branches"], n_out=8 * co, tile_m=tile_m)
    y = y.reshape(n, h, w, 2, 2, 2 * co)                          # (.., py, px, [b1|b2]*co)
    y = jnp.transpose(y, (0, 1, 3, 2, 4, 5)).reshape(n, 2 * h, 2 * w, 2 * co)
    h1, h2 = y[..., :co], y[..., co:]                             # main / residual branch
    # --- conv1b 3x3 + BN + residual-add + LeakyReLU (+ grouped 1x1) fused -------
    cols1, _ = _im2col(h1, 3, 3, 1, 1)                            # (n*4hw, 9*co)
    res = h2.reshape(n * 4 * h * w, co)
    out_c = g_out if gmat is not None else co
    out = fused_matmul(cols1, blk["conv1b"], n_out=out_c,
                       residual=res, gmat=gmat, tile_m=tile_m)
    return out.reshape(n, 2 * h, 2 * w, out_c)


def decoder_group_forward(x, packed, *, conv_feature_shape, group, tile_m=TILE_M):
    """DecoderGroup.forward: x (N, code_length) -> (N, group, 4*fh, 4*fw)."""
    c, fh, fw = conv_feature_shape
    n = x.shape[0]
    feat = c * fh * fw
    # fc: Linear -> BN1d -> LeakyReLU (x2), each fused in one kernel
    h = fused_matmul(x, packed["fc1"], n_out=64, tile_m=tile_m)
    h = fused_matmul(h, packed["fc2"], n_out=feat, tile_m=tile_m)
    # PyTorch .view(len(x), *conv_feature_shape) is NCHW ordering
    t = jnp.transpose(h.reshape(n, c, fh, fw), (0, 2, 3, 1))      # -> NHWC
    t = upsample_block_fwd(t, packed["us1"], co=32, tile_m=tile_m)
    t = upsample_block_fwd(t, packed["us2"], co=16, tile_m=tile_m,
                           gmat=packed["gmat"], g_out=group)
    return jnp.transpose(t, (0, 3, 1, 2))                         # -> NCHW (N, group, H, W)


# ----------------------------------------------------------------------------
# Deterministic synthetic parameters (matching DecoderGroup's layer shapes)
# ----------------------------------------------------------------------------
def init_decoder_params(key, code_length, conv_feature_shape, group):
    c, fh, fw = conv_feature_shape            # module fixes c = 64
    feat = c * fh * fw
    keys = iter(jax.random.split(key, 64))

    def wnorm(shape, scale=0.1):
        return scale * jax.random.normal(next(keys), shape, jnp.float32)

    def bn(nf):
        gamma = 1.0 + 0.1 * jax.random.normal(next(keys), (nf,), jnp.float32)
        beta = 0.1 * jax.random.normal(next(keys), (nf,), jnp.float32)
        mean = 0.1 * jax.random.normal(next(keys), (nf,), jnp.float32)
        var = 1.0 + 0.1 * jax.random.uniform(next(keys), (nf,), jnp.float32)
        s = gamma / jnp.sqrt(var + BN_EPS)
        return s, beta - mean * s             # folded (scale, shift)

    def us(ci, co):
        return dict(conv1a_w=wnorm((ci, co, 5, 5)), bn1a=bn(co),   # ConvT: (in,out,kh,kw)
                    conv1b_w=wnorm((co, co, 3, 3)), bn1b=bn(co),
                    conv2a_w=wnorm((ci, co, 5, 5)), bn2a=bn(co))

    return dict(
        fc1_w=wnorm((64, code_length)), fc1_b=wnorm((64,)), fc_bn1=bn(64),
        fc2_w=wnorm((feat, 64)), fc2_b=wnorm((feat,)), fc_bn2=bn(feat),
        us1=us(64, 32), us2=us(32, 16),
        gconv_w=wnorm((group, 16 // group, 1, 1)),
    )


# ----------------------------------------------------------------------------
if __name__ == "__main__":
    code_length = 32
    conv_feature_shape = (64, 4, 4)          # (C, fh, fw); output is (4*fh, 4*fw)
    group = 2
    batch = 2

    key = jax.random.PRNGKey(0)
    kp, kx = jax.random.split(key)
    raw_params = init_decoder_params(kp, code_length, conv_feature_shape, group)
    packed = pack_decoder_params(raw_params)          # one-time packing (not per forward)
    x = jax.random.normal(kx, (batch, code_length), jnp.float32)

    fwd = jax.jit(functools.partial(decoder_group_forward,
                                    conv_feature_shape=conv_feature_shape,
                                    group=group))
    out = fwd(x, packed)
    jax.block_until_ready(out)

    H, W = 4 * conv_feature_shape[1], 4 * conv_feature_shape[2]
    assert out.shape == (batch, group, H, W)
    assert bool(jnp.all(jnp.isfinite(out)))
    print("KERNEL_OK")
</pallas_src>

<mosaic_0001>
module attributes {stable_mosaic.version = 11 : i64} {
  func.func @_fused_matmul_kernel(%arg0: i32, %arg1: memref<8x128xbf16, #tpu.memory_space<vmem>>, %arg2: memref<128x128xbf16, #tpu.memory_space<vmem>>, %arg3: memref<1x128xf32, #tpu.memory_space<vmem>>, %arg4: memref<1x128xf32, #tpu.memory_space<vmem>>, %arg5: memref<1x128xf32, #tpu.memory_space<vmem>>, %arg6: memref<8x128xf32, #tpu.memory_space<vmem>>) attributes {dimension_semantics = [#tpu.dimension_semantics<parallel>], iteration_bounds = array<i64: 1>, scalar_prefetch = 0 : i64, scratch_operands = 0 : i64, tpu.core_type = #tpu.core_type<tc>, window_params = [{transform_indices = @transform_0, window_bounds = array<i64: 8, 128>}, {pipeline_mode = #tpu.pipeline_mode<synchronous>, transform_indices = @transform_1, window_bounds = array<i64: 128, 128>}, {pipeline_mode = #tpu.pipeline_mode<synchronous>, transform_indices = @transform_2, window_bounds = array<i64: 1, 128>}, {pipeline_mode = #tpu.pipeline_mode<synchronous>, transform_indices = @transform_3, window_bounds = array<i64: 1, 128>}, {pipeline_mode = #tpu.pipeline_mode<synchronous>, transform_indices = @transform_4, window_bounds = array<i64: 1, 128>}, {transform_indices = @transform_5, window_bounds = array<i64: 8, 128>}]} {
    %c0 = arith.constant 0 : index
    %c0_0 = arith.constant 0 : index
    %0 = vector.load %arg1[%c0, %c0_0] : memref<8x128xbf16, #tpu.memory_space<vmem>>, vector<8x128xbf16>
    %c0_1 = arith.constant 0 : index
    %c0_2 = arith.constant 0 : index
    %1 = vector.load %arg2[%c0_1, %c0_2] : memref<128x128xbf16, #tpu.memory_space<vmem>>, vector<128x128xbf16>
    %cst = arith.constant dense<0.000000e+00> : vector<8x128xf32>
    %2 = tpu.matmul %0, %1, %cst {dimension_numbers = #tpu.dot_dimension_numbers<[1], [0], [0], [1], [0, 0, 1, 1], [], []>} : vector<8x128xbf16>, vector<128x128xbf16>, vector<8x128xf32> -> vector<8x128xf32>
    %c0_3 = arith.constant 0 : index
    %c0_4 = arith.constant 0 : index
    %3 = vector.load %arg3[%c0_3, %c0_4] : memref<1x128xf32, #tpu.memory_space<vmem>>, vector<1x128xf32>
    %4 = vector.broadcast %3 : vector<1x128xf32> to vector<8x128xf32>
    %5 = arith.mulf %2, %4 : vector<8x128xf32>
    %c0_5 = arith.constant 0 : index
    %c0_6 = arith.constant 0 : index
    %6 = vector.load %arg4[%c0_5, %c0_6] : memref<1x128xf32, #tpu.memory_space<vmem>>, vector<1x128xf32>
    %7 = vector.broadcast %6 : vector<1x128xf32> to vector<8x128xf32>
    %8 = arith.addf %5, %7 : vector<8x128xf32>
    %cst_7 = arith.constant 0.000000e+00 : f32
    %9 = vector.broadcast %cst_7 : f32 to vector<8x128xf32>
    %10 = arith.cmpf oge, %8, %9 : vector<8x128xf32>
    %c0_8 = arith.constant 0 : index
    %c0_9 = arith.constant 0 : index
    %11 = vector.load %arg5[%c0_8, %c0_9] : memref<1x128xf32, #tpu.memory_space<vmem>>, vector<1x128xf32>
    %12 = vector.broadcast %11 : vector<1x128xf32> to vector<8x128xf32>
    %13 = arith.mulf %12, %8 : vector<8x128xf32>
    %14 = arith.select %10, %8, %13 : vector<8x128xi1>, vector<8x128xf32>
    %c0_10 = arith.constant 0 : index
    %c0_11 = arith.constant 0 : index
    %15 = vector.load %arg6[%c0_10, %c0_11] : memref<8x128xf32, #tpu.memory_space<vmem>>, vector<8x128xf32>
    tpu.vector_store %arg6[%c0_10, %c0_11], %14 {strides = array<i32>} : memref<8x128xf32, #tpu.memory_space<vmem>>, vector<8x128xf32>,
    return
  }
  func.func @transform_0(%arg0: i32) -> (i32, i32) {
    %c0_i32 = arith.constant 0 : i32
    %c0_i32_0 = arith.constant 0 : i32
    return %arg0, %c0_i32 : i32, i32
  }
  func.func @transform_1(%arg0: i32) -> (i32, i32) {
    %c0_i32 = arith.constant 0 : i32
    %c0_i32_0 = arith.constant 0 : i32
    %c0_i32_1 = arith.constant 0 : i32
    return %c0_i32, %c0_i32_0 : i32, i32
  }
  func.func @transform_2(%arg0: i32) -> (i32, i32) {
    %c0_i32 = arith.constant 0 : i32
    %c0_i32_0 = arith.constant 0 : i32
    %c0_i32_1 = arith.constant 0 : i32
    return %c0_i32, %c0_i32_0 : i32, i32
  }
  func.func @transform_3(%arg0: i32) -> (i32, i32) {
    %c0_i32 = arith.constant 0 : i32
    %c0_i32_0 = arith.constant 0 : i32
    %c0_i32_1 = arith.constant 0 : i32
    return %c0_i32, %c0_i32_0 : i32, i32
  }
  func.func @transform_4(%arg0: i32) -> (i32, i32) {
    %c0_i32 = arith.constant 0 : i32
    %c0_i32_0 = arith.constant 0 : i32
    %c0_i32_1 = arith.constant 0 : i32
    return %c0_i32, %c0_i32_0 : i32, i32
  }
  func.func @transform_5(%arg0: i32) -> (i32, i32) {
    %c0_i32 = arith.constant 0 : i32
    %c0_i32_0 = arith.constant 0 : i32
    return %arg0, %c0_i32 : i32, i32
  }
}

module attributes {stable_mosaic.version = 11 : i64} {
  func.func @_fused_matmul_kernel(%arg0: i32, %arg1: memref<8x128xbf16, #tpu.memory_space<vmem>>, %arg2: memref<128x1024xbf16, #tpu.memory_space<vmem>>, %arg3: memref<1x1024xf32, #tpu.memory_space<vmem>>, %arg4: memref<1x1024xf32, #tpu.memory_space<vmem>>, %arg5: memref<1x1024xf32, #tpu.memory_space<vmem>>, %arg6: memref<8x1024xf32, #tpu.memory_space<vmem>>) attributes {dimension_semantics = [#tpu.dimension_semantics<parallel>], iteration_bounds = array<i64: 1>, scalar_prefetch = 0 : i64, scratch_operands = 0 : i64, tpu.core_type = #tpu.core_type<tc>, window_params = [{transform_indices = @transform_0, window_bounds = array<i64: 8, 128>}, {pipeline_mode = #tpu.pipeline_mode<synchronous>, transform_indices = @transform_1, window_bounds = array<i64: 128, 1024>}, {pipeline_mode = #tpu.pipeline_mode<synchronous>, transform_indices = @transform_2, window_bounds = array<i64: 1, 1024>}, {pipeline_mode = #tpu.pipeline_mode<synchronous>, transform_indices = @transform_3, window_bounds = array<i64: 1, 1024>}, {pipeline_mode = #tpu.pipeline_mode<synchronous>, transform_indices = @transform_4, window_bounds = array<i64: 1, 1024>}, {transform_indices = @transform_5, window_bounds = array<i64: 8, 1024>}]} {
    %c0 = arith.constant 0 : index
    %c0_0 = arith.constant 0 : index
    %0 = vector.load %arg1[%c0, %c0_0] : memref<8x128xbf16, #tpu.memory_space<vmem>>, vector<8x128xbf16>
    %c0_1 = arith.constant 0 : index
    %c0_2 = arith.constant 0 : index
    %1 = vector.load %arg2[%c0_1, %c0_2] : memref<128x1024xbf16, #tpu.memory_space<vmem>>, vector<128x1024xbf16>
    %cst = arith.constant dense<0.000000e+00> : vector<8x1024xf32>
    %2 = tpu.matmul %0, %1, %cst {dimension_numbers = #tpu.dot_dimension_numbers<[1], [0], [0], [1], [0, 0, 1, 1], [], []>} : vector<8x128xbf16>, vector<128x1024xbf16>, vector<8x1024xf32> -> vector<8x1024xf32>
    %c0_3 = arith.constant 0 : index
    %c0_4 = arith.constant 0 : index
    %3 = vector.load %arg3[%c0_3, %c0_4] : memref<1x1024xf32, #tpu.memory_space<vmem>>, vector<1x1024xf32>
    %4 = vector.broadcast %3 : vector<1x1024xf32> to vector<8x1024xf32>
    %5 = arith.mulf %2, %4 : vector<8x1024xf32>
    %c0_5 = arith.constant 0 : index
    %c0_6 = arith.constant 0 : index
    %6 = vector.load %arg4[%c0_5, %c0_6] : memref<1x1024xf32, #tpu.memory_space<vmem>>, vector<1x1024xf32>
    %7 = vector.broadcast %6 : vector<1x1024xf32> to vector<8x1024xf32>
    %8 = arith.addf %5, %7 : vector<8x1024xf32>
    %cst_7 = arith.constant 0.000000e+00 : f32
    %9 = vector.broadcast %cst_7 : f32 to vector<8x1024xf32>
    %10 = arith.cmpf oge, %8, %9 : vector<8x1024xf32>
    %c0_8 = arith.constant 0 : index
    %c0_9 = arith.constant 0 : index
    %11 = vector.load %arg5[%c0_8, %c0_9] : memref<1x1024xf32, #tpu.memory_space<vmem>>, vector<1x1024xf32>
    %12 = vector.broadcast %11 : vector<1x1024xf32> to vector<8x1024xf32>
    %13 = arith.mulf %12, %8 : vector<8x1024xf32>
    %14 = arith.select %10, %8, %13 : vector<8x1024xi1>, vector<8x1024xf32>
    %c0_10 = arith.constant 0 : index
    %c0_11 = arith.constant 0 : index
    %15 = vector.load %arg6[%c0_10, %c0_11] : memref<8x1024xf32, #tpu.memory_space<vmem>>, vector<8x1024xf32>
    tpu.vector_store %arg6[%c0_10, %c0_11], %14 {strides = array<i32>} : memref<8x1024xf32, #tpu.memory_space<vmem>>, vector<8x1024xf32>,
    return
  }
  func.func @transform_0(%arg0: i32) -> (i32, i32) {
    %c0_i32 = arith.constant 0 : i32
    %c0_i32_0 = arith.constant 0 : i32
    return %arg0, %c0_i32 : i32, i32
  }
  func.func @transform_1(%arg0: i32) -> (i32, i32) {
    %c0_i32 = arith.constant 0 : i32
    %c0_i32_0 = arith.constant 0 : i32
    %c0_i32_1 = arith.constant 0 : i32
    return %c0_i32, %c0_i32_0 : i32, i32
  }
  func.func @transform_2(%arg0: i32) -> (i32, i32) {
    %c0_i32 = arith.constant 0 : i32
    %c0_i32_0 = arith.constant 0 : i32
    %c0_i32_1 = arith.constant 0 : i32
    return %c0_i32, %c0_i32_0 : i32, i32
  }
  func.func @transform_3(%arg0: i32) -> (i32, i32) {
    %c0_i32 = arith.constant 0 : i32
    %c0_i32_0 = arith.constant 0 : i32
    %c0_i32_1 = arith.constant 0 : i32
    return %c0_i32, %c0_i32_0 : i32, i32
  }
  func.func @transform_4(%arg0: i32) -> (i32, i32) {
    %c0_i32 = arith.constant 0 : i32
    %c0_i32_0 = arith.constant 0 : i32
    %c0_i32_1 = arith.constant 0 : i32
    return %c0_i32, %c0_i32_0 : i32, i32
  }
  func.func @transform_5(%arg0: i32) -> (i32, i32) {
    %c0_i32 = arith.constant 0 : i32
    %c0_i32_0 = arith.constant 0 : i32
    return %arg0, %c0_i32 : i32, i32
  }
}

module attributes {stable_mosaic.version = 11 : i64} {
  func.func @_fused_matmul_kernel(%arg0: i32, %arg1: memref<32x640xbf16, #tpu.memory_space<vmem>>, %arg2: memref<640x256xbf16, #tpu.memory_space<vmem>>, %arg3: memref<1x256xf32, #tpu.memory_space<vmem>>, %arg4: memref<1x256xf32, #tpu.memory_space<vmem>>, %arg5: memref<1x256xf32, #tpu.memory_space<vmem>>, %arg6: memref<32x256xf32, #tpu.memory_space<vmem>>) attributes {dimension_semantics = [#tpu.dimension_semantics<parallel>], iteration_bounds = array<i64: 1>, scalar_prefetch = 0 : i64, scratch_operands = 0 : i64, tpu.core_type = #tpu.core_type<tc>, window_params = [{transform_indices = @transform_0, window_bounds = array<i64: 32, 640>}, {pipeline_mode = #tpu.pipeline_mode<synchronous>, transform_indices = @transform_1, window_bounds = array<i64: 640, 256>}, {pipeline_mode = #tpu.pipeline_mode<synchronous>, transform_indices = @transform_2, window_bounds = array<i64: 1, 256>}, {pipeline_mode = #tpu.pipeline_mode<synchronous>, transform_indices = @transform_3, window_bounds = array<i64: 1, 256>}, {pipeline_mode = #tpu.pipeline_mode<synchronous>, transform_indices = @transform_4, window_bounds = array<i64: 1, 256>}, {transform_indices = @transform_5, window_bounds = array<i64: 32, 256>}]} {
    %c0 = arith.constant 0 : index
    %c0_0 = arith.constant 0 : index
    %0 = vector.load %arg1[%c0, %c0_0] : memref<32x640xbf16, #tpu.memory_space<vmem>>, vector<32x640xbf16>
    %c0_1 = arith.constant 0 : index
    %c0_2 = arith.constant 0 : index
    %1 = vector.load %arg2[%c0_1, %c0_2] : memref<640x256xbf16, #tpu.memory_space<vmem>>, vector<640x256xbf16>
    %cst = arith.constant dense<0.000000e+00> : vector<32x256xf32>
    %2 = tpu.matmul %0, %1, %cst {dimension_numbers = #tpu.dot_dimension_numbers<[1], [0], [0], [1], [0, 0, 1, 1], [], []>} : vector<32x640xbf16>, vector<640x256xbf16>, vector<32x256xf32> -> vector<32x256xf32>
    %c0_3 = arith.constant 0 : index
    %c0_4 = arith.constant 0 : index
    %3 = vector.load %arg3[%c0_3, %c0_4] : memref<1x256xf32, #tpu.memory_space<vmem>>, vector<1x256xf32>
    %4 = vector.broadcast %3 : vector<1x256xf32> to vector<32x256xf32>
    %5 = arith.mulf %2, %4 : vector<32x256xf32>
    %c0_5 = arith.constant 0 : index
    %c0_6 = arith.constant 0 : index
    %6 = vector.load %arg4[%c0_5, %c0_6] : memref<1x256xf32, #tpu.memory_space<vmem>>, vector<1x256xf32>
    %7 = vector.broadcast %6 : vector<1x256xf32> to vector<32x256xf32>
    %8 = arith.addf %5, %7 : vector<32x256xf32>
    %cst_7 = arith.constant 0.000000e+00 : f32
    %9 = vector.broadcast %cst_7 : f32 to vector<32x256xf32>
    %10 = arith.cmpf oge, %8, %9 : vector<32x256xf32>
    %c0_8 = arith.constant 0 : index
    %c0_9 = arith.constant 0 : index
    %11 = vector.load %arg5[%c0_8, %c0_9] : memref<1x256xf32, #tpu.memory_space<vmem>>, vector<1x256xf32>
    %12 = vector.broadcast %11 : vector<1x256xf32> to vector<32x256xf32>
    %13 = arith.mulf %12, %8 : vector<32x256xf32>
    %14 = arith.select %10, %8, %13 : vector<32x256xi1>, vector<32x256xf32>
    %c0_10 = arith.constant 0 : index
    %c0_11 = arith.constant 0 : index
    %15 = vector.load %arg6[%c0_10, %c0_11] : memref<32x256xf32, #tpu.memory_space<vmem>>, vector<32x256xf32>
    tpu.vector_store %arg6[%c0_10, %c0_11], %14 {strides = array<i32>} : memref<32x256xf32, #tpu.memory_space<vmem>>, vector<32x256xf32>,
    return
  }
  func.func @transform_0(%arg0: i32) -> (i32, i32) {
    %c0_i32 = arith.constant 0 : i32
    %c0_i32_0 = arith.constant 0 : i32
    return %arg0, %c0_i32 : i32, i32
  }
  func.func @transform_1(%arg0: i32) -> (i32, i32) {
    %c0_i32 = arith.constant 0 : i32
    %c0_i32_0 = arith.constant 0 : i32
    %c0_i32_1 = arith.constant 0 : i32
    return %c0_i32, %c0_i32_0 : i32, i32
  }
  func.func @transform_2(%arg0: i32) -> (i32, i32) {
    %c0_i32 = arith.constant 0 : i32
    %c0_i32_0 = arith.constant 0 : i32
    %c0_i32_1 = arith.constant 0 : i32
    return %c0_i32, %c0_i32_0 : i32, i32
  }
  func.func @transform_3(%arg0: i32) -> (i32, i32) {
    %c0_i32 = arith.constant 0 : i32
    %c0_i32_0 = arith.constant 0 : i32
    %c0_i32_1 = arith.constant 0 : i32
    return %c0_i32, %c0_i32_0 : i32, i32
  }
  func.func @transform_4(%arg0: i32) -> (i32, i32) {
    %c0_i32 = arith.constant 0 : i32
    %c0_i32_0 = arith.constant 0 : i32
    %c0_i32_1 = arith.constant 0 : i32
    return %c0_i32, %c0_i32_0 : i32, i32
  }
  func.func @transform_5(%arg0: i32) -> (i32, i32) {
    %c0_i32 = arith.constant 0 : i32
    %c0_i32_0 = arith.constant 0 : i32
    return %arg0, %c0_i32 : i32, i32
  }
}

module attributes {stable_mosaic.version = 11 : i64} {
  func.func @_fused_matmul_kernel(%arg0: i32, %arg1: memref<128x384xbf16, #tpu.memory_space<vmem>>, %arg2: memref<384x128xbf16, #tpu.memory_space<vmem>>, %arg3: memref<1x128xf32, #tpu.memory_space<vmem>>, %arg4: memref<1x128xf32, #tpu.memory_space<vmem>>, %arg5: memref<1x128xf32, #tpu.memory_space<vmem>>, %arg6: memref<128x128xf32, #tpu.memory_space<vmem>>, %arg7: memref<128x128xf32, #tpu.memory_space<vmem>>) attributes {dimension_semantics = [#tpu.dimension_semantics<parallel>], iteration_bounds = array<i64: 1>, scalar_prefetch = 0 : i64, scratch_operands = 0 : i64, tpu.core_type = #tpu.core_type<tc>, window_params = [{transform_indices = @transform_0, window_bounds = array<i64: 128, 384>}, {pipeline_mode = #tpu.pipeline_mode<synchronous>, transform_indices = @transform_1, window_bounds = array<i64: 384, 128>}, {pipeline_mode = #tpu.pipeline_mode<synchronous>, transform_indices = @transform_2, window_bounds = array<i64: 1, 128>}, {pipeline_mode = #tpu.pipeline_mode<synchronous>, transform_indices = @transform_3, window_bounds = array<i64: 1, 128>}, {pipeline_mode = #tpu.pipeline_mode<synchronous>, transform_indices = @transform_4, window_bounds = array<i64: 1, 128>}, {transform_indices = @transform_5, window_bounds = array<i64: 128, 128>}, {transform_indices = @transform_6, window_bounds = array<i64: 128, 128>}]} {
    %c0 = arith.constant 0 : index
    %c0_0 = arith.constant 0 : index
    %0 = vector.load %arg1[%c0, %c0_0] : memref<128x384xbf16, #tpu.memory_space<vmem>>, vector<128x384xbf16>
    %c0_1 = arith.constant 0 : index
    %c0_2 = arith.constant 0 : index
    %1 = vector.load %arg2[%c0_1, %c0_2] : memref<384x128xbf16, #tpu.memory_space<vmem>>, vector<384x128xbf16>
    %cst = arith.constant dense<0.000000e+00> : vector<128x128xf32>
    %2 = tpu.matmul %0, %1, %cst {dimension_numbers = #tpu.dot_dimension_numbers<[1], [0], [0], [1], [0, 0, 1, 1], [], []>} : vector<128x384xbf16>, vector<384x128xbf16>, vector<128x128xf32> -> vector<128x128xf32>
    %c0_3 = arith.constant 0 : index
    %c0_4 = arith.constant 0 : index
    %3 = vector.load %arg3[%c0_3, %c0_4] : memref<1x128xf32, #tpu.memory_space<vmem>>, vector<1x128xf32>
    %4 = vector.broadcast %3 : vector<1x128xf32> to vector<128x128xf32>
    %5 = arith.mulf %2, %4 : vector<128x128xf32>
    %c0_5 = arith.constant 0 : index
    %c0_6 = arith.constant 0 : index
    %6 = vector.load %arg4[%c0_5, %c0_6] : memref<1x128xf32, #tpu.memory_space<vmem>>, vector<1x128xf32>
    %7 = vector.broadcast %6 : vector<1x128xf32> to vector<128x128xf32>
    %8 = arith.addf %5, %7 : vector<128x128xf32>
    %c0_7 = arith.constant 0 : index
    %c0_8 = arith.constant 0 : index
    %9 = vector.load %arg6[%c0_7, %c0_8] : memref<128x128xf32, #tpu.memory_space<vmem>>, vector<128x128xf32>
    %10 = arith.addf %8, %9 : vector<128x128xf32>
    %cst_9 = arith.constant 0.000000e+00 : f32
    %11 = vector.broadcast %cst_9 : f32 to vector<128x128xf32>
    %12 = arith.cmpf oge, %10, %11 : vector<128x128xf32>
    %c0_10 = arith.constant 0 : index
    %c0_11 = arith.constant 0 : index
    %13 = vector.load %arg5[%c0_10, %c0_11] : memref<1x128xf32, #tpu.memory_space<vmem>>, vector<1x128xf32>
    %14 = vector.broadcast %13 : vector<1x128xf32> to vector<128x128xf32>
    %15 = arith.mulf %14, %10 : vector<128x128xf32>
    %16 = arith.select %12, %10, %15 : vector<128x128xi1>, vector<128x128xf32>
    %c0_12 = arith.constant 0 : index
    %c0_13 = arith.constant 0 : index
    %17 = vector.load %arg7[%c0_12, %c0_13] : memref<128x128xf32, #tpu.memory_space<vmem>>, vector<128x128xf32>
    tpu.vector_store %arg7[%c0_12, %c0_13], %16 {strides = array<i32>} : memref<128x128xf32, #tpu.memory_space<vmem>>, vector<128x128xf32>,
    return
  }
  func.func @transform_0(%arg0: i32) -> (i32, i32) {
    %c0_i32 = arith.constant 0 : i32
    %c0_i32_0 = arith.constant 0 : i32
    return %arg0, %c0_i32 : i32, i32
  }
  func.func @transform_1(%arg0: i32) -> (i32, i32) {
    %c0_i32 = arith.constant 0 : i32
    %c0_i32_0 = arith.constant 0 : i32
    %c0_i32_1 = arith.constant 0 : i32
    return %c0_i32, %c0_i32_0 : i32, i32
  }
  func.func @transform_2(%arg0: i32) -> (i32, i32) {
    %c0_i32 = arith.constant 0 : i32
    %c0_i32_0 = arith.constant 0 : i32
    %c0_i32_1 = arith.constant 0 : i32
    return %c0_i32, %c0_i32_0 : i32, i32
  }
  func.func @transform_3(%arg0: i32) -> (i32, i32) {
    %c0_i32 = arith.constant 0 : i32
    %c0_i32_0 = arith.constant 0 : i32
    %c0_i32_1 = arith.constant 0 : i32
    return %c0_i32, %c0_i32_0 : i32, i32
  }
  func.func @transform_4(%arg0: i32) -> (i32, i32) {
    %c0_i32 = arith.constant 0 : i32
    %c0_i32_0 = arith.constant 0 : i32
    %c0_i32_1 = arith.constant 0 : i32
    return %c0_i32, %c0_i32_0 : i32, i32
  }
  func.func @transform_5(%arg0: i32) -> (i32, i32) {
    %c0_i32 = arith.constant 0 : i32
    %c0_i32_0 = arith.constant 0 : i32
    return %arg0, %c0_i32 : i32, i32
  }
  func.func @transform_6(%arg0: i32) -> (i32, i32) {
    %c0_i32 = arith.constant 0 : i32
    %c0_i32_0 = arith.constant 0 : i32
    return %arg0, %c0_i32 : i32, i32
  }
}

module attributes {stable_mosaic.version = 11 : i64} {
  func.func @_fused_matmul_kernel(%arg0: i32, %arg1: memref<128x384xbf16, #tpu.memory_space<vmem>>, %arg2: memref<384x128xbf16, #tpu.memory_space<vmem>>, %arg3: memref<1x128xf32, #tpu.memory_space<vmem>>, %arg4: memref<1x128xf32, #tpu.memory_space<vmem>>, %arg5: memref<1x128xf32, #tpu.memory_space<vmem>>, %arg6: memref<128x128xf32, #tpu.memory_space<vmem>>) attributes {dimension_semantics = [#tpu.dimension_semantics<parallel>], iteration_bounds = array<i64: 1>, scalar_prefetch = 0 : i64, scratch_operands = 0 : i64, tpu.core_type = #tpu.core_type<tc>, window_params = [{transform_indices = @transform_0, window_bounds = array<i64: 128, 384>}, {pipeline_mode = #tpu.pipeline_mode<synchronous>, transform_indices = @transform_1, window_bounds = array<i64: 384, 128>}, {pipeline_mode = #tpu.pipeline_mode<synchronous>, transform_indices = @transform_2, window_bounds = array<i64: 1, 128>}, {pipeline_mode = #tpu.pipeline_mode<synchronous>, transform_indices = @transform_3, window_bounds = array<i64: 1, 128>}, {pipeline_mode = #tpu.pipeline_mode<synchronous>, transform_indices = @transform_4, window_bounds = array<i64: 1, 128>}, {transform_indices = @transform_5, window_bounds = array<i64: 128, 128>}]} {
    %c0 = arith.constant 0 : index
    %c0_0 = arith.constant 0 : index
    %0 = vector.load %arg1[%c0, %c0_0] : memref<128x384xbf16, #tpu.memory_space<vmem>>, vector<128x384xbf16>
    %c0_1 = arith.constant 0 : index
    %c0_2 = arith.constant 0 : index
    %1 = vector.load %arg2[%c0_1, %c0_2] : memref<384x128xbf16, #tpu.memory_space<vmem>>, vector<384x128xbf16>
    %cst = arith.constant dense<0.000000e+00> : vector<128x128xf32>
    %2 = tpu.matmul %0, %1, %cst {dimension_numbers = #tpu.dot_dimension_numbers<[1], [0], [0], [1], [0, 0, 1, 1], [], []>} : vector<128x384xbf16>, vector<384x128xbf16>, vector<128x128xf32> -> vector<128x128xf32>
    %c0_3 = arith.constant 0 : index
    %c0_4 = arith.constant 0 : index
    %3 = vector.load %arg3[%c0_3, %c0_4] : memref<1x128xf32, #tpu.memory_space<vmem>>, vector<1x128xf32>
    %4 = vector.broadcast %3 : vector<1x128xf32> to vector<128x128xf32>
    %5 = arith.mulf %2, %4 : vector<128x128xf32>
    %c0_5 = arith.constant 0 : index
    %c0_6 = arith.constant 0 : index
    %6 = vector.load %arg4[%c0_5, %c0_6] : memref<1x128xf32, #tpu.memory_space<vmem>>, vector<1x128xf32>
    %7 = vector.broadcast %6 : vector<1x128xf32> to vector<128x128xf32>
    %8 = arith.addf %5, %7 : vector<128x128xf32>
    %cst_7 = arith.constant 0.000000e+00 : f32
    %9 = vector.broadcast %cst_7 : f32 to vector<128x128xf32>
    %10 = arith.cmpf oge, %8, %9 : vector<128x128xf32>
    %c0_8 = arith.constant 0 : index
    %c0_9 = arith.constant 0 : index
    %11 = vector.load %arg5[%c0_8, %c0_9] : memref<1x128xf32, #tpu.memory_space<vmem>>, vector<1x128xf32>
    %12 = vector.broadcast %11 : vector<1x128xf32> to vector<128x128xf32>
    %13 = arith.mulf %12, %8 : vector<128x128xf32>
    %14 = arith.select %10, %8, %13 : vector<128x128xi1>, vector<128x128xf32>
    %c0_10 = arith.constant 0 : index
    %c0_11 = arith.constant 0 : index
    %15 = vector.load %arg6[%c0_10, %c0_11] : memref<128x128xf32, #tpu.memory_space<vmem>>, vector<128x128xf32>
    tpu.vector_store %arg6[%c0_10, %c0_11], %14 {strides = array<i32>} : memref<128x128xf32, #tpu.memory_space<vmem>>, vector<128x128xf32>,
    return
  }
  func.func @transform_0(%arg0: i32) -> (i32, i32) {
    %c0_i32 = arith.constant 0 : i32
    %c0_i32_0 = arith.constant 0 : i32
    return %arg0, %c0_i32 : i32, i32
  }
  func.func @transform_1(%arg0: i32) -> (i32, i32) {
    %c0_i32 = arith.constant 0 : i32
    %c0_i32_0 = arith.constant 0 : i32
    %c0_i32_1 = arith.constant 0 : i32
    return %c0_i32, %c0_i32_0 : i32, i32
  }
  func.func @transform_2(%arg0: i32) -> (i32, i32) {
    %c0_i32 = arith.constant 0 : i32
    %c0_i32_0 = arith.constant 0 : i32
    %c0_i32_1 = arith.constant 0 : i32
    return %c0_i32, %c0_i32_0 : i32, i32
  }
  func.func @transform_3(%arg0: i32) -> (i32, i32) {
    %c0_i32 = arith.constant 0 : i32
    %c0_i32_0 = arith.constant 0 : i32
    %c0_i32_1 = arith.constant 0 : i32
    return %c0_i32, %c0_i32_0 : i32, i32
  }
  func.func @transform_4(%arg0: i32) -> (i32, i32) {
    %c0_i32 = arith.constant 0 : i32
    %c0_i32_0 = arith.constant 0 : i32
    %c0_i32_1 = arith.constant 0 : i32
    return %c0_i32, %c0_i32_0 : i32, i32
  }
  func.func @transform_5(%arg0: i32) -> (i32, i32) {
    %c0_i32 = arith.constant 0 : i32
    %c0_i32_0 = arith.constant 0 : i32
    return %arg0, %c0_i32 : i32, i32
  }
}

module attributes {stable_mosaic.version = 11 : i64} {
  func.func @_fused_matmul_kernel(%arg0: i32, %arg1: memref<256x256xbf16, #tpu.memory_space<vmem>>, %arg2: memref<256x128xbf16, #tpu.memory_space<vmem>>, %arg3: memref<1x128xf32, #tpu.memory_space<vmem>>, %arg4: memref<1x128xf32, #tpu.memory_space<vmem>>, %arg5: memref<1x128xf32, #tpu.memory_space<vmem>>, %arg6: memref<256x128xf32, #tpu.memory_space<vmem>>, %arg7: memref<128x128xf32, #tpu.memory_space<vmem>>, %arg8: memref<256x128xf32, #tpu.memory_space<vmem>>) attributes {dimension_semantics = [#tpu.dimension_semantics<parallel>], iteration_bounds = array<i64: 2>, scalar_prefetch = 0 : i64, scratch_operands = 0 : i64, tpu.core_type = #tpu.core_type<tc>, window_params = [{transform_indices = @transform_0, window_bounds = array<i64: 256, 256>}, {pipeline_mode = #tpu.pipeline_mode<synchronous>, transform_indices = @transform_1, window_bounds = array<i64: 256, 128>}, {pipeline_mode = #tpu.pipeline_mode<synchronous>, transform_indices = @transform_2, window_bounds = array<i64: 1, 128>}, {pipeline_mode = #tpu.pipeline_mode<synchronous>, transform_indices = @transform_3, window_bounds = array<i64: 1, 128>}, {pipeline_mode = #tpu.pipeline_mode<synchronous>, transform_indices = @transform_4, window_bounds = array<i64: 1, 128>}, {transform_indices = @transform_5, window_bounds = array<i64: 256, 128>}, {pipeline_mode = #tpu.pipeline_mode<synchronous>, transform_indices = @transform_6, window_bounds = array<i64: 128, 128>}, {transform_indices = @transform_7, window_bounds = array<i64: 256, 128>}]} {
    %c0 = arith.constant 0 : index
    %c0_0 = arith.constant 0 : index
    %0 = vector.load %arg1[%c0, %c0_0] : memref<256x256xbf16, #tpu.memory_space<vmem>>, vector<256x256xbf16>
    %c0_1 = arith.constant 0 : index
    %c0_2 = arith.constant 0 : index
    %1 = vector.load %arg2[%c0_1, %c0_2] : memref<256x128xbf16, #tpu.memory_space<vmem>>, vector<256x128xbf16>
    %cst = arith.constant dense<0.000000e+00> : vector<256x128xf32>
    %2 = tpu.matmul %0, %1, %cst {dimension_numbers = #tpu.dot_dimension_numbers<[1], [0], [0], [1], [0, 0, 1, 1], [], []>} : vector<256x256xbf16>, vector<256x128xbf16>, vector<256x128xf32> -> vector<256x128xf32>
    %c0_3 = arith.constant 0 : index
    %c0_4 = arith.constant 0 : index
    %3 = vector.load %arg3[%c0_3, %c0_4] : memref<1x128xf32, #tpu.memory_space<vmem>>, vector<1x128xf32>
    %4 = vector.broadcast %3 : vector<1x128xf32> to vector<256x128xf32>
    %5 = arith.mulf %2, %4 : vector<256x128xf32>
    %c0_5 = arith.constant 0 : index
    %c0_6 = arith.constant 0 : index
    %6 = vector.load %arg4[%c0_5, %c0_6] : memref<1x128xf32, #tpu.memory_space<vmem>>, vector<1x128xf32>
    %7 = vector.broadcast %6 : vector<1x128xf32> to vector<256x128xf32>
    %8 = arith.addf %5, %7 : vector<256x128xf32>
    %c0_7 = arith.constant 0 : index
    %c0_8 = arith.constant 0 : index
    %9 = vector.load %arg6[%c0_7, %c0_8] : memref<256x128xf32, #tpu.memory_space<vmem>>, vector<256x128xf32>
    %10 = arith.addf %8, %9 : vector<256x128xf32>
    %cst_9 = arith.constant 0.000000e+00 : f32
    %11 = vector.broadcast %cst_9 : f32 to vector<256x128xf32>
    %12 = arith.cmpf oge, %10, %11 : vector<256x128xf32>
    %c0_10 = arith.constant 0 : index
    %c0_11 = arith.constant 0 : index
    %13 = vector.load %arg5[%c0_10, %c0_11] : memref<1x128xf32, #tpu.memory_space<vmem>>, vector<1x128xf32>
    %14 = vector.broadcast %13 : vector<1x128xf32> to vector<256x128xf32>
    %15 = arith.mulf %14, %10 : vector<256x128xf32>
    %16 = arith.select %12, %10, %15 : vector<256x128xi1>, vector<256x128xf32>
    %c0_12 = arith.constant 0 : index
    %c0_13 = arith.constant 0 : index
    %17 = vector.load %arg7[%c0_12, %c0_13] : memref<128x128xf32, #tpu.memory_space<vmem>>, vector<128x128xf32>
    %cst_14 = arith.constant dense<0.000000e+00> : vector<256x128xf32>
    %18 = tpu.matmul %16, %17, %cst_14 {dimension_numbers = #tpu.dot_dimension_numbers<[1], [0], [0], [1], [0, 0, 1, 1], [], []>} : vector<256x128xf32>, vector<128x128xf32>, vector<256x128xf32> -> vector<256x128xf32>
    %c0_15 = arith.constant 0 : index
    %c0_16 = arith.constant 0 : index
    %19 = vector.load %arg8[%c0_15, %c0_16] : memref<256x128xf32, #tpu.memory_space<vmem>>, vector<256x128xf32>
    tpu.vector_store %arg8[%c0_15, %c0_16], %18 {strides = array<i32>} : memref<256x128xf32, #tpu.memory_space<vmem>>, vector<256x128xf32>,
    return
  }
  func.func @transform_0(%arg0: i32) -> (i32, i32) {
    %c0_i32 = arith.constant 0 : i32
    %c0_i32_0 = arith.constant 0 : i32
    return %arg0, %c0_i32 : i32, i32
  }
  func.func @transform_1(%arg0: i32) -> (i32, i32) {
    %c0_i32 = arith.constant 0 : i32
    %c0_i32_0 = arith.constant 0 : i32
    %c0_i32_1 = arith.constant 0 : i32
    return %c0_i32, %c0_i32_0 : i32, i32
  }
  func.func @transform_2(%arg0: i32) -> (i32, i32) {
    %c0_i32 = arith.constant 0 : i32
    %c0_i32_0 = arith.constant 0 : i32
    %c0_i32_1 = arith.constant 0 : i32
    return %c0_i32, %c0_i32_0 : i32, i32
  }
  func.func @transform_3(%arg0: i32) -> (i32, i32) {
    %c0_i32 = arith.constant 0 : i32
    %c0_i32_0 = arith.constant 0 : i32
    %c0_i32_1 = arith.constant 0 : i32
    return %c0_i32, %c0_i32_0 : i32, i32
  }
  func.func @transform_4(%arg0: i32) -> (i32, i32) {
    %c0_i32 = arith.constant 0 : i32
    %c0_i32_0 = arith.constant 0 : i32
    %c0_i32_1 = arith.constant 0 : i32
    return %c0_i32, %c0_i32_0 : i32, i32
  }
  func.func @transform_5(%arg0: i32) -> (i32, i32) {
    %c0_i32 = arith.constant 0 : i32
    %c0_i32_0 = arith.constant 0 : i32
    return %arg0, %c0_i32 : i32, i32
  }
  func.func @transform_6(%arg0: i32) -> (i32, i32) {
    %c0_i32 = arith.constant 0 : i32
    %c0_i32_0 = arith.constant 0 : i32
    %c0_i32_1 = arith.constant 0 : i32
    return %c0_i32, %c0_i32_0 : i32, i32
  }
  func.func @transform_7(%arg0: i32) -> (i32, i32) {
    %c0_i32 = arith.constant 0 : i32
    %c0_i32_0 = arith.constant 0 : i32
    return %arg0, %c0_i32 : i32, i32
  }
}

</mosaic_0001>

<llo_original>
// kernel: decoder_group_forward.6
$region0: #{decoder_group_forward.6}
  #allocation0 [shape = 'u32[]', space=smem, size = 0x4, offset = 0x4, fixed_abs, tag = 'smem constant byte address 0x4 - core index']
  #allocation1 [shape = 'u32[144,128]{1,0:T(1,128)}', space=vmem, size = 0x12000, scoped, tag = 'internal scratch']
  %s0 = inlined_call_operand.vmem [shape: bf16[8,128], index: 0, kind: input, shape index: {}]
  %s1 = inlined_call_operand.hbm [shape: bf16[128,128], index: 1, kind: input, shape index: {}]
  %s2 = inlined_call_operand.hbm [shape: f32[1,128], index: 2, kind: input, shape index: {}]
  %s3 = inlined_call_operand.hbm [shape: f32[1,128], index: 3, kind: input, shape index: {}]
  %s4 = inlined_call_operand.hbm [shape: f32[1,128], index: 4, kind: input, shape index: {}]
  %s5 = inlined_call_operand.vmem [shape: f32[8,128], index: 5, kind: output, shape index: {}]
  %s6 = sld [smem:[#allocation0]]
  $region46: #{decoder_group_forward.6} parent=0
    _
  %s8 = ssub.s32 1, %s6
  %s9 = scalar_select 0, %s8, %s6
  $region1: #{decoder_group_forward.6} parent=0
    #allocation2 [shape = 'u8[32768]{0}', space=vmem, size = 0x8000, scoped, tag = 'input window, operand 1, single buffered']
    #allocation3 [shape = 's32[1]{0}', space=sflag, size = 0x4, scoped, tag = 'scoped memory for decoder_group_forward.6']
    #allocation4 [shape = 'u8[512]{0}', space=vmem, size = 0x400, scoped, tag = 'input window, operand 2, single buffered']
    #allocation5 [shape = 's32[1]{0}', space=sflag, size = 0x4, scoped, tag = 'scoped memory for decoder_group_forward.6']
    #allocation6 [shape = 'u8[512]{0}', space=vmem, size = 0x400, scoped, tag = 'input window, operand 3, single buffered']
    #allocation7 [shape = 'u8[512]{0}', space=vmem, size = 0x400, scoped, tag = 'input window, operand 4, single buffered']
    #allocation8 [shape = 's32[1]{0}', space=sflag, size = 0x4, scoped, tag = 'scoped memory for decoder_group_forward.6']
    %10 = vsyncpa [#allocation3], 0
    %11 = vsyncpa [#allocation5], 0
    %12 = vsyncpa [#allocation8], 0
    // Predicated region
    $region2: #{decoder_group_forward.6} parent=1 // pred_check
      _
    $region3: #{decoder_group_forward.6} parent=1 // pred_check_branch
      %14 = sbr.rel (0) target = $region5
    $region4: #{decoder_group_forward.6} parent=1 // pred_region
      _
    $region5: #{decoder_group_forward.6} parent=1 // pred_fallthru
      _
    // Predicated region
    $region6: #{decoder_group_forward.6} parent=1 // pred_check
      _
    $region7: #{decoder_group_forward.6} parent=1 // pred_check_branch
      %16 = sbr.rel (0) target = $region9
    $region8: #{decoder_group_forward.6} parent=1 // pred_region
      %s18 = ssub.s32 1024, 1024
      %19 = vsyncadd [#allocation3], %s18
      %s20 = sshll.u32 [#allocation2], 4
      %s21 = int_to_ptr.vmem [resolvable:$true] %s20
      %26 = dma.hbm_to_vmem [thread:$0]  %s1, 1024, %s21, [#allocation3], 64, 64, 4
    $region9: #{decoder_group_forward.6} parent=1 // pred_fallthru
      _
    // Predicated region
    $region10: #{decoder_group_forward.6} parent=1 // pred_check
      _
    $region11: #{decoder_group_forward.6} parent=1 // pred_check_branch
      %28 = sbr.rel (0) target = $region13
    $region12: #{decoder_group_forward.6} parent=1 // pred_region
      %s30 = ssub.s32 16, 16
      %31 = vsyncadd [#allocation5], %s30
      %s33 = sshll.u32 [#allocation4], 4
      %s34 = int_to_ptr.vmem [resolvable:$true] %s33
      %36 = dma.hbm_to_vmem [thread:$0]  %s2, 16, %s34, [#allocation5]
    $region13: #{decoder_group_forward.6} parent=1 // pred_fallthru
      _
    // Predicated region
    $region14: #{decoder_group_forward.6} parent=1 // pred_check
      _
    $region15: #{decoder_group_forward.6} parent=1 // pred_check_branch
      %38 = sbr.rel (0) target = $region17
    $region16: #{decoder_group_forward.6} parent=1 // pred_region
      %s40 = ssub.s32 16, 16
      %41 = vsyncadd [#allocation5], %s40
      %s43 = sshll.u32 [#allocation6], 4
      %s44 = int_to_ptr.vmem [resolvable:$true] %s43
      %46 = dma.hbm_to_vmem [thread:$0]  %s3, 16, %s44, [#allocation5]
    $region17: #{decoder_group_forward.6} parent=1 // pred_fallthru
      _
    // Predicated region
    $region18: #{decoder_group_forward.6} parent=1 // pred_check
      _
    $region19: #{decoder_group_forward.6} parent=1 // pred_check_branch
      %48 = sbr.rel (0) target = $region21
    $region20: #{decoder_group_forward.6} parent=1 // pred_region
      %s50 = ssub.s32 16, 16
      %51 = vsyncadd [#allocation8], %s50
      %s53 = sshll.u32 [#allocation7], 4
      %s54 = int_to_ptr.vmem [resolvable:$true] %s53
      %56 = dma.hbm_to_vmem [thread:$0]  %s4, 16, %s54, [#allocation8]
    $region21: #{decoder_group_forward.6} parent=1 // pred_fallthru
      _
    // Predicated region
    $region22: #{decoder_group_forward.6} parent=1 // pred_check
      _
    $region23: #{decoder_group_forward.6} parent=1 // pred_check_branch
      %58 = sbr.rel (0) target = $region25
    $region24: #{decoder_group_forward.6} parent=1 // pred_region
      %59 = dma.done [#allocation3], 1024
    $region25: #{decoder_group_forward.6} parent=1 // pred_fallthru
      _
    // Predicated region
    $region26: #{decoder_group_forward.6} parent=1 // pred_check
      _
    $region27: #{decoder_group_forward.6} parent=1 // pred_check_branch
      %61 = sbr.rel (0) target = $region29
    $region28: #{decoder_group_forward.6} parent=1 // pred_region
      %62 = dma.done [#allocation5], 16
    $region29: #{decoder_group_forward.6} parent=1 // pred_fallthru
      _
    // Predicated region
    $region30: #{decoder_group_forward.6} parent=1 // pred_check
      _
    $region31: #{decoder_group_forward.6} parent=1 // pred_check_branch
      %64 = sbr.rel (0) target = $region33
    $region32: #{decoder_group_forward.6} parent=1 // pred_region
      %65 = dma.done [#allocation5], 16
    $region33: #{decoder_group_forward.6} parent=1 // pred_fallthru
      _
    // Predicated region
    $region34: #{decoder_group_forward.6} parent=1 // pred_check
      _
    $region35: #{decoder_group_forward.6} parent=1 // pred_check_branch
      %67 = sbr.rel (0) target = $region37
    $region36: #{decoder_group_forward.6} parent=1 // pred_region
      %68 = dma.done [#allocation8], 16
    $region37: #{decoder_group_forward.6} parent=1 // pred_fallthru
      _
    %v70 = vld [vmem:[%s0] sm:$0xf]
    %v71 = vld [vmem:[#allocation2] sm:$0xf]
    %v72 = vld [vmem:[#allocation2 + $0x4] sm:$0xf]
    %v73 = vld [vmem:[#allocation2 + $0x8] sm:$0xf]
    %v74 = vld [vmem:[#allocation2 + $0xc] sm:$0xf]
    %v75 = vld [vmem:[#allocation2 + $0x10] sm:$0xf]
    %v76 = vld [vmem:[#allocation2 + $0x14] sm:$0xf]
    %v77 = vld [vmem:[#allocation2 + $0x18] sm:$0xf]
    %v78 = vld [vmem:[#allocation2 + $0x1c] sm:$0xf]
    %v79 = vld [vmem:[#allocation2 + $0x20] sm:$0xf]
    %v80 = vld [vmem:[#allocation2 + $0x24] sm:$0xf]
    %v81 = vld [vmem:[#allocation2 + $0x28] sm:$0xf]
    %v82 = vld [vmem:[#allocation2 + $0x2c] sm:$0xf]
    %v83 = vld [vmem:[#allocation2 + $0x30] sm:$0xf]
    %v84 = vld [vmem:[#allocation2 + $0x34] sm:$0xf]
    %v85 = vld [vmem:[#allocation2 + $0x38] sm:$0xf]
    %v86 = vld [vmem:[#allocation2 + $0x3c] sm:$0xf]
    %v103 = vunpack.c.l.b16 %v71
    %v104 = vunpack.c.l.b16 %v72
    %v105 = vunpack.c.l.b16 %v73
    %v106 = vunpack.c.l.b16 %v74
    %v107 = vunpack.c.l.b16 %v75
    %v108 = vunpack.c.l.b16 %v76
    %v109 = vunpack.c.l.b16 %v77
    %v110 = vunpack.c.l.b16 %v78
    %v111 = vunpack.c.l.b16 %v79
    %v112 = vunpack.c.l.b16 %v80
    %v113 = vunpack.c.l.b16 %v81
    %v114 = vunpack.c.l.b16 %v82
    %v115 = vunpack.c.l.b16 %v83
    %v116 = vunpack.c.l.b16 %v84
    %v117 = vunpack.c.l.b16 %v85
    %v118 = vunpack.c.l.b16 %v86
    %v119 = vpack.c.b16 %v104, %v103
    %v120 = vpack.c.b16 %v106, %v105
    %v121 = vpack.c.b16 %v108, %v107
    %v122 = vpack.c.b16 %v110, %v109
    %v123 = vpack.c.b16 %v112, %v111
    %v124 = vpack.c.b16 %v114, %v113
    %v125 = vpack.c.b16 %v116, %v115
    %v126 = vpack.c.b16 %v118, %v117
    %135 = vmatprep.subr.bf16.mxu0 0
    %136 = vmatpush1.bf16.msra.mxu0 %v119
    %137 = vmatprep.subr.bf16.mxu0 0
    %138 = vmatpush1.bf16.msra.mxu0 %v120
    %139 = vmatprep.subr.bf16.mxu0 0
    %140 = vmatpush1.bf16.msra.mxu0 %v121
    %141 = vmatprep.subr.bf16.mxu0 0
    %142 = vmatpush1.bf16.msra.mxu0 %v122
    %143 = vmatprep.subr.bf16.mxu0 0
    %144 = vmatpush1.bf16.msra.mxu0 %v123
    %145 = vmatprep.subr.bf16.mxu0 0
    %146 = vmatpush1.bf16.msra.mxu0 %v124
    %147 = vmatprep.subr.bf16.mxu0 0
    %148 = vmatpush1.bf16.msra.mxu0 %v125
    %149 = vmatprep.subr.bf16.mxu0 0
    %150 = vmatpush1.bf16.msra.mxu0 %v126
    %151 = vmatprep.subr.bf16.mxu0 0
    %152 = vmatpush1.bf16.msra.mxu0 0
    %153 = vmatprep.subr.bf16.mxu0 0
    %154 = vmatpush1.bf16.msra.mxu0 0
    %155 = vmatprep.subr.bf16.mxu0 0
    %156 = vmatpush1.bf16.msra.mxu0 0
    %157 = vmatprep.subr.bf16.mxu0 0
    %158 = vmatpush1.bf16.msra.mxu0 0
    %159 = vmatprep.subr.bf16.mxu0 0
    %160 = vmatpush1.bf16.msra.mxu0 0
    %161 = vmatprep.subr.bf16.mxu0 0
    %162 = vmatpush1.bf16.msra.mxu0 0
    %163 = vmatprep.subr.bf16.mxu0 0
    %164 = vmatpush1.bf16.msra.mxu0 0
    %165 = vmatprep.subr.bf16.mxu0 0
    %166 = vmatpush1.bf16.msra.mxu0 0
    %167 = vmatprep.mubr.bf16.mxu0 0
    %168 = vmatmul.mubr.bf16.gmra.mrb[0].mxu0 %v70
    %v169 = vpop.f32.mrb[0].mxu0
    %v170 = vadd.f32 0.0, %v169
    %v171 = vpop.f32.mrb[0].mxu0
    %v172 = vpop.f32.mrb[0].mxu0
    %v173 = vpop.f32.mrb[0].mxu0
    %174 = vdwg.mxu0
    %v175 = vld [vmem:[#allocation4] sm:$0x1]
    %v177 = vlaneseq
    %v178 = vshrl.u32 %v177, 7
    %v179 = vsub.s32 0, %v178
    %v180 = vrot.slane %v175, %v179
    %v182 = vmul.f32 %v170, %v180
    %v183 = vld [vmem:[#allocation6] sm:$0x1]
    %v185 = vlaneseq
    %v186 = vshrl.u32 %v185, 7
    %v187 = vsub.s32 0, %v186
    %v188 = vrot.slane %v183, %v187
    %v190 = vadd.f32 %v182, %v188
    %vm191 = vcmp.ge.f32.partialorder %v190, 0.0
    %v192 = vld [vmem:[#allocation7] sm:$0x1]
    %v194 = vlaneseq
    %v195 = vshrl.u32 %v194, 7
    %v196 = vsub.s32 0, %v195
    %v197 = vrot.slane %v192, %v196
    %v199 = vmul.f32 %v197, %v190
    %v200 = vsel %vm191, %v190, %v199
    %201 = vst [vmem:[%s5] sm:$0xff] %v200
    // Predicated region
    $region38: #{decoder_group_forward.6} parent=1 // pred_check
      _
    $region39: #{decoder_group_forward.6} parent=1 // pred_check_branch
      %203 = sbr.rel (0) target = $region41
    $region40: #{decoder_group_forward.6} parent=1 // pred_region
      _
    $region41: #{decoder_group_forward.6} parent=1 // pred_fallthru
      _
    // Predicated region
    $region42: #{decoder_group_forward.6} parent=1 // pred_check
      _
    $region43: #{decoder_group_forward.6} parent=1 // pred_check_branch
      %205 = sbr.rel (0) target = $region45
    $region44: #{decoder_group_forward.6} parent=1 // pred_region
      _
    $region45: #{decoder_group_forward.6} parent=1 // pred_fallthru
      _
    %206 = vsyncpa [#allocation3], 1
    %207 = vsyncpa [#allocation5], 1
    %208 = vsyncpa [#allocation8], 1

// kernel: decoder_group_forward.7
$region0: #{decoder_group_forward.7}
  #allocation0 [shape = 'u32[]', space=smem, size = 0x4, offset = 0x4, fixed_abs, tag = 'smem constant byte address 0x4 - core index']
  #allocation1 [shape = 'u32[144,128]{1,0:T(1,128)}', space=vmem, size = 0x12000, scoped, tag = 'internal scratch']
  %s0 = inlined_call_operand.vmem [shape: bf16[8,128], index: 0, kind: input, shape index: {}]
  %s1 = inlined_call_operand.hbm [shape: bf16[128,1024], index: 1, kind: input, shape index: {}]
  %s2 = inlined_call_operand.hbm [shape: f32[1,1024], index: 2, kind: input, shape index: {}]
  %s3 = inlined_call_operand.hbm [shape: f32[1,1024], index: 3, kind: input, shape index: {}]
  %s4 = inlined_call_operand.hbm [shape: f32[1,1024], index: 4, kind: input, shape index: {}]
  %s5 = inlined_call_operand.vmem [shape: f32[8,1024], index: 5, kind: output, shape index: {}]
  %s6 = sld [smem:[#allocation0]]
  $region46: #{decoder_group_forward.7} parent=0
    _
  %s8 = ssub.s32 1, %s6
  %s9 = scalar_select 0, %s8, %s6
  $region1: #{decoder_group_forward.7} parent=0
    #allocation2 [shape = 'u8[262144]{0}', space=vmem, size = 0x40000, scoped, tag = 'input window, operand 1, single buffered']
    #allocation3 [shape = 's32[1]{0}', space=sflag, size = 0x4, scoped, tag = 'scoped memory for decoder_group_forward.7']
    #allocation4 [shape = 'u8[4096]{0}', space=vmem, size = 0x1000, scoped, tag = 'input window, operand 2, single buffered']
    #allocation5 [shape = 's32[1]{0}', space=sflag, size = 0x4, scoped, tag = 'scoped memory for decoder_group_forward.7']
    #allocation6 [shape = 'u8[4096]{0}', space=vmem, size = 0x1000, scoped, tag = 'input window, operand 3, single buffered']
    #allocation7 [shape = 'u8[4096]{0}', space=vmem, size = 0x1000, scoped, tag = 'input window, operand 4, single buffered']
    #allocation8 [shape = 's32[1]{0}', space=sflag, size = 0x4, scoped, tag = 'scoped memory for decoder_group_forward.7']
    %10 = vsyncpa [#allocation3], 0
    %11 = vsyncpa [#allocation5], 0
    %12 = vsyncpa [#allocation8], 0
    // Predicated region
    $region2: #{decoder_group_forward.7} parent=1 // pred_check
      _
    $region3: #{decoder_group_forward.7} parent=1 // pred_check_branch
      %14 = sbr.rel (0) target = $region5
    $region4: #{decoder_group_forward.7} parent=1 // pred_region
      _
    $region5: #{decoder_group_forward.7} parent=1 // pred_fallthru
      _
    // Predicated region
    $region6: #{decoder_group_forward.7} parent=1 // pred_check
      _
    $region7: #{decoder_group_forward.7} parent=1 // pred_check_branch
      %16 = sbr.rel (0) target = $region9
    $region8: #{decoder_group_forward.7} parent=1 // pred_region
      %s18 = ssub.s32 8192, 8192
      %19 = vsyncadd [#allocation3], %s18
      %s20 = sshll.u32 [#allocation2], 4
      %s21 = int_to_ptr.vmem [resolvable:$true] %s20
      %26 = dma.hbm_to_vmem [thread:$0]  %s1, 8192, %s21, [#allocation3], 512, 512, 32
    $region9: #{decoder_group_forward.7} parent=1 // pred_fallthru
      _
    // Predicated region
    $region10: #{decoder_group_forward.7} parent=1 // pred_check
      _
    $region11: #{decoder_group_forward.7} parent=1 // pred_check_branch
      %28 = sbr.rel (0) target = $region13
    $region12: #{decoder_group_forward.7} parent=1 // pred_region
      %s30 = ssub.s32 128, 128
      %31 = vsyncadd [#allocation5], %s30
      %s33 = sshll.u32 [#allocation4], 4
      %s34 = int_to_ptr.vmem [resolvable:$true] %s33
      %36 = dma.hbm_to_vmem [thread:$0]  %s2, 128, %s34, [#allocation5]
    $region13: #{decoder_group_forward.7} parent=1 // pred_fallthru
      _
    // Predicated region
    $region14: #{decoder_group_forward.7} parent=1 // pred_check
      _
    $region15: #{decoder_group_forward.7} parent=1 // pred_check_branch
      %38 = sbr.rel (0) target = $region17
    $region16: #{decoder_group_forward.7} parent=1 // pred_region
      %s40 = ssub.s32 128, 128
      %41 = vsyncadd [#allocation5], %s40
      %s43 = sshll.u32 [#allocation6], 4
      %s44 = int_to_ptr.vmem [resolvable:$true] %s43
      %46 = dma.hbm_to_vmem [thread:$0]  %s3, 128, %s44, [#allocation5]
    $region17: #{decoder_group_forward.7} parent=1 // pred_fallthru
      _
    // Predicated region
    $region18: #{decoder_group_forward.7} parent=1 // pred_check
      _
    $region19: #{decoder_group_forward.7} parent=1 // pred_check_branch
      %48 = sbr.rel (0) target = $region21
    $region20: #{decoder_group_forward.7} parent=1 // pred_region
      %s50 = ssub.s32 128, 128
      %51 = vsyncadd [#allocation8], %s50
      %s53 = sshll.u32 [#allocation7], 4
      %s54 = int_to_ptr.vmem [resolvable:$true] %s53
      %56 = dma.hbm_to_vmem [thread:$0]  %s4, 128, %s54, [#allocation8]
    $region21: #{decoder_group_forward.7} parent=1 // pred_fallthru
      _
    // Predicated region
    $region22: #{decoder_group_forward.7} parent=1 // pred_check
      _
    $region23: #{decoder_group_forward.7} parent=1 // pred_check_branch
      %58 = sbr.rel (0) target = $region25
    $region24: #{decoder_group_forward.7} parent=1 // pred_region
      %59 = dma.done [#allocation3], 8192
    $region25: #{decoder_group_forward.7} parent=1 // pred_fallthru
      _
    // Predicated region
    $region26: #{decoder_group_forward.7} parent=1 // pred_check
      _
    $region27: #{decoder_group_forward.7} parent=1 // pred_check_branch
      %61 = sbr.rel (0) target = $region29
    $region28: #{decoder_group_forward.7} parent=1 // pred_region
      %62 = dma.done [#allocation5], 128
    $region29: #{decoder_group_forward.7} parent=1 // pred_fallthru
      _
    // Predicated region
    $region30: #{decoder_group_forward.7} parent=1 // pred_check
      _
    $region31: #{decoder_group_forward.7} parent=1 // pred_check_branch
      %64 = sbr.rel (0) target = $region33
    $region32: #{decoder_group_forward.7} parent=1 // pred_region
      %65 = dma.done [#allocation5], 128
    $region33: #{decoder_group_forward.7} parent=1 // pred_fallthru
      _
    // Predicated region
    $region34: #{decoder_group_forward.7} parent=1 // pred_check
      _
    $region35: #{decoder_group_forward.7} parent=1 // pred_check_branch
      %67 = sbr.rel (0) target = $region37
    $region36: #{decoder_group_forward.7} parent=1 // pred_region
      %68 = dma.done [#allocation8], 128
    $region37: #{decoder_group_forward.7} parent=1 // pred_fallthru
      _
    %v70 = vld [vmem:[%s0] sm:$0xf]
    %v71 = vld [vmem:[#allocation2] sm:$0xff]
    %v72 = vld [vmem:[#allocation2 + $0x8] sm:$0xff]
    %v73 = vld [vmem:[#allocation2 + $0x10] sm:$0xff]
    %v74 = vld [vmem:[#allocation2 + $0x18] sm:$0xff]
    %v75 = vld [vmem:[#allocation2 + $0x20] sm:$0xff]
    %v76 = vld [vmem:[#allocation2 + $0x28] sm:$0xff]
    %v77 = vld [vmem:[#allocation2 + $0x30] sm:$0xff]
    %v78 = vld [vmem:[#allocation2 + $0x38] sm:$0xff]
    %v79 = vld [vmem:[#allocation2 + $0x40] sm:$0xff]
    %v80 = vld [vmem:[#allocation2 + $0x48] sm:$0xff]
    %v81 = vld [vmem:[#allocation2 + $0x50] sm:$0xff]
    %v82 = vld [vmem:[#allocation2 + $0x58] sm:$0xff]
    %v83 = vld [vmem:[#allocation2 + $0x60] sm:$0xff]
    %v84 = vld [vmem:[#allocation2 + $0x68] sm:$0xff]
    %v85 = vld [vmem:[#allocation2 + $0x70] sm:$0xff]
    %v86 = vld [vmem:[#allocation2 + $0x78] sm:$0xff]
    %v87 = vld [vmem:[#allocation2 + $0x80] sm:$0xff]
    %v88 = vld [vmem:[#allocation2 + $0x88] sm:$0xff]
    %v89 = vld [vmem:[#allocation2 + $0x90] sm:$0xff]
    %v90 = vld [vmem:[#allocation2 + $0x98] sm:$0xff]
    %v91 = vld [vmem:[#allocation2 + $0xa0] sm:$0xff]
    %v92 = vld [vmem:[#allocation2 + $0xa8] sm:$0xff]
    %v93 = vld [vmem:[#allocation2 + $0xb0] sm:$0xff]
    %v94 = vld [vmem:[#allocation2 + $0xb8] sm:$0xff]
    %v95 = vld [vmem:[#allocation2 + $0xc0] sm:$0xff]
    %v96 = vld [vmem:[#allocation2 + $0xc8] sm:$0xff]
    %v97 = vld [vmem:[#allocation2 + $0xd0] sm:$0xff]
    %v98 = vld [vmem:[#allocation2 + $0xd8] sm:$0xff]
    %v99 = vld [vmem:[#allocation2 + $0xe0] sm:$0xff]
    %v100 = vld [vmem:[#allocation2 + $0xe8] sm:$0xff]
    %v101 = vld [vmem:[#allocation2 + $0xf0] sm:$0xff]
    %v102 = vld [vmem:[#allocation2 + $0xf8] sm:$0xff]
    %v103 = vld [vmem:[#allocation2 + $0x100] sm:$0xff]
    %v104 = vld [vmem:[#allocation2 + $0x108] sm:$0xff]
    %v105 = vld [vmem:[#allocation2 + $0x110] sm:$0xff]
    %v106 = vld [vmem:[#allocation2 + $0x118] sm:$0xff]
    %v107 = vld [vmem:[#allocation2 + $0x120] sm:$0xff]
    %v108 = vld [vmem:[#allocation2 + $0x128] sm:$0xff]
    %v109 = vld [vmem:[#allocation2 + $0x130] sm:$0xff]
    %v110 = vld [vmem:[#allocation2 + $0x138] sm:$0xff]
    %v111 = vld [vmem:[#allocation2 + $0x140] sm:$0xff]
    %v112 = vld [vmem:[#allocation2 + $0x148] sm:$0xff]
    %v113 = vld [vmem:[#allocation2 + $0x150] sm:$0xff]
    %v114 = vld [vmem:[#allocation2 + $0x158] sm:$0xff]
    %v115 = vld [vmem:[#allocation2 + $0x160] sm:$0xff]
    %v116 = vld [vmem:[#allocation2 + $0x168] sm:$0xff]
    %v117 = vld [vmem:[#allocation2 + $0x170] sm:$0xff]
    %v118 = vld [vmem:[#allocation2 + $0x178] sm:$0xff]
    %v119 = vld [vmem:[#allocation2 + $0x180] sm:$0xff]
    %v120 = vld [vmem:[#allocation2 + $0x188] sm:$0xff]
    %v121 = vld [vmem:[#allocation2 + $0x190] sm:$0xff]
    %v122 = vld [vmem:[#allocation2 + $0x198] sm:$0xff]
    %v123 = vld [vmem:[#allocation2 + $0x1a0] sm:$0xff]
    %v124 = vld [vmem:[#allocation2 + $0x1a8] sm:$0xff]
    %v125 = vld [vmem:[#allocation2 + $0x1b0] sm:$0xff]
    %v126 = vld [vmem:[#allocation2 + $0x1b8] sm:$0xff]
    %v127 = vld [vmem:[#allocation2 + $0x1c0] sm:$0xff]
    %v128 = vld [vmem:[#allocation2 + $0x1c8] sm:$0xff]
    %v129 = vld [vmem:[#allocation2 + $0x1d0] sm:$0xff]
    %v130 = vld [vmem:[#allocation2 + $0x1d8] sm:$0xff]
    %v131 = vld [vmem:[#allocation2 + $0x1e0] sm:$0xff]
    %v132 = vld [vmem:[#allocation2 + $0x1e8] sm:$0xff]
    %v133 = vld [vmem:[#allocation2 + $0x1f0] sm:$0xff]
    %v134 = vld [vmem:[#allocation2 + $0x1f8] sm:$0xff]
    %v199 = vunpack.c.l.b16 %v71
    %v200 = vunpack.c.h.b16 %v71
    %v201 = vunpack.c.l.b16 %v72
    %v202 = vunpack.c.h.b16 %v72
    %v203 = vunpack.c.l.b16 %v73
    %v204 = vunpack.c.h.b16 %v73
    %v205 = vunpack.c.l.b16 %v74
    %v206 = vunpack.c.h.b16 %v74
    %v207 = vunpack.c.l.b16 %v75
    %v208 = vunpack.c.h.b16 %v75
    %v209 = vunpack.c.l.b16 %v76
    %v210 = vunpack.c.h.b16 %v76
    %v211 = vunpack.c.l.b16 %v77
    %v212 = vunpack.c.h.b16 %v77
    %v213 = vunpack.c.l.b16 %v78
    %v214 = vunpack.c.h.b16 %v78
    %v215 = vunpack.c.l.b16 %v79
    %v216 = vunpack.c.h.b16 %v79
    %v217 = vunpack.c.l.b16 %v80
    %v218 = vunpack.c.h.b16 %v80
    %v219 = vunpack.c.l.b16 %v81
    %v220 = vunpack.c.h.b16 %v81
    %v221 = vunpack.c.l.b16 %v82
    %v222 = vunpack.c.h.b16 %v82
    %v223 = vunpack.c.l.b16 %v83
    %v224 = vunpack.c.h.b16 %v83
    %v225 = vunpack.c.l.b16 %v84
    %v226 = vunpack.c.h.b16 %v84
    %v227 = vunpack.c.l.b16 %v85
    %v228 = vunpack.c.h.b16 %v85
    %v229 = vunpack.c.l.b16 %v86
    %v230 = vunpack.c.h.b16 %v86
    %v231 = vunpack.c.l.b16 %v87
    %v232 = vunpack.c.h.b16 %v87
    %v233 = vunpack.c.l.b16 %v88
    %v234 = vunpack.c.h.b16 %v88
    %v235 = vunpack.c.l.b16 %v89
    %v236 = vunpack.c.h.b16 %v89
    %v237 = vunpack.c.l.b16 %v90
    %v238 = vunpack.c.h.b16 %v90
    %v239 = vunpack.c.l.b16 %v91
    %v240 = vunpack.c.h.b16 %v91
    %v241 = vunpack.c.l.b16 %v92
    %v242 = vunpack.c.h.b16 %v92
    %v243 = vunpack.c.l.b16 %v93
    %v244 = vunpack.c.h.b16 %v93
    %v245 = vunpack.c.l.b16 %v94
    %v246 = vunpack.c.h.b16 %v94
    %v247 = vunpack.c.l.b16 %v95
    %v248 = vunpack.c.h.b16 %v95
    %v249 = vunpack.c.l.b16 %v96
    %v250 = vunpack.c.h.b16 %v96
    %v251 = vunpack.c.l.b16 %v97
    %v252 = vunpack.c.h.b16 %v97
    %v253 = vunpack.c.l.b16 %v98
    %v254 = vunpack.c.h.b16 %v98
    %v255 = vunpack.c.l.b16 %v99
    %v256 = vunpack.c.h.b16 %v99
    %v257 = vunpack.c.l.b16 %v100
    %v258 = vunpack.c.h.b16 %v100
    %v259 = vunpack.c.l.b16 %v101
    %v260 = vunpack.c.h.b16 %v101
    %v261 = vunpack.c.l.b16 %v102
    %v262 = vunpack.c.h.b16 %v102
    %v263 = vunpack.c.l.b16 %v103
    %v264 = vunpack.c.h.b16 %v103
    %v265 = vunpack.c.l.b16 %v104
    %v266 = vunpack.c.h.b16 %v104
    %v267 = vunpack.c.l.b16 %v105
    %v268 = vunpack.c.h.b16 %v105
    %v269 = vunpack.c.l.b16 %v106
    %v270 = vunpack.c.h.b16 %v106
    %v271 = vunpack.c.l.b16 %v107
    %v272 = vunpack.c.h.b16 %v107
    %v273 = vunpack.c.l.b16 %v108
    %v274 = vunpack.c.h.b16 %v108
    %v275 = vunpack.c.l.b16 %v109
    %v276 = vunpack.c.h.b16 %v109
    %v277 = vunpack.c.l.b16 %v110
    %v278 = vunpack.c.h.b16 %v110
    %v279 = vunpack.c.l.b16 %v111
    %v280 = vunpack.c.h.b16 %v111
    %v281 = vunpack.c.l.b16 %v112
    %v282 = vunpack.c.h.b16 %v112
    %v283 = vunpack.c.l.b16 %v113
    %v284 = vunpack.c.h.b16 %v113
    %v285 = vunpack.c.l.b16 %v114
    %v286 = vunpack.c.h.b16 %v114
    %v287 = vunpack.c.l.b16 %v115
    %v288 = vunpack.c.h.b16 %v115
    %v289 = vunpack.c.l.b16 %v116
    %v290 = vunpack.c.h.b16 %v116
    %v291 = vunpack.c.l.b16 %v117
    %v292 = vunpack.c.h.b16 %v117
    %v293 = vunpack.c.l.b16 %v118
    %v294 = vunpack.c.h.b16 %v118
    %v295 = vunpack.c.l.b16 %v119
    %v296 = vunpack.c.h.b16 %v119
    %v297 = vunpack.c.l.b16 %v120
    %v298 = vunpack.c.h.b16 %v120
    %v299 = vunpack.c.l.b16 %v121
    %v300 = vunpack.c.h.b16 %v121
    %v301 = vunpack.c.l.b16 %v122
    %v302 = vunpack.c.h.b16 %v122
    %v303 = vunpack.c.l.b16 %v123
    %v304 = vunpack.c.h.b16 %v123
    %v305 = vunpack.c.l.b16 %v124
    %v306 = vunpack.c.h.b16 %v124
    %v307 = vunpack.c.l.b16 %v125
    %v308 = vunpack.c.h.b16 %v125
    %v309 = vunpack.c.l.b16 %v126
    %v310 = vunpack.c.h.b16 %v126
    %v311 = vunpack.c.l.b16 %v127
    %v312 = vunpack.c.h.b16 %v127
    %v313 = vunpack.c.l.b16 %v128
    %v314 = vunpack.c.h.b16 %v128
    %v315 = vunpack.c.l.b16 %v129
    %v316 = vunpack.c.h.b16 %v129
    %v317 = vunpack.c.l.b16 %v130
    %v318 = vunpack.c.h.b16 %v130
    %v319 = vunpack.c.l.b16 %v131
    %v320 = vunpack.c.h.b16 %v131
    %v321 = vunpack.c.l.b16 %v132
    %v322 = vunpack.c.h.b16 %v132
    %v323 = vunpack.c.l.b16 %v133
    %v324 = vunpack.c.h.b16 %v133
    %v325 = vunpack.c.l.b16 %v134
    %v326 = vunpack.c.h.b16 %v134
    %v327 = vpack.c.b16 %v207, %v199
    %v328 = vpack.c.b16 %v208, %v200
    %v329 = vpack.c.b16 %v209, %v201
    %v330 = vpack.c.b16 %v210, %v202
    %v331 = vpack.c.b16 %v211, %v203
    %v332 = vpack.c.b16 %v212, %v204
    %v333 = vpack.c.b16 %v213, %v205
    %v334 = vpack.c.b16 %v214, %v206
    %v335 = vpack.c.b16 %v223, %v215
    %v336 = vpack.c.b16 %v224, %v216
    %v337 = vpack.c.b16 %v225, %v217
    %v338 = vpack.c.b16 %v226, %v218
    %v339 = vpack.c.b16 %v227, %v219
    %v340 = vpack.c.b16 %v228, %v220
    %v341 = vpack.c.b16 %v229, %v221
    %v342 = vpack.c.b16 %v230, %v222
    %v343 = vpack.c.b16 %v239, %v231
    %v344 = vpack.c.b16 %v240, %v232
    %v345 = vpack.c.b16 %v241, %v233
    %v346 = vpack.c.b16 %v242, %v234
    %v347 = vpack.c.b16 %v243, %v235
    %v348 = vpack.c.b16 %v244, %v236
    %v349 = vpack.c.b16 %v245, %v237
    %v350 = vpack.c.b16 %v246, %v238
    %v351 = vpack.c.b16 %v255, %v247
    %v352 = vpack.c.b16 %v256, %v248
    %v353 = vpack.c.b16 %v257, %v249
    %v354 = vpack.c.b16 %v258, %v250
    %v355 = vpack.c.b16 %v259, %v251
    %v356 = vpack.c.b16 %v260, %v252
    %v357 = vpack.c.b16 %v261, %v253
    %v358 = vpack.c.b16 %v262, %v254
    %v359 = vpack.c.b16 %v271, %v263
    %v360 = vpack.c.b16 %v272, %v264
    %v361 = vpack.c.b16 %v273, %v265
    %v362 = vpack.c.b16 %v274, %v266
    %v363 = vpack.c.b16 %v275, %v267
    %v364 = vpack.c.b16 %v276, %v268
    %v365 = vpack.c.b16 %v277, %v269
    %v366 = vpack.c.b16 %v278, %v270
    %v367 = vpack.c.b16 %v287, %v279
    %v368 = vpack.c.b16 %v288, %v280
    %v369 = vpack.c.b16 %v289, %v281
    %v370 = vpack.c.b16 %v290, %v282
    %v371 = vpack.c.b16 %v291, %v283
    %v372 = vpack.c.b16 %v292, %v284
    %v373 = vpack.c.b16 %v293, %v285
    %v374 = vpack.c.b16 %v294, %v286
    %v375 = vpack.c.b16 %v303, %v295
    %v376 = vpack.c.b16 %v304, %v296
    %v377 = vpack.c.b16 %v305, %v297
    %v378 = vpack.c.b16 %v306, %v298
    %v379 = vpack.c.b16 %v307, %v299
    %v380 = vpack.c.b16 %v308, %v300
    %v381 = vpack.c.b16 %v309, %v301
    %v382 = vpack.c.b16 %v310, %v302
    %v383 = vpack.c.b16 %v319, %v311
    %v384 = vpack.c.b16 %v320, %v312
    %v385 = vpack.c.b16 %v321, %v313
    %v386 = vpack.c.b16 %v322, %v314
    %v387 = vpack.c.b16 %v323, %v315
    %v388 = vpack.c.b16 %v324, %v316
    %v389 = vpack.c.b16 %v325, %v317
    %v390 = vpack.c.b16 %v326, %v318
    %455 = vmatprep.subr.bf16.mxu0 %v328
    %456 = vmatpush1.bf16.msra.mxu0 %v327
    %457 = vmatprep.subr.bf16.mxu0 %v336
    %458 = vmatpush1.bf16.msra.mxu0 %v335
    %459 = vmatprep.subr.bf16.mxu0 %v344
    %460 = vmatpush1.bf16.msra.mxu0 %v343
    %461 = vmatprep.subr.bf16.mxu0 %v352
    %462 = vmatpush1.bf16.msra.mxu0 %v351
    %463 = vmatprep.subr.bf16.mxu0 %v360
    %464 = vmatpush1.bf16.msra.mxu0 %v359
    %465 = vmatprep.subr.bf16.mxu0 %v368
    %466 = vmatpush1.bf16.msra.mxu0 %v367
    %467 = vmatprep.subr.bf16.mxu0 %v376
    %468 = vmatpush1.bf16.msra.mxu0 %v375
    %469 = vmatprep.subr.bf16.mxu0 %v384
    %470 = vmatpush1.bf16.msra.mxu0 %v383
    %471 = vmatprep.subr.bf16.mxu0 0
    %472 = vmatpush1.bf16.msra.mxu0 0
    %473 = vmatprep.subr.bf16.mxu0 0
    %474 = vmatpush1.bf16.msra.mxu0 0
    %475 = vmatprep.subr.bf16.mxu0 0
    %476 = vmatpush1.bf16.msra.mxu0 0
    %477 = vmatprep.subr.bf16.mxu0 0
    %478 = vmatpush1.bf16.msra.mxu0 0
    %479 = vmatprep.subr.bf16.mxu0 0
    %480 = vmatpush1.bf16.msra.mxu0 0
    %481 = vmatprep.subr.bf16.mxu0 0
    %482 = vmatpush1.bf16.msra.mxu0 0
    %483 = vmatprep.subr.bf16.mxu0 0
    %484 = vmatpush1.bf16.msra.mxu0 0
    %485 = vmatprep.subr.bf16.mxu0 0
    %486 = vmatpush1.bf16.msra.mxu0 0
    %487 = vmatprep.mubr.bf16.mxu0 0
    %488 = vmatmul.mubr.bf16.gmra.mrb[0].mxu0 %v70
    %v489 = vpop.f32.mrb[0].mxu0
    %v490 = vadd.f32 0.0, %v489
    %v491 = vpop.f32.mrb[0].mxu0
    %v492 = vadd.f32 0.0, %v491
    %v493 = vpop.f32.mrb[0].mxu0
    %v494 = vpop.f32.mrb[0].mxu0
    %495 = vdwg.mxu0
    %496 = vmatprep.subr.bf16.mxu0 %v330
    %497 = vmatpush1.bf16.msra.mxu0 %v329
    %498 = vmatprep.subr.bf16.mxu0 %v338
    %499 = vmatpush1.bf16.msra.mxu0 %v337
    %500 = vmatprep.subr.bf16.mxu0 %v346
    %501 = vmatpush1.bf16.msra.mxu0 %v345
    %502 = vmatprep.subr.bf16.mxu0 %v354
    %503 = vmatpush1.bf16.msra.mxu0 %v353
    %504 = vmatprep.subr.bf16.mxu0 %v362
    %505 = vmatpush1.bf16.msra.mxu0 %v361
    %506 = vmatprep.subr.bf16.mxu0 %v370
    %507 = vmatpush1.bf16.msra.mxu0 %v369
    %508 = vmatprep.subr.bf16.mxu0 %v378
    %509 = vmatpush1.bf16.msra.mxu0 %v377
    %510 = vmatprep.subr.bf16.mxu0 %v386
    %511 = vmatpush1.bf16.msra.mxu0 %v385
    %512 = vmatprep.subr.bf16.mxu0 0
    %513 = vmatpush1.bf16.msra.mxu0 0
    %514 = vmatprep.subr.bf16.mxu0 0
    %515 = vmatpush1.bf16.msra.mxu0 0
    %516 = vmatprep.subr.bf16.mxu0 0
    %517 = vmatpush1.bf16.msra.mxu0 0
    %518 = vmatprep.subr.bf16.mxu0 0
    %519 = vmatpush1.bf16.msra.mxu0 0
    %520 = vmatprep.subr.bf16.mxu0 0
    %521 = vmatpush1.bf16.msra.mxu0 0
    %522 = vmatprep.subr.bf16.mxu0 0
    %523 = vmatpush1.bf16.msra.mxu0 0
    %524 = vmatprep.subr.bf16.mxu0 0
    %525 = vmatpush1.bf16.msra.mxu0 0
    %526 = vmatprep.subr.bf16.mxu0 0
    %527 = vmatpush1.bf16.msra.mxu0 0
    %528 = vmatprep.mubr.bf16.mxu0 0
    %529 = vmatmul.mubr.bf16.gmra.mrb[0].mxu0 %v70
    %v530 = vpop.f32.mrb[0].mxu0
    %v531 = vadd.f32 0.0, %v530
    %v532 = vpop.f32.mrb[0].mxu0
    %v533 = vadd.f32 0.0, %v532
    %v534 = vpop.f32.mrb[0].mxu0
    %v535 = vpop.f32.mrb[0].mxu0
    %536 = vdwg.mxu0
    %537 = vmatprep.subr.bf16.mxu0 %v332
    %538 = vmatpush1.bf16.msra.mxu0 %v331
    %539 = vmatprep.subr.bf16.mxu0 %v340
    %540 = vmatpush1.bf16.msra.mxu0 %v339
    %541 = vmatprep.subr.bf16.mxu0 %v348
    %542 = vmatpush1.bf16.msra.mxu0 %v347
    %543 = vmatprep.subr.bf16.mxu0 %v356
    %544 = vmatpush1.bf16.msra.mxu0 %v355
    %545 = vmatprep.subr.bf16.mxu0 %v364
    %546 = vmatpush1.bf16.msra.mxu0 %v363
    %547 = vmatprep.subr.bf16.mxu0 %v372
    %548 = vmatpush1.bf16.msra.mxu0 %v371
    %549 = vmatprep.subr.bf16.mxu0 %v380
    %550 = vmatpush1.bf16.msra.mxu0 %v379
    %551 = vmatprep.subr.bf16.mxu0 %v388
    %552 = vmatpush1.bf16.msra.mxu0 %v387
    %553 = vmatprep.subr.bf16.mxu0 0
    %554 = vmatpush1.bf16.msra.mxu0 0
    %555 = vmatprep.subr.bf16.mxu0 0
    %556 = vmatpush1.bf16.msra.mxu0 0
    %557 = vmatprep.subr.bf16.mxu0 0
    %558 = vmatpush1.bf16.msra.mxu0 0
    %559 = vmatprep.subr.bf16.mxu0 0
    %560 = vmatpush1.bf16.msra.mxu0 0
    %561 = vmatprep.subr.bf16.mxu0 0
    %562 = vmatpush1.bf16.msra.mxu0 0
    %563 = vmatprep.subr.bf16.mxu0 0
    %564 = vmatpush1.bf16.msra.mxu0 0
    %565 = vmatprep.subr.bf16.mxu0 0
    %566 = vmatpush1.bf16.msra.mxu0 0
    %567 = vmatprep.subr.bf16.mxu0 0
    %568 = vmatpush1.bf16.msra.mxu0 0
    %569 = vmatprep.mubr.bf16.mxu0 0
    %570 = vmatmul.mubr.bf16.gmra.mrb[0].mxu0 %v70
    %v571 = vpop.f32.mrb[0].mxu0
    %v572 = vadd.f32 0.0, %v571
    %v573 = vpop.f32.mrb[0].mxu0
    %v574 = vadd.f32 0.0, %v573
    %v575 = vpop.f32.mrb[0].mxu0
    %v576 = vpop.f32.mrb[0].mxu0
    %577 = vdwg.mxu0
    %578 = vmatprep.subr.bf16.mxu0 %v334
    %579 = vmatpush1.bf16.msra.mxu0 %v333
    %580 = vmatprep.subr.bf16.mxu0 %v342
    %581 = vmatpush1.bf16.msra.mxu0 %v341
    %582 = vmatprep.subr.bf16.mxu0 %v350
    %583 = vmatpush1.bf16.msra.mxu0 %v349
    %584 = vmatprep.subr.bf16.mxu0 %v358
    %585 = vmatpush1.bf16.msra.mxu0 %v357
    %586 = vmatprep.subr.bf16.mxu0 %v366
    %587 = vmatpush1.bf16.msra.mxu0 %v365
    %588 = vmatprep.subr.bf16.mxu0 %v374
    %589 = vmatpush1.bf16.msra.mxu0 %v373
    %590 = vmatprep.subr.bf16.mxu0 %v382
    %591 = vmatpush1.bf16.msra.mxu0 %v381
    %592 = vmatprep.subr.bf16.mxu0 %v390
    %593 = vmatpush1.bf16.msra.mxu0 %v389
    %594 = vmatprep.subr.bf16.mxu0 0
    %595 = vmatpush1.bf16.msra.mxu0 0
    %596 = vmatprep.subr.bf16.mxu0 0
    %597 = vmatpush1.bf16.msra.mxu0 0
    %598 = vmatprep.subr.bf16.mxu0 0
    %599 = vmatpush1.bf16.msra.mxu0 0
    %600 = vmatprep.subr.bf16.mxu0 0
    %601 = vmatpush1.bf16.msra.mxu0 0
    %602 = vmatprep.subr.bf16.mxu0 0
    %603 = vmatpush1.bf16.msra.mxu0 0
    %604 = vmatprep.subr.bf16.mxu0 0
    %605 = vmatpush1.bf16.msra.mxu0 0
    %606 = vmatprep.subr.bf16.mxu0 0
    %607 = vmatpush1.bf16.msra.mxu0 0
    %608 = vmatprep.subr.bf16.mxu0 0
    %609 = vmatpush1.bf16.msra.mxu0 0
    %610 = vmatprep.mubr.bf16.mxu0 0
    %611 = vmatmul.mubr.bf16.gmra.mrb[0].mxu0 %v70
    %v612 = vpop.f32.mrb[0].mxu0
    %v613 = vadd.f32 0.0, %v612
    %v614 = vpop.f32.mrb[0].mxu0
    %v615 = vadd.f32 0.0, %v614
    %v616 = vpop.f32.mrb[0].mxu0
    %v617 = vpop.f32.mrb[0].mxu0
    %618 = vdwg.mxu0
    %v619 = vld [vmem:[#allocation4] sm:$0xff]
    %v621 = vlaneseq
    %v622 = vshrl.u32 %v621, 7
    %v623 = vsub.s32 0, %v622
    %v624 = vrot.slane %v619, %v623
    %v625 = vlaneseq
    %v626 = vshrl.u32 %v625, 7
    %v627 = vsub.s32 1, %v626
    %v628 = vrot.slane %v619, %v627
    %v629 = vlaneseq
    %v630 = vshrl.u32 %v629, 7
    %v631 = vsub.s32 2, %v630
    %v632 = vrot.slane %v619, %v631
    %v633 = vlaneseq
    %v634 = vshrl.u32 %v633, 7
    %v635 = vsub.s32 3, %v634
    %v636 = vrot.slane %v619, %v635
    %v637 = vlaneseq
    %v638 = vshrl.u32 %v637, 7
    %v639 = vsub.s32 4, %v638
    %v640 = vrot.slane %v619, %v639
    %v641 = vlaneseq
    %v642 = vshrl.u32 %v641, 7
    %v643 = vsub.s32 5, %v642
    %v644 = vrot.slane %v619, %v643
    %v645 = vlaneseq
    %v646 = vshrl.u32 %v645, 7
    %v647 = vsub.s32 6, %v646
    %v648 = vrot.slane %v619, %v647
    %v649 = vlaneseq
    %v650 = vshrl.u32 %v649, 7
    %v651 = vsub.s32 7, %v650
    %v652 = vrot.slane %v619, %v651
    %v661 = vmul.f32 %v490, %v624
    %v662 = vmul.f32 %v492, %v628
    %v663 = vmul.f32 %v531, %v632
    %v664 = vmul.f32 %v533, %v636
    %v665 = vmul.f32 %v572, %v640
    %v666 = vmul.f32 %v574, %v644
    %v667 = vmul.f32 %v613, %v648
    %v668 = vmul.f32 %v615, %v652
    %v669 = vld [vmem:[#allocation6] sm:$0xff]
    %v671 = vlaneseq
    %v672 = vshrl.u32 %v671, 7
    %v673 = vsub.s32 0, %v672
    %v674 = vrot.slane %v669, %v673
    %v675 = vlaneseq
    %v676 = vshrl.u32 %v675, 7
    %v677 = vsub.s32 1, %v676
    %v678 = vrot.slane %v669, %v677
    %v679 = vlaneseq
    %v680 = vshrl.u32 %v679, 7
    %v681 = vsub.s32 2, %v680
    %v682 = vrot.slane %v669, %v681
    %v683 = vlaneseq
    %v684 = vshrl.u32 %v683, 7
    %v685 = vsub.s32 3, %v684
    %v686 = vrot.slane %v669, %v685
    %v687 = vlaneseq
    %v688 = vshrl.u32 %v687, 7
    %v689 = vsub.s32 4, %v688
    %v690 = vrot.slane %v669, %v689
    %v691 = vlaneseq
    %v692 = vshrl.u32 %v691, 7
    %v693 = vsub.s32 5, %v692
    %v694 = vrot.slane %v669, %v693
    %v695 = vlaneseq
    %v696 = vshrl.u32 %v695, 7
    %v697 = vsub.s32 6, %v696
    %v698 = vrot.slane %v669, %v697
    %v699 = vlaneseq
    %v700 = vshrl.u32 %v699, 7
    %v701 = vsub.s32 7, %v700
    %v702 = vrot.slane %v669, %v701
    %v711 = vadd.f32 %v661, %v674
    %v712 = vadd.f32 %v662, %v678
    %v713 = vadd.f32 %v663, %v682
    %v714 = vadd.f32 %v664, %v686
    %v715 = vadd.f32 %v665, %v690
    %v716 = vadd.f32 %v666, %v694
    %v717 = vadd.f32 %v667, %v698
    %v718 = vadd.f32 %v668, %v702
    %vm719 = vcmp.ge.f32.partialorder %v711, 0.0
    %vm720 = vcmp.ge.f32.partialorder %v712, 0.0
    %vm721 = vcmp.ge.f32.partialorder %v713, 0.0
    %vm722 = vcmp.ge.f32.partialorder %v714, 0.0
    %vm723 = vcmp.ge.f32.partialorder %v715, 0.0
    %vm724 = vcmp.ge.f32.partialorder %v716, 0.0
    %vm725 = vcmp.ge.f32.partialorder %v717, 0.0
    %vm726 = vcmp.ge.f32.partialorder %v718, 0.0
    %v727 = vld [vmem:[#allocation7] sm:$0xff]
    %v729 = vlaneseq
    %v730 = vshrl.u32 %v729, 7
    %v731 = vsub.s32 0, %v730
    %v732 = vrot.slane %v727, %v731
    %v733 = vlaneseq
    %v734 = vshrl.u32 %v733, 7
    %v735 = vsub.s32 1, %v734
    %v736 = vrot.slane %v727, %v735
    %v737 = vlaneseq
    %v738 = vshrl.u32 %v737, 7
    %v739 = vsub.s32 2, %v738
    %v740 = vrot.slane %v727, %v739
    %v741 = vlaneseq
    %v742 = vshrl.u32 %v741, 7
    %v743 = vsub.s32 3, %v742
    %v744 = vrot.slane %v727, %v743
    %v745 = vlaneseq
    %v746 = vshrl.u32 %v745, 7
    %v747 = vsub.s32 4, %v746
    %v748 = vrot.slane %v727, %v747
    %v749 = vlaneseq
    %v750 = vshrl.u32 %v749, 7
    %v751 = vsub.s32 5, %v750
    %v752 = vrot.slane %v727, %v751
    %v753 = vlaneseq
    %v754 = vshrl.u32 %v753, 7
    %v755 = vsub.s32 6, %v754
    %v756 = vrot.slane %v727, %v755
    %v757 = vlaneseq
    %v758 = vshrl.u32 %v757, 7
    %v759 = vsub.s32 7, %v758
    %v760 = vrot.slane %v727, %v759
    %v769 = vmul.f32 %v732, %v711
    %v770 = vmul.f32 %v736, %v712
    %v771 = vmul.f32 %v740, %v713
    %v772 = vmul.f32 %v744, %v714
    %v773 = vmul.f32 %v748, %v715
    %v774 = vmul.f32 %v752, %v716
    %v775 = vmul.f32 %v756, %v717
    %v776 = vmul.f32 %v760, %v718
    %v777 = vsel %vm719, %v711, %v769
    %v778 = vsel %vm720, %v712, %v770
    %v779 = vsel %vm721, %v713, %v771
    %v780 = vsel %vm722, %v714, %v772
    %v781 = vsel %vm723, %v715, %v773
    %v782 = vsel %vm724, %v716, %v774
    %v783 = vsel %vm725, %v717, %v775
    %v784 = vsel %vm726, %v718, %v776
    %785 = vst [vmem:[%s5] sm:$0xff] %v777
    %786 = vst [vmem:[%s5 + $0x8] sm:$0xff] %v778
    %787 = vst [vmem:[%s5 + $0x10] sm:$0xff] %v779
    %788 = vst [vmem:[%s5 + $0x18] sm:$0xff] %v780
    %789 = vst [vmem:[%s5 + $0x20] sm:$0xff] %v781
    %790 = vst [vmem:[%s5 + $0x28] sm:$0xff] %v782
    %791 = vst [vmem:[%s5 + $0x30] sm:$0xff] %v783
    %792 = vst [vmem:[%s5 + $0x38] sm:$0xff] %v784
    // Predicated region
    $region38: #{decoder_group_forward.7} parent=1 // pred_check
      _
    $region39: #{decoder_group_forward.7} parent=1 // pred_check_branch
      %794 = sbr.rel (0) target = $region41
    $region40: #{decoder_group_forward.7} parent=1 // pred_region
      _
    $region41: #{decoder_group_forward.7} parent=1 // pred_fallthru
      _
    // Predicated region
    $region42: #{decoder_group_forward.7} parent=1 // pred_check
      _
    $region43: #{decoder_group_forward.7} parent=1 // pred_check_branch
      %796 = sbr.rel (0) target = $region45
    $region44: #{decoder_group_forward.7} parent=1 // pred_region
      _
    $region45: #{decoder_group_forward.7} parent=1 // pred_fallthru
      _
    %797 = vsyncpa [#allocation3], 1
    %798 = vsyncpa [#allocation5], 1
    %799 = vsyncpa [#allocation8], 1

// kernel: decoder_group_forward.8
$region0: #{decoder_group_forward.8}
  #allocation0 [shape = 'u32[]', space=smem, size = 0x4, offset = 0x4, fixed_abs, tag = 'smem constant byte address 0x4 - core index']
  #allocation1 [shape = 'u32[144,128]{1,0:T(1,128)}', space=vmem, size = 0x12000, scoped, tag = 'internal scratch']
  %s0 = inlined_call_operand.vmem [shape: bf16[32,640], index: 0, kind: input, shape index: {}]
  %s1 = inlined_call_operand.vmem [shape: bf16[640,256], index: 1, kind: input, shape index: {}]
  %s2 = inlined_call_operand.vmem [shape: f32[1,256], index: 2, kind: input, shape index: {}]
  %s3 = inlined_call_operand.vmem [shape: f32[1,256], index: 3, kind: input, shape index: {}]
  %s4 = inlined_call_operand.vmem [shape: f32[1,256], index: 4, kind: input, shape index: {}]
  %s5 = inlined_call_operand.vmem [shape: f32[32,256], index: 5, kind: output, shape index: {}]
  %s6 = sld [smem:[#allocation0]]
  $region30: #{decoder_group_forward.8} parent=0
    _
  %s8 = ssub.s32 1, %s6
  %s9 = scalar_select 0, %s8, %s6
  // Predicated region
  $region2: #{decoder_group_forward.8} parent=0 // pred_check
    _
  $region3: #{decoder_group_forward.8} parent=0 // pred_check_branch
    %11 = sbr.rel (0) target = $region5
  $region4: #{decoder_group_forward.8} parent=0 // pred_region
    _
  $region5: #{decoder_group_forward.8} parent=0 // pred_fallthru
    _
  // Predicated region
  $region6: #{decoder_group_forward.8} parent=0 // pred_check
    _
  $region7: #{decoder_group_forward.8} parent=0 // pred_check_branch
    %13 = sbr.rel (0) target = $region9
  $region8: #{decoder_group_forward.8} parent=0 // pred_region
    _
  $region9: #{decoder_group_forward.8} parent=0 // pred_fallthru
    _
  // Predicated region
  $region10: #{decoder_group_forward.8} parent=0 // pred_check
    _
  $region11: #{decoder_group_forward.8} parent=0 // pred_check_branch
    %15 = sbr.rel (0) target = $region13
  $region12: #{decoder_group_forward.8} parent=0 // pred_region
    _
  $region13: #{decoder_group_forward.8} parent=0 // pred_fallthru
    _
  // Predicated region
  $region14: #{decoder_group_forward.8} parent=0 // pred_check
    _
  $region15: #{decoder_group_forward.8} parent=0 // pred_check_branch
    %17 = sbr.rel (0) target = $region17
  $region16: #{decoder_group_forward.8} parent=0 // pred_region
    _
  $region17: #{decoder_group_forward.8} parent=0 // pred_fallthru
    _
  // Predicated region
  $region18: #{decoder_group_forward.8} parent=0 // pred_check
    _
  $region19: #{decoder_group_forward.8} parent=0 // pred_check_branch
    %19 = sbr.rel (0) target = $region21
  $region20: #{decoder_group_forward.8} parent=0 // pred_region
    _
  $region21: #{decoder_group_forward.8} parent=0 // pred_fallthru
    _
  %v21 = vld [vmem:[%s0] sm:$0xff]
  %v22 = vld [vmem:[%s0 + $0x8] sm:$0xff]
  %v23 = vld [vmem:[%s0 + $0x10] sm:$0xf]
  %v24 = vld [vmem:[%s0 + $0x14] sm:$0xff]
  %v25 = vld [vmem:[%s0 + $0x1c] sm:$0xff]
  %v26 = vld [vmem:[%s0 + $0x24] sm:$0xf]
  %v27 = vld [vmem:[%s0 + $0x28] sm:$0xff]
  %v28 = vld [vmem:[%s0 + $0x30] sm:$0xff]
  %v29 = vld [vmem:[%s0 + $0x38] sm:$0xf]
  %v30 = vld [vmem:[%s0 + $0x3c] sm:$0xff]
  %v31 = vld [vmem:[%s0 + $0x44] sm:$0xff]
  %v32 = vld [vmem:[%s0 + $0x4c] sm:$0xf]
  %v33 = vld [vmem:[%s1] sm:$0xff]
  %v34 = vld [vmem:[%s1 + $0x8] sm:$0xff]
  %v35 = vld [vmem:[%s1 + $0x10] sm:$0xff]
  %v36 = vld [vmem:[%s1 + $0x18] sm:$0xff]
  %v37 = vld [vmem:[%s1 + $0x20] sm:$0xff]
  %v38 = vld [vmem:[%s1 + $0x28] sm:$0xff]
  %v39 = vld [vmem:[%s1 + $0x30] sm:$0xff]
  %v40 = vld [vmem:[%s1 + $0x38] sm:$0xff]
  %v41 = vld [vmem:[%s1 + $0x40] sm:$0xff]
  %v42 = vld [vmem:[%s1 + $0x48] sm:$0xff]
  %v43 = vld [vmem:[%s1 + $0x50] sm:$0xff]
  %v44 = vld [vmem:[%s1 + $0x58] sm:$0xff]
  %v45 = vld [vmem:[%s1 + $0x60] sm:$0xff]
  %v46 = vld [vmem:[%s1 + $0x68] sm:$0xff]
  %v47 = vld [vmem:[%s1 + $0x70] sm:$0xff]
  %v48 = vld [vmem:[%s1 + $0x78] sm:$0xff]
  %v49 = vld [vmem:[%s1 + $0x80] sm:$0xff]
  %v50 = vld [vmem:[%s1 + $0x88] sm:$0xff]
  %v51 = vld [vmem:[%s1 + $0x90] sm:$0xff]
  %v52 = vld [vmem:[%s1 + $0x98] sm:$0xff]
  %v53 = vld [vmem:[%s1 + $0xa0] sm:$0xff]
  %v54 = vld [vmem:[%s1 + $0xa8] sm:$0xff]
  %v55 = vld [vmem:[%s1 + $0xb0] sm:$0xff]
  %v56 = vld [vmem:[%s1 + $0xb8] sm:$0xff]
  %v57 = vld [vmem:[%s1 + $0xc0] sm:$0xff]
  %v58 = vld [vmem:[%s1 + $0xc8] sm:$0xff]
  %v59 = vld [vmem:[%s1 + $0xd0] sm:$0xff]
  %v60 = vld [vmem:[%s1 + $0xd8] sm:$0xff]
  %v61 = vld [vmem:[%s1 + $0xe0] sm:$0xff]
  %v62 = vld [vmem:[%s1 + $0xe8] sm:$0xff]
  %v63 = vld [vmem:[%s1 + $0xf0] sm:$0xff]
  %v64 = vld [vmem:[%s1 + $0xf8] sm:$0xff]
  %v65 = vld [vmem:[%s1 + $0x100] sm:$0xff]
  %v66 = vld [vmem:[%s1 + $0x108] sm:$0xff]
  %v67 = vld [vmem:[%s1 + $0x110] sm:$0xff]
  %v68 = vld [vmem:[%s1 + $0x118] sm:$0xff]
  %v69 = vld [vmem:[%s1 + $0x120] sm:$0xff]
  %v70 = vld [vmem:[%s1 + $0x128] sm:$0xff]
  %v71 = vld [vmem:[%s1 + $0x130] sm:$0xff]
  %v72 = vld [vmem:[%s1 + $0x138] sm:$0xff]
  %v73 = vld [vmem:[%s1 + $0x140] sm:$0xff]
  %v74 = vld [vmem:[%s1 + $0x148] sm:$0xff]
  %v75 = vld [vmem:[%s1 + $0x150] sm:$0xff]
  %v76 = vld [vmem:[%s1 + $0x158] sm:$0xff]
  %v77 = vld [vmem:[%s1 + $0x160] sm:$0xff]
  %v78 = vld [vmem:[%s1 + $0x168] sm:$0xff]
  %v79 = vld [vmem:[%s1 + $0x170] sm:$0xff]
  %v80 = vld [vmem:[%s1 + $0x178] sm:$0xff]
  %v81 = vld [vmem:[%s1 + $0x180] sm:$0xff]
  %v82 = vld [vmem:[%s1 + $0x188] sm:$0xff]
  %v83 = vld [vmem:[%s1 + $0x190] sm:$0xff]
  %v84 = vld [vmem:[%s1 + $0x198] sm:$0xff]
  %v85 = vld [vmem:[%s1 + $0x1a0] sm:$0xff]
  %v86 = vld [vmem:[%s1 + $0x1a8] sm:$0xff]
  %v87 = vld [vmem:[%s1 + $0x1b0] sm:$0xff]
  %v88 = vld [vmem:[%s1 + $0x1b8] sm:$0xff]
  %v89 = vld [vmem:[%s1 + $0x1c0] sm:$0xff]
  %v90 = vld [vmem:[%s1 + $0x1c8] sm:$0xff]
  %v91 = vld [vmem:[%s1 + $0x1d0] sm:$0xff]
  %v92 = vld [vmem:[%s1 + $0x1d8] sm:$0xff]
  %v93 = vld [vmem:[%s1 + $0x1e0] sm:$0xff]
  %v94 = vld [vmem:[%s1 + $0x1e8] sm:$0xff]
  %v95 = vld [vmem:[%s1 + $0x1f0] sm:$0xff]
  %v96 = vld [vmem:[%s1 + $0x1f8] sm:$0xff]
  %v97 = vld [vmem:[%s1 + $0x200] sm:$0xff]
  %v98 = vld [vmem:[%s1 + $0x208] sm:$0xff]
  %v99 = vld [vmem:[%s1 + $0x210] sm:$0xff]
  %v100 = vld [vmem:[%s1 + $0x218] sm:$0xff]
  %v101 = vld [vmem:[%s1 + $0x220] sm:$0xff]
  %v102 = vld [vmem:[%s1 + $0x228] sm:$0xff]
  %v103 = vld [vmem:[%s1 + $0x230] sm:$0xff]
  %v104 = vld [vmem:[%s1 + $0x238] sm:$0xff]
  %v105 = vld [vmem:[%s1 + $0x240] sm:$0xff]
  %v106 = vld [vmem:[%s1 + $0x248] sm:$0xff]
  %v107 = vld [vmem:[%s1 + $0x250] sm:$0xff]
  %v108 = vld [vmem:[%s1 + $0x258] sm:$0xff]
  %v109 = vld [vmem:[%s1 + $0x260] sm:$0xff]
  %v110 = vld [vmem:[%s1 + $0x268] sm:$0xff]
  %v111 = vld [vmem:[%s1 + $0x270] sm:$0xff]
  %v112 = vld [vmem:[%s1 + $0x278] sm:$0xff]
  %v125 = vunpack.c.l.b16 %v21
  %v126 = vunpack.c.h.b16 %v21
  %v127 = vunpack.c.l.b16 %v22
  %v128 = vunpack.c.h.b16 %v22
  %v129 = vunpack.c.l.b16 %v23
  %v130 = vunpack.c.l.b16 %v24
  %v131 = vunpack.c.h.b16 %v24
  %v132 = vunpack.c.l.b16 %v25
  %v133 = vunpack.c.h.b16 %v25
  %v134 = vunpack.c.l.b16 %v26
  %v135 = vunpack.c.l.b16 %v27
  %v136 = vunpack.c.h.b16 %v27
  %v137 = vunpack.c.l.b16 %v28
  %v138 = vunpack.c.h.b16 %v28
  %v139 = vunpack.c.l.b16 %v29
  %v140 = vunpack.c.l.b16 %v30
  %v141 = vunpack.c.h.b16 %v30
  %v142 = vunpack.c.l.b16 %v31
  %v143 = vunpack.c.h.b16 %v31
  %v144 = vunpack.c.l.b16 %v32
  %v145 = vpack.c.b16 %v130, %v125
  %v146 = vpack.c.b16 %v131, %v126
  %v147 = vpack.c.b16 %v132, %v127
  %v148 = vpack.c.b16 %v133, %v128
  %v149 = vpack.c.b16 %v134, %v129
  %v150 = vpack.c.b16 %v140, %v135
  %v151 = vpack.c.b16 %v141, %v136
  %v152 = vpack.c.b16 %v142, %v137
  %v153 = vpack.c.b16 %v143, %v138
  %v154 = vpack.c.b16 %v144, %v139
  %v245 = vunpack.c.l.b16 %v33
  %v246 = vunpack.c.h.b16 %v33
  %v247 = vunpack.c.l.b16 %v34
  %v248 = vunpack.c.h.b16 %v34
  %v249 = vunpack.c.l.b16 %v35
  %v250 = vunpack.c.h.b16 %v35
  %v251 = vunpack.c.l.b16 %v36
  %v252 = vunpack.c.h.b16 %v36
  %v253 = vunpack.c.l.b16 %v37
  %v254 = vunpack.c.h.b16 %v37
  %v255 = vunpack.c.l.b16 %v38
  %v256 = vunpack.c.h.b16 %v38
  %v257 = vunpack.c.l.b16 %v39
  %v258 = vunpack.c.h.b16 %v39
  %v259 = vunpack.c.l.b16 %v40
  %v260 = vunpack.c.h.b16 %v40
  %v261 = vunpack.c.l.b16 %v41
  %v262 = vunpack.c.h.b16 %v41
  %v263 = vunpack.c.l.b16 %v42
  %v264 = vunpack.c.h.b16 %v42
  %v265 = vunpack.c.l.b16 %v43
  %v266 = vunpack.c.h.b16 %v43
  %v267 = vunpack.c.l.b16 %v44
  %v268 = vunpack.c.h.b16 %v44
  %v269 = vunpack.c.l.b16 %v45
  %v270 = vunpack.c.h.b16 %v45
  %v271 = vunpack.c.l.b16 %v46
  %v272 = vunpack.c.h.b16 %v46
  %v273 = vunpack.c.l.b16 %v47
  %v274 = vunpack.c.h.b16 %v47
  %v275 = vunpack.c.l.b16 %v48
  %v276 = vunpack.c.h.b16 %v48
  %v277 = vunpack.c.l.b16 %v49
  %v278 = vunpack.c.h.b16 %v49
  %v279 = vunpack.c.l.b16 %v50
  %v280 = vunpack.c.h.b16 %v50
  %v281 = vunpack.c.l.b16 %v51
  %v282 = vunpack.c.h.b16 %v51
  %v283 = vunpack.c.l.b16 %v52
  %v284 = vunpack.c.h.b16 %v52
  %v285 = vunpack.c.l.b16 %v53
  %v286 = vunpack.c.h.b16 %v53
  %v287 = vunpack.c.l.b16 %v54
  %v288 = vunpack.c.h.b16 %v54
  %v289 = vunpack.c.l.b16 %v55
  %v290 = vunpack.c.h.b16 %v55
  %v291 = vunpack.c.l.b16 %v56
  %v292 = vunpack.c.h.b16 %v56
  %v293 = vunpack.c.l.b16 %v57
  %v294 = vunpack.c.h.b16 %v57
  %v295 = vunpack.c.l.b16 %v58
  %v296 = vunpack.c.h.b16 %v58
  %v297 = vunpack.c.l.b16 %v59
  %v298 = vunpack.c.h.b16 %v59
  %v299 = vunpack.c.l.b16 %v60
  %v300 = vunpack.c.h.b16 %v60
  %v301 = vunpack.c.l.b16 %v61
  %v302 = vunpack.c.h.b16 %v61
  %v303 = vunpack.c.l.b16 %v62
  %v304 = vunpack.c.h.b16 %v62
  %v305 = vunpack.c.l.b16 %v63
  %v306 = vunpack.c.h.b16 %v63
  %v307 = vunpack.c.l.b16 %v64
  %v308 = vunpack.c.h.b16 %v64
  %v309 = vunpack.c.l.b16 %v65
  %v310 = vunpack.c.h.b16 %v65
  %v311 = vunpack.c.l.b16 %v66
  %v312 = vunpack.c.h.b16 %v66
  %v313 = vunpack.c.l.b16 %v67
  %v314 = vunpack.c.h.b16 %v67
  %v315 = vunpack.c.l.b16 %v68
  %v316 = vunpack.c.h.b16 %v68
  %v317 = vunpack.c.l.b16 %v69
  %v318 = vunpack.c.h.b16 %v69
  %v319 = vunpack.c.l.b16 %v70
  %v320 = vunpack.c.h.b16 %v70
  %v321 = vunpack.c.l.b16 %v71
  %v322 = vunpack.c.h.b16 %v71
  %v323 = vunpack.c.l.b16 %v72
  %v324 = vunpack.c.h.b16 %v72
  %v325 = vunpack.c.l.b16 %v73
  %v326 = vunpack.c.h.b16 %v73
  %v327 = vunpack.c.l.b16 %v74
  %v328 = vunpack.c.h.b16 %v74
  %v329 = vunpack.c.l.b16 %v75
  %v330 = vunpack.c.h.b16 %v75
  %v331 = vunpack.c.l.b16 %v76
  %v332 = vunpack.c.h.b16 %v76
  %v333 = vunpack.c.l.b16 %v77
  %v334 = vunpack.c.h.b16 %v77
  %v335 = vunpack.c.l.b16 %v78
  %v336 = vunpack.c.h.b16 %v78
  %v337 = vunpack.c.l.b16 %v79
  %v338 = vunpack.c.h.b16 %v79
  %v339 = vunpack.c.l.b16 %v80
  %v340 = vunpack.c.h.b16 %v80
  %v341 = vunpack.c.l.b16 %v81
  %v342 = vunpack.c.h.b16 %v81
  %v343 = vunpack.c.l.b16 %v82
  %v344 = vunpack.c.h.b16 %v82
  %v345 = vunpack.c.l.b16 %v83
  %v346 = vunpack.c.h.b16 %v83
  %v347 = vunpack.c.l.b16 %v84
  %v348 = vunpack.c.h.b16 %v84
  %v349 = vunpack.c.l.b16 %v85
  %v350 = vunpack.c.h.b16 %v85
  %v351 = vunpack.c.l.b16 %v86
  %v352 = vunpack.c.h.b16 %v86
  %v353 = vunpack.c.l.b16 %v87
  %v354 = vunpack.c.h.b16 %v87
  %v355 = vunpack.c.l.b16 %v88
  %v356 = vunpack.c.h.b16 %v88
  %v357 = vunpack.c.l.b16 %v89
  %v358 = vunpack.c.h.b16 %v89
  %v359 = vunpack.c.l.b16 %v90
  %v360 = vunpack.c.h.b16 %v90
  %v361 = vunpack.c.l.b16 %v91
  %v362 = vunpack.c.h.b16 %v91
  %v363 = vunpack.c.l.b16 %v92
  %v364 = vunpack.c.h.b16 %v92
  %v365 = vunpack.c.l.b16 %v93
  %v366 = vunpack.c.h.b16 %v93
  %v367 = vunpack.c.l.b16 %v94
  %v368 = vunpack.c.h.b16 %v94
  %v369 = vunpack.c.l.b16 %v95
  %v370 = vunpack.c.h.b16 %v95
  %v371 = vunpack.c.l.b16 %v96
  %v372 = vunpack.c.h.b16 %v96
  %v373 = vunpack.c.l.b16 %v97
  %v374 = vunpack.c.h.b16 %v97
  %v375 = vunpack.c.l.b16 %v98
  %v376 = vunpack.c.h.b16 %v98
  %v377 = vunpack.c.l.b16 %v99
  %v378 = vunpack.c.h.b16 %v99
  %v379 = vunpack.c.l.b16 %v100
  %v380 = vunpack.c.h.b16 %v100
  %v381 = vunpack.c.l.b16 %v101
  %v382 = vunpack.c.h.b16 %v101
  %v383 = vunpack.c.l.b16 %v102
  %v384 = vunpack.c.h.b16 %v102
  %v385 = vunpack.c.l.b16 %v103
  %v386 = vunpack.c.h.b16 %v103
  %v387 = vunpack.c.l.b16 %v104
  %v388 = vunpack.c.h.b16 %v104
  %v389 = vunpack.c.l.b16 %v105
  %v390 = vunpack.c.h.b16 %v105
  %v391 = vunpack.c.l.b16 %v106
  %v392 = vunpack.c.h.b16 %v106
  %v393 = vunpack.c.l.b16 %v107
  %v394 = vunpack.c.h.b16 %v107
  %v395 = vunpack.c.l.b16 %v108
  %v396 = vunpack.c.h.b16 %v108
  %v397 = vunpack.c.l.b16 %v109
  %v398 = vunpack.c.h.b16 %v109
  %v399 = vunpack.c.l.b16 %v110
  %v400 = vunpack.c.h.b16 %v110
  %v401 = vunpack.c.l.b16 %v111
  %v402 = vunpack.c.h.b16 %v111
  %v403 = vunpack.c.l.b16 %v112
  %v404 = vunpack.c.h.b16 %v112
  %v405 = vpack.c.b16 %v247, %v245
  %v406 = vpack.c.b16 %v248, %v246
  %v407 = vpack.c.b16 %v251, %v249
  %v408 = vpack.c.b16 %v252, %v250
  %v409 = vpack.c.b16 %v255, %v253
  %v410 = vpack.c.b16 %v256, %v254
  %v411 = vpack.c.b16 %v259, %v257
  %v412 = vpack.c.b16 %v260, %v258
  %v413 = vpack.c.b16 %v263, %v261
  %v414 = vpack.c.b16 %v264, %v262
  %v415 = vpack.c.b16 %v267, %v265
  %v416 = vpack.c.b16 %v268, %v266
  %v417 = vpack.c.b16 %v271, %v269
  %v418 = vpack.c.b16 %v272, %v270
  %v419 = vpack.c.b16 %v275, %v273
  %v420 = vpack.c.b16 %v276, %v274
  %v421 = vpack.c.b16 %v279, %v277
  %v422 = vpack.c.b16 %v280, %v278
  %v423 = vpack.c.b16 %v283, %v281
  %v424 = vpack.c.b16 %v284, %v282
  %v425 = vpack.c.b16 %v287, %v285
  %v426 = vpack.c.b16 %v288, %v286
  %v427 = vpack.c.b16 %v291, %v289
  %v428 = vpack.c.b16 %v292, %v290
  %v429 = vpack.c.b16 %v295, %v293
  %v430 = vpack.c.b16 %v296, %v294
  %v431 = vpack.c.b16 %v299, %v297
  %v432 = vpack.c.b16 %v300, %v298
  %v433 = vpack.c.b16 %v303, %v301
  %v434 = vpack.c.b16 %v304, %v302
  %v435 = vpack.c.b16 %v307, %v305
  %v436 = vpack.c.b16 %v308, %v306
  %v437 = vpack.c.b16 %v311, %v309
  %v438 = vpack.c.b16 %v312, %v310
  %v439 = vpack.c.b16 %v315, %v313
  %v440 = vpack.c.b16 %v316, %v314
  %v441 = vpack.c.b16 %v319, %v317
  %v442 = vpack.c.b16 %v320, %v318
  %v443 = vpack.c.b16 %v323, %v321
  %v444 = vpack.c.b16 %v324, %v322
  %v445 = vpack.c.b16 %v327, %v325
  %v446 = vpack.c.b16 %v328, %v326
  %v447 = vpack.c.b16 %v331, %v329
  %v448 = vpack.c.b16 %v332, %v330
  %v449 = vpack.c.b16 %v335, %v333
  %v450 = vpack.c.b16 %v336, %v334
  %v451 = vpack.c.b16 %v339, %v337
  %v452 = vpack.c.b16 %v340, %v338
  %v453 = vpack.c.b16 %v343, %v341
  %v454 = vpack.c.b16 %v344, %v342
  %v455 = vpack.c.b16 %v347, %v345
  %v456 = vpack.c.b16 %v348, %v346
  %v457 = vpack.c.b16 %v351, %v349
  %v458 = vpack.c.b16 %v352, %v350
  %v459 = vpack.c.b16 %v355, %v353
  %v460 = vpack.c.b16 %v356, %v354
  %v461 = vpack.c.b16 %v359, %v357
  %v462 = vpack.c.b16 %v360, %v358
  %v463 = vpack.c.b16 %v363, %v361
  %v464 = vpack.c.b16 %v364, %v362
  %v465 = vpack.c.b16 %v367, %v365
  %v466 = vpack.c.b16 %v368, %v366
  %v467 = vpack.c.b16 %v371, %v369
  %v468 = vpack.c.b16 %v372, %v370
  %v469 = vpack.c.b16 %v375, %v373
  %v470 = vpack.c.b16 %v376, %v374
  %v471 = vpack.c.b16 %v379, %v377
  %v472 = vpack.c.b16 %v380, %v378
  %v473 = vpack.c.b16 %v383, %v381
  %v474 = vpack.c.b16 %v384, %v382
  %v475 = vpack.c.b16 %v387, %v385
  %v476 = vpack.c.b16 %v388, %v386
  %v477 = vpack.c.b16 %v391, %v389
  %v478 = vpack.c.b16 %v392, %v390
  %v479 = vpack.c.b16 %v395, %v393
  %v480 = vpack.c.b16 %v396, %v394
  %v481 = vpack.c.b16 %v399, %v397
  %v482 = vpack.c.b16 %v400, %v398
  %v483 = vpack.c.b16 %v403, %v401
  %v484 = vpack.c.b16 %v404, %v402
  %565 = vmatprep.subr.bf16.mxu0 %v406
  %566 = vmatpush1.bf16.msra.mxu0 %v405
  %567 = vmatprep.subr.bf16.mxu0 %v408
  %568 = vmatpush1.bf16.msra.mxu0 %v407
  %569 = vmatprep.subr.bf16.mxu0 %v410
  %570 = vmatpush1.bf16.msra.mxu0 %v409
  %571 = vmatprep.subr.bf16.mxu0 %v412
  %572 = vmatpush1.bf16.msra.mxu0 %v411
  %573 = vmatprep.subr.bf16.mxu0 %v414
  %574 = vmatpush1.bf16.msra.mxu0 %v413
  %575 = vmatprep.subr.bf16.mxu0 %v416
  %576 = vmatpush1.bf16.msra.mxu0 %v415
  %577 = vmatprep.subr.bf16.mxu0 %v418
  %578 = vmatpush1.bf16.msra.mxu0 %v417
  %579 = vmatprep.subr.bf16.mxu0 %v420
  %580 = vmatpush1.bf16.msra.mxu0 %v419
  %581 = vmatprep.subr.bf16.mxu0 %v422
  %582 = vmatpush1.bf16.msra.mxu0 %v421
  %583 = vmatprep.subr.bf16.mxu0 %v424
  %584 = vmatpush1.bf16.msra.mxu0 %v423
  %585 = vmatprep.subr.bf16.mxu0 %v426
  %586 = vmatpush1.bf16.msra.mxu0 %v425
  %587 = vmatprep.subr.bf16.mxu0 %v428
  %588 = vmatpush1.bf16.msra.mxu0 %v427
  %589 = vmatprep.subr.bf16.mxu0 %v430
  %590 = vmatpush1.bf16.msra.mxu0 %v429
  %591 = vmatprep.subr.bf16.mxu0 %v432
  %592 = vmatpush1.bf16.msra.mxu0 %v431
  %593 = vmatprep.subr.bf16.mxu0 %v434
  %594 = vmatpush1.bf16.msra.mxu0 %v433
  %595 = vmatprep.subr.bf16.mxu0 %v436
  %596 = vmatpush1.bf16.msra.mxu0 %v435
  %597 = vmatprep.mubr.bf16.mxu0 %v146
  %598 = vmatmul.mubr.bf16.gmra.mrb[0].mxu0 %v145
  %v599 = vpop.f32.mrb[0].mxu0
  %v600 = vadd.f32 0.0, %v599
  %v601 = vpop.f32.mrb[0].mxu0
  %v602 = vadd.f32 0.0, %v601
  %v603 = vpop.f32.mrb[0].mxu0
  %v604 = vadd.f32 0.0, %v603
  %v605 = vpop.f32.mrb[0].mxu0
  %v606 = vadd.f32 0.0, %v605
  %607 = vmatprep.mubr.bf16.mxu0 %v151
  %608 = vmatmul.mubr.bf16.gmra.mrb[0].mxu0 %v150
  %v609 = vpop.f32.mrb[0].mxu0
  %v610 = vadd.f32 0.0, %v609
  %v611 = vpop.f32.mrb[0].mxu0
  %v612 = vadd.f32 0.0, %v611
  %v613 = vpop.f32.mrb[0].mxu0
  %v614 = vadd.f32 0.0, %v613
  %v615 = vpop.f32.mrb[0].mxu0
  %v616 = vadd.f32 0.0, %v615
  %617 = vdwg.mxu0
  %618 = vmatprep.subr.bf16.mxu0 %v438
  %619 = vmatpush1.bf16.msra.mxu0 %v437
  %620 = vmatprep.subr.bf16.mxu0 %v440
  %621 = vmatpush1.bf16.msra.mxu0 %v439
  %622 = vmatprep.subr.bf16.mxu0 %v442
  %623 = vmatpush1.bf16.msra.mxu0 %v441
  %624 = vmatprep.subr.bf16.mxu0 %v444
  %625 = vmatpush1.bf16.msra.mxu0 %v443
  %626 = vmatprep.subr.bf16.mxu0 %v446
  %627 = vmatpush1.bf16.msra.mxu0 %v445
  %628 = vmatprep.subr.bf16.mxu0 %v448
  %629 = vmatpush1.bf16.msra.mxu0 %v447
  %630 = vmatprep.subr.bf16.mxu0 %v450
  %631 = vmatpush1.bf16.msra.mxu0 %v449
  %632 = vmatprep.subr.bf16.mxu0 %v452
  %633 = vmatpush1.bf16.msra.mxu0 %v451
  %634 = vmatprep.subr.bf16.mxu0 %v454
  %635 = vmatpush1.bf16.msra.mxu0 %v453
  %636 = vmatprep.subr.bf16.mxu0 %v456
  %637 = vmatpush1.bf16.msra.mxu0 %v455
  %638 = vmatprep.subr.bf16.mxu0 %v458
  %639 = vmatpush1.bf16.msra.mxu0 %v457
  %640 = vmatprep.subr.bf16.mxu0 %v460
  %641 = vmatpush1.bf16.msra.mxu0 %v459
  %642 = vmatprep.subr.bf16.mxu0 %v462
  %643 = vmatpush1.bf16.msra.mxu0 %v461
  %644 = vmatprep.subr.bf16.mxu0 %v464
  %645 = vmatpush1.bf16.msra.mxu0 %v463
  %646 = vmatprep.subr.bf16.mxu0 %v466
  %647 = vmatpush1.bf16.msra.mxu0 %v465
  %648 = vmatprep.subr.bf16.mxu0 %v468
  %649 = vmatpush1.bf16.msra.mxu0 %v467
  %650 = vmatprep.mubr.bf16.mxu0 %v148
  %651 = vmatmul.mubr.bf16.gmra.mrb[0].mxu0 %v147
  %v652 = vpop.f32.mrb[0].mxu0
  %v653 = vadd.f32 %v600, %v652
  %v654 = vpop.f32.mrb[0].mxu0
  %v655 = vadd.f32 %v602, %v654
  %v656 = vpop.f32.mrb[0].mxu0
  %v657 = vadd.f32 %v604, %v656
  %v658 = vpop.f32.mrb[0].mxu0
  %v659 = vadd.f32 %v606, %v658
  %660 = vmatprep.mubr.bf16.mxu0 %v153
  %661 = vmatmul.mubr.bf16.gmra.mrb[0].mxu0 %v152
  %v662 = vpop.f32.mrb[0].mxu0
  %v663 = vadd.f32 %v610, %v662
  %v664 = vpop.f32.mrb[0].mxu0
  %v665 = vadd.f32 %v612, %v664
  %v666 = vpop.f32.mrb[0].mxu0
  %v667 = vadd.f32 %v614, %v666
  %v668 = vpop.f32.mrb[0].mxu0
  %v669 = vadd.f32 %v616, %v668
  %670 = vdwg.mxu0
  %671 = vmatprep.subr.bf16.mxu0 %v470
  %672 = vmatpush1.bf16.msra.mxu0 %v469
  %673 = vmatprep.subr.bf16.mxu0 %v472
  %674 = vmatpush1.bf16.msra.mxu0 %v471
  %675 = vmatprep.subr.bf16.mxu0 %v474
  %676 = vmatpush1.bf16.msra.mxu0 %v473
  %677 = vmatprep.subr.bf16.mxu0 %v476
  %678 = vmatpush1.bf16.msra.mxu0 %v475
  %679 = vmatprep.subr.bf16.mxu0 %v478
  %680 = vmatpush1.bf16.msra.mxu0 %v477
  %681 = vmatprep.subr.bf16.mxu0 %v480
  %682 = vmatpush1.bf16.msra.mxu0 %v479
  %683 = vmatprep.subr.bf16.mxu0 %v482
  %684 = vmatpush1.bf16.msra.mxu0 %v481
  %685 = vmatprep.subr.bf16.mxu0 %v484
  %686 = vmatpush1.bf16.msra.mxu0 %v483
  %687 = vmatprep.subr.bf16.mxu0 0
  %688 = vmatpush1.bf16.msra.mxu0 0
  %689 = vmatprep.subr.bf16.mxu0 0
  %690 = vmatpush1.bf16.msra.mxu0 0
  %691 = vmatprep.subr.bf16.mxu0 0
  %692 = vmatpush1.bf16.msra.mxu0 0
  %693 = vmatprep.subr.bf16.mxu0 0
  %694 = vmatpush1.bf16.msra.mxu0 0
  %695 = vmatprep.subr.bf16.mxu0 0
  %696 = vmatpush1.bf16.msra.mxu0 0
  %697 = vmatprep.subr.bf16.mxu0 0
  %698 = vmatpush1.bf16.msra.mxu0 0
  %699 = vmatprep.subr.bf16.mxu0 0
  %700 = vmatpush1.bf16.msra.mxu0 0
  %701 = vmatprep.subr.bf16.mxu0 0
  %702 = vmatpush1.bf16.msra.mxu0 0
  %703 = vmatprep.mubr.bf16.mxu0 0
  %704 = vmatmul.mubr.bf16.gmra.mrb[0].mxu0 %v149
  %v705 = vpop.f32.mrb[0].mxu0
  %v706 = vadd.f32 %v653, %v705
  %v707 = vpop.f32.mrb[0].mxu0
  %v708 = vadd.f32 %v655, %v707
  %v709 = vpop.f32.mrb[0].mxu0
  %v710 = vadd.f32 %v657, %v709
  %v711 = vpop.f32.mrb[0].mxu0
  %v712 = vadd.f32 %v659, %v711
  %713 = vmatprep.mubr.bf16.mxu0 0
  %714 = vmatmul.mubr.bf16.gmra.mrb[0].mxu0 %v154
  %v715 = vpop.f32.mrb[0].mxu0
  %v716 = vadd.f32 %v663, %v715
  %v717 = vpop.f32.mrb[0].mxu0
  %v718 = vadd.f32 %v665, %v717
  %v719 = vpop.f32.mrb[0].mxu0
  %v720 = vadd.f32 %v667, %v719
  %v721 = vpop.f32.mrb[0].mxu0
  %v722 = vadd.f32 %v669, %v721
  %723 = vdwg.mxu0
  %v724 = vld [vmem:[%s2] sm:$0x3]
  %v726 = vlaneseq
  %v727 = vshrl.u32 %v726, 7
  %v728 = vsub.s32 0, %v727
  %v729 = vrot.slane %v724, %v728
  %v730 = vlaneseq
  %v731 = vshrl.u32 %v730, 7
  %v732 = vsub.s32 1, %v731
  %v733 = vrot.slane %v724, %v732
  %v736 = vmul.f32 %v706, %v729
  %v737 = vmul.f32 %v708, %v733
  %v738 = vmul.f32 %v710, %v729
  %v739 = vmul.f32 %v712, %v733
  %v740 = vmul.f32 %v716, %v729
  %v741 = vmul.f32 %v718, %v733
  %v742 = vmul.f32 %v720, %v729
  %v743 = vmul.f32 %v722, %v733
  %v744 = vld [vmem:[%s3] sm:$0x3]
  %v746 = vlaneseq
  %v747 = vshrl.u32 %v746, 7
  %v748 = vsub.s32 0, %v747
  %v749 = vrot.slane %v744, %v748
  %v750 = vlaneseq
  %v751 = vshrl.u32 %v750, 7
  %v752 = vsub.s32 1, %v751
  %v753 = vrot.slane %v744, %v752
  %v756 = vadd.f32 %v736, %v749
  %v757 = vadd.f32 %v737, %v753
  %v758 = vadd.f32 %v738, %v749
  %v759 = vadd.f32 %v739, %v753
  %v760 = vadd.f32 %v740, %v749
  %v761 = vadd.f32 %v741, %v753
  %v762 = vadd.f32 %v742, %v749
  %v763 = vadd.f32 %v743, %v753
  %vm764 = vcmp.ge.f32.partialorder %v756, 0.0
  %vm765 = vcmp.ge.f32.partialorder %v757, 0.0
  %vm766 = vcmp.ge.f32.partialorder %v758, 0.0
  %vm767 = vcmp.ge.f32.partialorder %v759, 0.0
  %vm768 = vcmp.ge.f32.partialorder %v760, 0.0
  %vm769 = vcmp.ge.f32.partialorder %v761, 0.0
  %vm770 = vcmp.ge.f32.partialorder %v762, 0.0
  %vm771 = vcmp.ge.f32.partialorder %v763, 0.0
  %v772 = vld [vmem:[%s4] sm:$0x3]
  %v774 = vlaneseq
  %v775 = vshrl.u32 %v774, 7
  %v776 = vsub.s32 0, %v775
  %v777 = vrot.slane %v772, %v776
  %v778 = vlaneseq
  %v779 = vshrl.u32 %v778, 7
  %v780 = vsub.s32 1, %v779
  %v781 = vrot.slane %v772, %v780
  %v784 = vmul.f32 %v777, %v756
  %v785 = vmul.f32 %v781, %v757
  %v786 = vmul.f32 %v777, %v758
  %v787 = vmul.f32 %v781, %v759
  %v788 = vmul.f32 %v777, %v760
  %v789 = vmul.f32 %v781, %v761
  %v790 = vmul.f32 %v777, %v762
  %v791 = vmul.f32 %v781, %v763
  %v792 = vsel %vm764, %v756, %v784
  %v793 = vsel %vm765, %v757, %v785
  %v794 = vsel %vm766, %v758, %v786
  %v795 = vsel %vm767, %v759, %v787
  %v796 = vsel %vm768, %v760, %v788
  %v797 = vsel %vm769, %v761, %v789
  %v798 = vsel %vm770, %v762, %v790
  %v799 = vsel %vm771, %v763, %v791
  %800 = vst [vmem:[%s5] sm:$0xff] %v792
  %801 = vst [vmem:[%s5 + $0x8] sm:$0xff] %v793
  %802 = vst [vmem:[%s5 + $0x10] sm:$0xff] %v794
  %803 = vst [vmem:[%s5 + $0x18] sm:$0xff] %v795
  %804 = vst [vmem:[%s5 + $0x20] sm:$0xff] %v796
  %805 = vst [vmem:[%s5 + $0x28] sm:$0xff] %v797
  %806 = vst [vmem:[%s5 + $0x30] sm:$0xff] %v798
  %807 = vst [vmem:[%s5 + $0x38] sm:$0xff] %v799
  // Predicated region
  $region22: #{decoder_group_forward.8} parent=0 // pred_check
    _
  $region23: #{decoder_group_forward.8} parent=0 // pred_check_branch
    %809 = sbr.rel (0) target = $region25
  $region24: #{decoder_group_forward.8} parent=0 // pred_region
    _
  $region25: #{decoder_group_forward.8} parent=0 // pred_fallthru
    _
  // Predicated region
  $region26: #{decoder_group_forward.8} parent=0 // pred_check
    _
  $region27: #{decoder_group_forward.8} parent=0 // pred_check_branch
    %811 = sbr.rel (0) target = $region29
  $region28: #{decoder_group_forward.8} parent=0 // pred_region
    _
  $region29: #{decoder_group_forward.8} parent=0 // pred_fallthru
    _

// kernel: decoder_group_forward.9
$region0: #{decoder_group_forward.9}
  #allocation0 [shape = 'u32[]', space=smem, size = 0x4, offset = 0x4, fixed_abs, tag = 'smem constant byte address 0x4 - core index']
  #allocation1 [shape = 'u32[144,128]{1,0:T(1,128)}', space=vmem, size = 0x12000, scoped, tag = 'internal scratch']
  %s0 = inlined_call_operand.vmem [shape: bf16[128,384], index: 0, kind: input, shape index: {}]
  %s1 = inlined_call_operand.vmem [shape: bf16[384,128], index: 1, kind: input, shape index: {}]
  %s2 = inlined_call_operand.vmem [shape: f32[1,128], index: 2, kind: input, shape index: {}]
  %s3 = inlined_call_operand.vmem [shape: f32[1,128], index: 3, kind: input, shape index: {}]
  %s4 = inlined_call_operand.vmem [shape: f32[1,128], index: 4, kind: input, shape index: {}]
  %s5 = inlined_call_operand.vmem [shape: f32[128,128], index: 5, kind: input, shape index: {}]
  %s6 = inlined_call_operand.vmem [shape: f32[128,128], index: 6, kind: output, shape index: {}]
  %s7 = sld [smem:[#allocation0]]
  $region34: #{decoder_group_forward.9} parent=0
    _
  %s9 = ssub.s32 1, %s7
  %s10 = scalar_select 0, %s9, %s7
  // Predicated region
  $region2: #{decoder_group_forward.9} parent=0 // pred_check
    _
  $region3: #{decoder_group_forward.9} parent=0 // pred_check_branch
    %12 = sbr.rel (0) target = $region5
  $region4: #{decoder_group_forward.9} parent=0 // pred_region
    _
  $region5: #{decoder_group_forward.9} parent=0 // pred_fallthru
    _
  // Predicated region
  $region6: #{decoder_group_forward.9} parent=0 // pred_check
    _
  $region7: #{decoder_group_forward.9} parent=0 // pred_check_branch
    %14 = sbr.rel (0) target = $region9
  $region8: #{decoder_group_forward.9} parent=0 // pred_region
    _
  $region9: #{decoder_group_forward.9} parent=0 // pred_fallthru
    _
  // Predicated region
  $region10: #{decoder_group_forward.9} parent=0 // pred_check
    _
  $region11: #{decoder_group_forward.9} parent=0 // pred_check_branch
    %16 = sbr.rel (0) target = $region13
  $region12: #{decoder_group_forward.9} parent=0 // pred_region
    _
  $region13: #{decoder_group_forward.9} parent=0 // pred_fallthru
    _
  // Predicated region
  $region14: #{decoder_group_forward.9} parent=0 // pred_check
    _
  $region15: #{decoder_group_forward.9} parent=0 // pred_check_branch
    %18 = sbr.rel (0) target = $region17
  $region16: #{decoder_group_forward.9} parent=0 // pred_region
    _
  $region17: #{decoder_group_forward.9} parent=0 // pred_fallthru
    _
  // Predicated region
  $region18: #{decoder_group_forward.9} parent=0 // pred_check
    _
  $region19: #{decoder_group_forward.9} parent=0 // pred_check_branch
    %20 = sbr.rel (0) target = $region21
  $region20: #{decoder_group_forward.9} parent=0 // pred_region
    _
  $region21: #{decoder_group_forward.9} parent=0 // pred_fallthru
    _
  // Predicated region
  $region22: #{decoder_group_forward.9} parent=0 // pred_check
    _
  $region23: #{decoder_group_forward.9} parent=0 // pred_check_branch
    %22 = sbr.rel (0) target = $region25
  $region24: #{decoder_group_forward.9} parent=0 // pred_region
    _
  $region25: #{decoder_group_forward.9} parent=0 // pred_fallthru
    _
  %v24 = vld [vmem:[%s0] sm:$0xff]
  %v25 = vld [vmem:[%s0 + $0x8] sm:$0xf]
  %v26 = vld [vmem:[%s0 + $0xc] sm:$0xff]
  %v27 = vld [vmem:[%s0 + $0x14] sm:$0xf]
  %v28 = vld [vmem:[%s0 + $0x18] sm:$0xff]
  %v29 = vld [vmem:[%s0 + $0x20] sm:$0xf]
  %v30 = vld [vmem:[%s0 + $0x24] sm:$0xff]
  %v31 = vld [vmem:[%s0 + $0x2c] sm:$0xf]
  %v32 = vld [vmem:[%s0 + $0x30] sm:$0xff]
  %v33 = vld [vmem:[%s0 + $0x38] sm:$0xf]
  %v34 = vld [vmem:[%s0 + $0x3c] sm:$0xff]
  %v35 = vld [vmem:[%s0 + $0x44] sm:$0xf]
  %v36 = vld [vmem:[%s0 + $0x48] sm:$0xff]
  %v37 = vld [vmem:[%s0 + $0x50] sm:$0xf]
  %v38 = vld [vmem:[%s0 + $0x54] sm:$0xff]
  %v39 = vld [vmem:[%s0 + $0x5c] sm:$0xf]
  %v40 = vld [vmem:[%s0 + $0x60] sm:$0xff]
  %v41 = vld [vmem:[%s0 + $0x68] sm:$0xf]
  %v42 = vld [vmem:[%s0 + $0x6c] sm:$0xff]
  %v43 = vld [vmem:[%s0 + $0x74] sm:$0xf]
  %v44 = vld [vmem:[%s0 + $0x78] sm:$0xff]
  %v45 = vld [vmem:[%s0 + $0x80] sm:$0xf]
  %v46 = vld [vmem:[%s0 + $0x84] sm:$0xff]
  %v47 = vld [vmem:[%s0 + $0x8c] sm:$0xf]
  %v48 = vld [vmem:[%s0 + $0x90] sm:$0xff]
  %v49 = vld [vmem:[%s0 + $0x98] sm:$0xf]
  %v50 = vld [vmem:[%s0 + $0x9c] sm:$0xff]
  %v51 = vld [vmem:[%s0 + $0xa4] sm:$0xf]
  %v52 = vld [vmem:[%s0 + $0xa8] sm:$0xff]
  %v53 = vld [vmem:[%s0 + $0xb0] sm:$0xf]
  %v54 = vld [vmem:[%s0 + $0xb4] sm:$0xff]
  %v55 = vld [vmem:[%s0 + $0xbc] sm:$0xf]
  %v56 = vld [vmem:[%s1] sm:$0xf]
  %v57 = vld [vmem:[%s1 + $0x4] sm:$0xf]
  %v58 = vld [vmem:[%s1 + $0x8] sm:$0xf]
  %v59 = vld [vmem:[%s1 + $0xc] sm:$0xf]
  %v60 = vld [vmem:[%s1 + $0x10] sm:$0xf]
  %v61 = vld [vmem:[%s1 + $0x14] sm:$0xf]
  %v62 = vld [vmem:[%s1 + $0x18] sm:$0xf]
  %v63 = vld [vmem:[%s1 + $0x1c] sm:$0xf]
  %v64 = vld [vmem:[%s1 + $0x20] sm:$0xf]
  %v65 = vld [vmem:[%s1 + $0x24] sm:$0xf]
  %v66 = vld [vmem:[%s1 + $0x28] sm:$0xf]
  %v67 = vld [vmem:[%s1 + $0x2c] sm:$0xf]
  %v68 = vld [vmem:[%s1 + $0x30] sm:$0xf]
  %v69 = vld [vmem:[%s1 + $0x34] sm:$0xf]
  %v70 = vld [vmem:[%s1 + $0x38] sm:$0xf]
  %v71 = vld [vmem:[%s1 + $0x3c] sm:$0xf]
  %v72 = vld [vmem:[%s1 + $0x40] sm:$0xf]
  %v73 = vld [vmem:[%s1 + $0x44] sm:$0xf]
  %v74 = vld [vmem:[%s1 + $0x48] sm:$0xf]
  %v75 = vld [vmem:[%s1 + $0x4c] sm:$0xf]
  %v76 = vld [vmem:[%s1 + $0x50] sm:$0xf]
  %v77 = vld [vmem:[%s1 + $0x54] sm:$0xf]
  %v78 = vld [vmem:[%s1 + $0x58] sm:$0xf]
  %v79 = vld [vmem:[%s1 + $0x5c] sm:$0xf]
  %v80 = vld [vmem:[%s1 + $0x60] sm:$0xf]
  %v81 = vld [vmem:[%s1 + $0x64] sm:$0xf]
  %v82 = vld [vmem:[%s1 + $0x68] sm:$0xf]
  %v83 = vld [vmem:[%s1 + $0x6c] sm:$0xf]
  %v84 = vld [vmem:[%s1 + $0x70] sm:$0xf]
  %v85 = vld [vmem:[%s1 + $0x74] sm:$0xf]
  %v86 = vld [vmem:[%s1 + $0x78] sm:$0xf]
  %v87 = vld [vmem:[%s1 + $0x7c] sm:$0xf]
  %v88 = vld [vmem:[%s1 + $0x80] sm:$0xf]
  %v89 = vld [vmem:[%s1 + $0x84] sm:$0xf]
  %v90 = vld [vmem:[%s1 + $0x88] sm:$0xf]
  %v91 = vld [vmem:[%s1 + $0x8c] sm:$0xf]
  %v92 = vld [vmem:[%s1 + $0x90] sm:$0xf]
  %v93 = vld [vmem:[%s1 + $0x94] sm:$0xf]
  %v94 = vld [vmem:[%s1 + $0x98] sm:$0xf]
  %v95 = vld [vmem:[%s1 + $0x9c] sm:$0xf]
  %v96 = vld [vmem:[%s1 + $0xa0] sm:$0xf]
  %v97 = vld [vmem:[%s1 + $0xa4] sm:$0xf]
  %v98 = vld [vmem:[%s1 + $0xa8] sm:$0xf]
  %v99 = vld [vmem:[%s1 + $0xac] sm:$0xf]
  %v100 = vld [vmem:[%s1 + $0xb0] sm:$0xf]
  %v101 = vld [vmem:[%s1 + $0xb4] sm:$0xf]
  %v102 = vld [vmem:[%s1 + $0xb8] sm:$0xf]
  %v103 = vld [vmem:[%s1 + $0xbc] sm:$0xf]
  %v136 = vunpack.c.l.b16 %v24
  %v137 = vunpack.c.h.b16 %v24
  %v138 = vunpack.c.l.b16 %v25
  %v139 = vunpack.c.l.b16 %v26
  %v140 = vunpack.c.h.b16 %v26
  %v141 = vunpack.c.l.b16 %v27
  %v142 = vunpack.c.l.b16 %v28
  %v143 = vunpack.c.h.b16 %v28
  %v144 = vunpack.c.l.b16 %v29
  %v145 = vunpack.c.l.b16 %v30
  %v146 = vunpack.c.h.b16 %v30
  %v147 = vunpack.c.l.b16 %v31
  %v148 = vunpack.c.l.b16 %v32
  %v149 = vunpack.c.h.b16 %v32
  %v150 = vunpack.c.l.b16 %v33
  %v151 = vunpack.c.l.b16 %v34
  %v152 = vunpack.c.h.b16 %v34
  %v153 = vunpack.c.l.b16 %v35
  %v154 = vunpack.c.l.b16 %v36
  %v155 = vunpack.c.h.b16 %v36
  %v156 = vunpack.c.l.b16 %v37
  %v157 = vunpack.c.l.b16 %v38
  %v158 = vunpack.c.h.b16 %v38
  %v159 = vunpack.c.l.b16 %v39
  %v160 = vunpack.c.l.b16 %v40
  %v161 = vunpack.c.h.b16 %v40
  %v162 = vunpack.c.l.b16 %v41
  %v163 = vunpack.c.l.b16 %v42
  %v164 = vunpack.c.h.b16 %v42
  %v165 = vunpack.c.l.b16 %v43
  %v166 = vunpack.c.l.b16 %v44
  %v167 = vunpack.c.h.b16 %v44
  %v168 = vunpack.c.l.b16 %v45
  %v169 = vunpack.c.l.b16 %v46
  %v170 = vunpack.c.h.b16 %v46
  %v171 = vunpack.c.l.b16 %v47
  %v172 = vunpack.c.l.b16 %v48
  %v173 = vunpack.c.h.b16 %v48
  %v174 = vunpack.c.l.b16 %v49
  %v175 = vunpack.c.l.b16 %v50
  %v176 = vunpack.c.h.b16 %v50
  %v177 = vunpack.c.l.b16 %v51
  %v178 = vunpack.c.l.b16 %v52
  %v179 = vunpack.c.h.b16 %v52
  %v180 = vunpack.c.l.b16 %v53
  %v181 = vunpack.c.l.b16 %v54
  %v182 = vunpack.c.h.b16 %v54
  %v183 = vunpack.c.l.b16 %v55
  %v184 = vpack.c.b16 %v139, %v136
  %v185 = vpack.c.b16 %v140, %v137
  %v186 = vpack.c.b16 %v141, %v138
  %v187 = vpack.c.b16 %v145, %v142
  %v188 = vpack.c.b16 %v146, %v143
  %v189 = vpack.c.b16 %v147, %v144
  %v190 = vpack.c.b16 %v151, %v148
  %v191 = vpack.c.b16 %v152, %v149
  %v192 = vpack.c.b16 %v153, %v150
  %v193 = vpack.c.b16 %v157, %v154
  %v194 = vpack.c.b16 %v158, %v155
  %v195 = vpack.c.b16 %v159, %v156
  %v196 = vpack.c.b16 %v163, %v160
  %v197 = vpack.c.b16 %v164, %v161
  %v198 = vpack.c.b16 %v165, %v162
  %v199 = vpack.c.b16 %v169, %v166
  %v200 = vpack.c.b16 %v170, %v167
  %v201 = vpack.c.b16 %v171, %v168
  %v202 = vpack.c.b16 %v175, %v172
  %v203 = vpack.c.b16 %v176, %v173
  %v204 = vpack.c.b16 %v177, %v174
  %v205 = vpack.c.b16 %v181, %v178
  %v206 = vpack.c.b16 %v182, %v179
  %v207 = vpack.c.b16 %v183, %v180
  %v280 = vunpack.c.l.b16 %v56
  %v281 = vunpack.c.l.b16 %v57
  %v282 = vunpack.c.l.b16 %v58
  %v283 = vunpack.c.l.b16 %v59
  %v284 = vunpack.c.l.b16 %v60
  %v285 = vunpack.c.l.b16 %v61
  %v286 = vunpack.c.l.b16 %v62
  %v287 = vunpack.c.l.b16 %v63
  %v288 = vunpack.c.l.b16 %v64
  %v289 = vunpack.c.l.b16 %v65
  %v290 = vunpack.c.l.b16 %v66
  %v291 = vunpack.c.l.b16 %v67
  %v292 = vunpack.c.l.b16 %v68
  %v293 = vunpack.c.l.b16 %v69
  %v294 = vunpack.c.l.b16 %v70
  %v295 = vunpack.c.l.b16 %v71
  %v296 = vunpack.c.l.b16 %v72
  %v297 = vunpack.c.l.b16 %v73
  %v298 = vunpack.c.l.b16 %v74
  %v299 = vunpack.c.l.b16 %v75
  %v300 = vunpack.c.l.b16 %v76
  %v301 = vunpack.c.l.b16 %v77
  %v302 = vunpack.c.l.b16 %v78
  %v303 = vunpack.c.l.b16 %v79
  %v304 = vunpack.c.l.b16 %v80
  %v305 = vunpack.c.l.b16 %v81
  %v306 = vunpack.c.l.b16 %v82
  %v307 = vunpack.c.l.b16 %v83
  %v308 = vunpack.c.l.b16 %v84
  %v309 = vunpack.c.l.b16 %v85
  %v310 = vunpack.c.l.b16 %v86
  %v311 = vunpack.c.l.b16 %v87
  %v312 = vunpack.c.l.b16 %v88
  %v313 = vunpack.c.l.b16 %v89
  %v314 = vunpack.c.l.b16 %v90
  %v315 = vunpack.c.l.b16 %v91
  %v316 = vunpack.c.l.b16 %v92
  %v317 = vunpack.c.l.b16 %v93
  %v318 = vunpack.c.l.b16 %v94
  %v319 = vunpack.c.l.b16 %v95
  %v320 = vunpack.c.l.b16 %v96
  %v321 = vunpack.c.l.b16 %v97
  %v322 = vunpack.c.l.b16 %v98
  %v323 = vunpack.c.l.b16 %v99
  %v324 = vunpack.c.l.b16 %v100
  %v325 = vunpack.c.l.b16 %v101
  %v326 = vunpack.c.l.b16 %v102
  %v327 = vunpack.c.l.b16 %v103
  %v328 = vpack.c.b16 %v281, %v280
  %v329 = vpack.c.b16 %v283, %v282
  %v330 = vpack.c.b16 %v285, %v284
  %v331 = vpack.c.b16 %v287, %v286
  %v332 = vpack.c.b16 %v289, %v288
  %v333 = vpack.c.b16 %v291, %v290
  %v334 = vpack.c.b16 %v293, %v292
  %v335 = vpack.c.b16 %v295, %v294
  %v336 = vpack.c.b16 %v297, %v296
  %v337 = vpack.c.b16 %v299, %v298
  %v338 = vpack.c.b16 %v301, %v300
  %v339 = vpack.c.b16 %v303, %v302
  %v340 = vpack.c.b16 %v305, %v304
  %v341 = vpack.c.b16 %v307, %v306
  %v342 = vpack.c.b16 %v309, %v308
  %v343 = vpack.c.b16 %v311, %v310
  %v344 = vpack.c.b16 %v313, %v312
  %v345 = vpack.c.b16 %v315, %v314
  %v346 = vpack.c.b16 %v317, %v316
  %v347 = vpack.c.b16 %v319, %v318
  %v348 = vpack.c.b16 %v321, %v320
  %v349 = vpack.c.b16 %v323, %v322
  %v350 = vpack.c.b16 %v325, %v324
  %v351 = vpack.c.b16 %v327, %v326
  %376 = vmatprep.subr.bf16.mxu0 0
  %377 = vmatpush1.bf16.msra.mxu0 %v328
  %378 = vmatprep.subr.bf16.mxu0 0
  %379 = vmatpush1.bf16.msra.mxu0 %v329
  %380 = vmatprep.subr.bf16.mxu0 0
  %381 = vmatpush1.bf16.msra.mxu0 %v330
  %382 = vmatprep.subr.bf16.mxu0 0
  %383 = vmatpush1.bf16.msra.mxu0 %v331
  %384 = vmatprep.subr.bf16.mxu0 0
  %385 = vmatpush1.bf16.msra.mxu0 %v332
  %386 = vmatprep.subr.bf16.mxu0 0
  %387 = vmatpush1.bf16.msra.mxu0 %v333
  %388 = vmatprep.subr.bf16.mxu0 0
  %389 = vmatpush1.bf16.msra.mxu0 %v334
  %390 = vmatprep.subr.bf16.mxu0 0
  %391 = vmatpush1.bf16.msra.mxu0 %v335
  %392 = vmatprep.subr.bf16.mxu0 0
  %393 = vmatpush1.bf16.msra.mxu0 %v336
  %394 = vmatprep.subr.bf16.mxu0 0
  %395 = vmatpush1.bf16.msra.mxu0 %v337
  %396 = vmatprep.subr.bf16.mxu0 0
  %397 = vmatpush1.bf16.msra.mxu0 %v338
  %398 = vmatprep.subr.bf16.mxu0 0
  %399 = vmatpush1.bf16.msra.mxu0 %v339
  %400 = vmatprep.subr.bf16.mxu0 0
  %401 = vmatpush1.bf16.msra.mxu0 %v340
  %402 = vmatprep.subr.bf16.mxu0 0
  %403 = vmatpush1.bf16.msra.mxu0 %v341
  %404 = vmatprep.subr.bf16.mxu0 0
  %405 = vmatpush1.bf16.msra.mxu0 %v342
  %406 = vmatprep.subr.bf16.mxu0 0
  %407 = vmatpush1.bf16.msra.mxu0 %v343
  %408 = vmatprep.mubr.bf16.mxu0 %v185
  %409 = vmatmul.mubr.bf16.gmra.mrb[0].mxu0 %v184
  %v410 = vpop.f32.mrb[0].mxu0
  %v411 = vadd.f32 0.0, %v410
  %v412 = vpop.f32.mrb[0].mxu0
  %v413 = vpop.f32.mrb[0].mxu0
  %v414 = vadd.f32 0.0, %v413
  %v415 = vpop.f32.mrb[0].mxu0
  %416 = vmatprep.mubr.bf16.mxu0 %v188
  %417 = vmatmul.mubr.bf16.gmra.mrb[0].mxu0 %v187
  %v418 = vpop.f32.mrb[0].mxu0
  %v419 = vadd.f32 0.0, %v418
  %v420 = vpop.f32.mrb[0].mxu0
  %v421 = vpop.f32.mrb[0].mxu0
  %v422 = vadd.f32 0.0, %v421
  %v423 = vpop.f32.mrb[0].mxu0
  %424 = vmatprep.mubr.bf16.mxu0 %v191
  %425 = vmatmul.mubr.bf16.gmra.mrb[0].mxu0 %v190
  %v426 = vpop.f32.mrb[0].mxu0
  %v427 = vadd.f32 0.0, %v426
  %v428 = vpop.f32.mrb[0].mxu0
  %v429 = vpop.f32.mrb[0].mxu0
  %v430 = vadd.f32 0.0, %v429
  %v431 = vpop.f32.mrb[0].mxu0
  %432 = vmatprep.mubr.bf16.mxu0 %v194
  %433 = vmatmul.mubr.bf16.gmra.mrb[0].mxu0 %v193
  %v434 = vpop.f32.mrb[0].mxu0
  %v435 = vadd.f32 0.0, %v434
  %v436 = vpop.f32.mrb[0].mxu0
  %v437 = vpop.f32.mrb[0].mxu0
  %v438 = vadd.f32 0.0, %v437
  %v439 = vpop.f32.mrb[0].mxu0
  %440 = vmatprep.mubr.bf16.mxu0 %v197
  %441 = vmatmul.mubr.bf16.gmra.mrb[0].mxu0 %v196
  %v442 = vpop.f32.mrb[0].mxu0
  %v443 = vadd.f32 0.0, %v442
  %v444 = vpop.f32.mrb[0].mxu0
  %v445 = vpop.f32.mrb[0].mxu0
  %v446 = vadd.f32 0.0, %v445
  %v447 = vpop.f32.mrb[0].mxu0
  %448 = vmatprep.mubr.bf16.mxu0 %v200
  %449 = vmatmul.mubr.bf16.gmra.mrb[0].mxu0 %v199
  %v450 = vpop.f32.mrb[0].mxu0
  %v451 = vadd.f32 0.0, %v450
  %v452 = vpop.f32.mrb[0].mxu0
  %v453 = vpop.f32.mrb[0].mxu0
  %v454 = vadd.f32 0.0, %v453
  %v455 = vpop.f32.mrb[0].mxu0
  %456 = vmatprep.mubr.bf16.mxu0 %v203
  %457 = vmatmul.mubr.bf16.gmra.mrb[0].mxu0 %v202
  %v458 = vpop.f32.mrb[0].mxu0
  %v459 = vadd.f32 0.0, %v458
  %v460 = vpop.f32.mrb[0].mxu0
  %v461 = vpop.f32.mrb[0].mxu0
  %v462 = vadd.f32 0.0, %v461
  %v463 = vpop.f32.mrb[0].mxu0
  %464 = vmatprep.mubr.bf16.mxu0 %v206
  %465 = vmatmul.mubr.bf16.gmra.mrb[0].mxu0 %v205
  %v466 = vpop.f32.mrb[0].mxu0
  %v467 = vadd.f32 0.0, %v466
  %v468 = vpop.f32.mrb[0].mxu0
  %v469 = vpop.f32.mrb[0].mxu0
  %v470 = vadd.f32 0.0, %v469
  %v471 = vpop.f32.mrb[0].mxu0
  %472 = vdwg.mxu0
  %473 = vmatprep.subr.bf16.mxu0 0
  %474 = vmatpush1.bf16.msra.mxu0 %v344
  %475 = vmatprep.subr.bf16.mxu0 0
  %476 = vmatpush1.bf16.msra.mxu0 %v345
  %477 = vmatprep.subr.bf16.mxu0 0
  %478 = vmatpush1.bf16.msra.mxu0 %v346
  %479 = vmatprep.subr.bf16.mxu0 0
  %480 = vmatpush1.bf16.msra.mxu0 %v347
  %481 = vmatprep.subr.bf16.mxu0 0
  %482 = vmatpush1.bf16.msra.mxu0 %v348
  %483 = vmatprep.subr.bf16.mxu0 0
  %484 = vmatpush1.bf16.msra.mxu0 %v349
  %485 = vmatprep.subr.bf16.mxu0 0
  %486 = vmatpush1.bf16.msra.mxu0 %v350
  %487 = vmatprep.subr.bf16.mxu0 0
  %488 = vmatpush1.bf16.msra.mxu0 %v351
  %489 = vmatprep.subr.bf16.mxu0 0
  %490 = vmatpush1.bf16.msra.mxu0 0
  %491 = vmatprep.subr.bf16.mxu0 0
  %492 = vmatpush1.bf16.msra.mxu0 0
  %493 = vmatprep.subr.bf16.mxu0 0
  %494 = vmatpush1.bf16.msra.mxu0 0
  %495 = vmatprep.subr.bf16.mxu0 0
  %496 = vmatpush1.bf16.msra.mxu0 0
  %497 = vmatprep.subr.bf16.mxu0 0
  %498 = vmatpush1.bf16.msra.mxu0 0
  %499 = vmatprep.subr.bf16.mxu0 0
  %500 = vmatpush1.bf16.msra.mxu0 0
  %501 = vmatprep.subr.bf16.mxu0 0
  %502 = vmatpush1.bf16.msra.mxu0 0
  %503 = vmatprep.subr.bf16.mxu0 0
  %504 = vmatpush1.bf16.msra.mxu0 0
  %505 = vmatprep.mubr.bf16.mxu0 0
  %506 = vmatmul.mubr.bf16.gmra.mrb[0].mxu0 %v186
  %v507 = vpop.f32.mrb[0].mxu0
  %v508 = vadd.f32 %v411, %v507
  %v509 = vpop.f32.mrb[0].mxu0
  %v510 = vpop.f32.mrb[0].mxu0
  %v511 = vadd.f32 %v414, %v510
  %v512 = vpop.f32.mrb[0].mxu0
  %513 = vmatprep.mubr.bf16.mxu0 0
  %514 = vmatmul.mubr.bf16.gmra.mrb[0].mxu0 %v189
  %v515 = vpop.f32.mrb[0].mxu0
  %v516 = vadd.f32 %v419, %v515
  %v517 = vpop.f32.mrb[0].mxu0
  %v518 = vpop.f32.mrb[0].mxu0
  %v519 = vadd.f32 %v422, %v518
  %v520 = vpop.f32.mrb[0].mxu0
  %521 = vmatprep.mubr.bf16.mxu0 0
  %522 = vmatmul.mubr.bf16.gmra.mrb[0].mxu0 %v192
  %v523 = vpop.f32.mrb[0].mxu0
  %v524 = vadd.f32 %v427, %v523
  %v525 = vpop.f32.mrb[0].mxu0
  %v526 = vpop.f32.mrb[0].mxu0
  %v527 = vadd.f32 %v430, %v526
  %v528 = vpop.f32.mrb[0].mxu0
  %529 = vmatprep.mubr.bf16.mxu0 0
  %530 = vmatmul.mubr.bf16.gmra.mrb[0].mxu0 %v195
  %v531 = vpop.f32.mrb[0].mxu0
  %v532 = vadd.f32 %v435, %v531
  %v533 = vpop.f32.mrb[0].mxu0
  %v534 = vpop.f32.mrb[0].mxu0
  %v535 = vadd.f32 %v438, %v534
  %v536 = vpop.f32.mrb[0].mxu0
  %537 = vmatprep.mubr.bf16.mxu0 0
  %538 = vmatmul.mubr.bf16.gmra.mrb[0].mxu0 %v198
  %v539 = vpop.f32.mrb[0].mxu0
  %v540 = vadd.f32 %v443, %v539
  %v541 = vpop.f32.mrb[0].mxu0
  %v542 = vpop.f32.mrb[0].mxu0
  %v543 = vadd.f32 %v446, %v542
  %v544 = vpop.f32.mrb[0].mxu0
  %545 = vmatprep.mubr.bf16.mxu0 0
  %546 = vmatmul.mubr.bf16.gmra.mrb[0].mxu0 %v201
  %v547 = vpop.f32.mrb[0].mxu0
  %v548 = vadd.f32 %v451, %v547
  %v549 = vpop.f32.mrb[0].mxu0
  %v550 = vpop.f32.mrb[0].mxu0
  %v551 = vadd.f32 %v454, %v550
  %v552 = vpop.f32.mrb[0].mxu0
  %553 = vmatprep.mubr.bf16.mxu0 0
  %554 = vmatmul.mubr.bf16.gmra.mrb[0].mxu0 %v204
  %v555 = vpop.f32.mrb[0].mxu0
  %v556 = vadd.f32 %v459, %v555
  %v557 = vpop.f32.mrb[0].mxu0
  %v558 = vpop.f32.mrb[0].mxu0
  %v559 = vadd.f32 %v462, %v558
  %v560 = vpop.f32.mrb[0].mxu0
  %561 = vmatprep.mubr.bf16.mxu0 0
  %562 = vmatmul.mubr.bf16.gmra.mrb[0].mxu0 %v207
  %v563 = vpop.f32.mrb[0].mxu0
  %v564 = vadd.f32 %v467, %v563
  %v565 = vpop.f32.mrb[0].mxu0
  %v566 = vpop.f32.mrb[0].mxu0
  %v567 = vadd.f32 %v470, %v566
  %v568 = vpop.f32.mrb[0].mxu0
  %569 = vdwg.mxu0
  %v570 = vld [vmem:[%s2] sm:$0x1]
  %v572 = vlaneseq
  %v573 = vshrl.u32 %v572, 7
  %v574 = vsub.s32 0, %v573
  %v575 = vrot.slane %v570, %v574
  %v577 = vmul.f32 %v508, %v575
  %v578 = vmul.f32 %v511, %v575
  %v579 = vmul.f32 %v516, %v575
  %v580 = vmul.f32 %v519, %v575
  %v581 = vmul.f32 %v524, %v575
  %v582 = vmul.f32 %v527, %v575
  %v583 = vmul.f32 %v532, %v575
  %v584 = vmul.f32 %v535, %v575
  %v585 = vmul.f32 %v540, %v575
  %v586 = vmul.f32 %v543, %v575
  %v587 = vmul.f32 %v548, %v575
  %v588 = vmul.f32 %v551, %v575
  %v589 = vmul.f32 %v556, %v575
  %v590 = vmul.f32 %v559, %v575
  %v591 = vmul.f32 %v564, %v575
  %v592 = vmul.f32 %v567, %v575
  %v593 = vld [vmem:[%s3] sm:$0x1]
  %v595 = vlaneseq
  %v596 = vshrl.u32 %v595, 7
  %v597 = vsub.s32 0, %v596
  %v598 = vrot.slane %v593, %v597
  %v600 = vadd.f32 %v577, %v598
  %v601 = vadd.f32 %v578, %v598
  %v602 = vadd.f32 %v579, %v598
  %v603 = vadd.f32 %v580, %v598
  %v604 = vadd.f32 %v581, %v598
  %v605 = vadd.f32 %v582, %v598
  %v606 = vadd.f32 %v583, %v598
  %v607 = vadd.f32 %v584, %v598
  %v608 = vadd.f32 %v585, %v598
  %v609 = vadd.f32 %v586, %v598
  %v610 = vadd.f32 %v587, %v598
  %v611 = vadd.f32 %v588, %v598
  %v612 = vadd.f32 %v589, %v598
  %v613 = vadd.f32 %v590, %v598
  %v614 = vadd.f32 %v591, %v598
  %v615 = vadd.f32 %v592, %v598
  %v616 = vld [vmem:[%s5] sm:$0xff]
  %v617 = vld [vmem:[%s5 + $0x8] sm:$0xff]
  %v618 = vld [vmem:[%s5 + $0x10] sm:$0xff]
  %v619 = vld [vmem:[%s5 + $0x18] sm:$0xff]
  %v620 = vld [vmem:[%s5 + $0x20] sm:$0xff]
  %v621 = vld [vmem:[%s5 + $0x28] sm:$0xff]
  %v622 = vld [vmem:[%s5 + $0x30] sm:$0xff]
  %v623 = vld [vmem:[%s5 + $0x38] sm:$0xff]
  %v624 = vld [vmem:[%s5 + $0x40] sm:$0xff]
  %v625 = vld [vmem:[%s5 + $0x48] sm:$0xff]
  %v626 = vld [vmem:[%s5 + $0x50] sm:$0xff]
  %v627 = vld [vmem:[%s5 + $0x58] sm:$0xff]
  %v628 = vld [vmem:[%s5 + $0x60] sm:$0xff]
  %v629 = vld [vmem:[%s5 + $0x68] sm:$0xff]
  %v630 = vld [vmem:[%s5 + $0x70] sm:$0xff]
  %v631 = vld [vmem:[%s5 + $0x78] sm:$0xff]
  %v632 = vadd.f32 %v600, %v616
  %v633 = vadd.f32 %v601, %v617
  %v634 = vadd.f32 %v602, %v618
  %v635 = vadd.f32 %v603, %v619
  %v636 = vadd.f32 %v604, %v620
  %v637 = vadd.f32 %v605, %v621
  %v638 = vadd.f32 %v606, %v622
  %v639 = vadd.f32 %v607, %v623
  %v640 = vadd.f32 %v608, %v624
  %v641 = vadd.f32 %v609, %v625
  %v642 = vadd.f32 %v610, %v626
  %v643 = vadd.f32 %v611, %v627
  %v644 = vadd.f32 %v612, %v628
  %v645 = vadd.f32 %v613, %v629
  %v646 = vadd.f32 %v614, %v630
  %v647 = vadd.f32 %v615, %v631
  %vm648 = vcmp.ge.f32.partialorder %v632, 0.0
  %vm649 = vcmp.ge.f32.partialorder %v633, 0.0
  %vm650 = vcmp.ge.f32.partialorder %v634, 0.0
  %vm651 = vcmp.ge.f32.partialorder %v635, 0.0
  %vm652 = vcmp.ge.f32.partialorder %v636, 0.0
  %vm653 = vcmp.ge.f32.partialorder %v637, 0.0
  %vm654 = vcmp.ge.f32.partialorder %v638, 0.0
  %vm655 = vcmp.ge.f32.partialorder %v639, 0.0
  %vm656 = vcmp.ge.f32.partialorder %v640, 0.0
  %vm657 = vcmp.ge.f32.partialorder %v641, 0.0
  %vm658 = vcmp.ge.f32.partialorder %v642, 0.0
  %vm659 = vcmp.ge.f32.partialorder %v643, 0.0
  %vm660 = vcmp.ge.f32.partialorder %v644, 0.0
  %vm661 = vcmp.ge.f32.partialorder %v645, 0.0
  %vm662 = vcmp.ge.f32.partialorder %v646, 0.0
  %vm663 = vcmp.ge.f32.partialorder %v647, 0.0
  %v664 = vld [vmem:[%s4] sm:$0x1]
  %v666 = vlaneseq
  %v667 = vshrl.u32 %v666, 7
  %v668 = vsub.s32 0, %v667
  %v669 = vrot.slane %v664, %v668
  %v671 = vmul.f32 %v669, %v632
  %v672 = vmul.f32 %v669, %v633
  %v673 = vmul.f32 %v669, %v634
  %v674 = vmul.f32 %v669, %v635
  %v675 = vmul.f32 %v669, %v636
  %v676 = vmul.f32 %v669, %v637
  %v677 = vmul.f32 %v669, %v638
  %v678 = vmul.f32 %v669, %v639
  %v679 = vmul.f32 %v669, %v640
  %v680 = vmul.f32 %v669, %v641
  %v681 = vmul.f32 %v669, %v642
  %v682 = vmul.f32 %v669, %v643
  %v683 = vmul.f32 %v669, %v644
  %v684 = vmul.f32 %v669, %v645
  %v685 = vmul.f32 %v669, %v646
  %v686 = vmul.f32 %v669, %v647
  %v687 = vsel %vm648, %v632, %v671
  %v688 = vsel %vm649, %v633, %v672
  %v689 = vsel %vm650, %v634, %v673
  %v690 = vsel %vm651, %v635, %v674
  %v691 = vsel %vm652, %v636, %v675
  %v692 = vsel %vm653, %v637, %v676
  %v693 = vsel %vm654, %v638, %v677
  %v694 = vsel %vm655, %v639, %v678
  %v695 = vsel %vm656, %v640, %v679
  %v696 = vsel %vm657, %v641, %v680
  %v697 = vsel %vm658, %v642, %v681
  %v698 = vsel %vm659, %v643, %v682
  %v699 = vsel %vm660, %v644, %v683
  %v700 = vsel %vm661, %v645, %v684
  %v701 = vsel %vm662, %v646, %v685
  %v702 = vsel %vm663, %v647, %v686
  %703 = vst [vmem:[%s6] sm:$0xff] %v687
  %704 = vst [vmem:[%s6 + $0x8] sm:$0xff] %v688
  %705 = vst [vmem:[%s6 + $0x10] sm:$0xff] %v689
  %706 = vst [vmem:[%s6 + $0x18] sm:$0xff] %v690
  %707 = vst [vmem:[%s6 + $0x20] sm:$0xff] %v691
  %708 = vst [vmem:[%s6 + $0x28] sm:$0xff] %v692
  %709 = vst [vmem:[%s6 + $0x30] sm:$0xff] %v693
  %710 = vst [vmem:[%s6 + $0x38] sm:$0xff] %v694
  %711 = vst [vmem:[%s6 + $0x40] sm:$0xff] %v695
  %712 = vst [vmem:[%s6 + $0x48] sm:$0xff] %v696
  %713 = vst [vmem:[%s6 + $0x50] sm:$0xff] %v697
  %714 = vst [vmem:[%s6 + $0x58] sm:$0xff] %v698
  %715 = vst [vmem:[%s6 + $0x60] sm:$0xff] %v699
  %716 = vst [vmem:[%s6 + $0x68] sm:$0xff] %v700
  %717 = vst [vmem:[%s6 + $0x70] sm:$0xff] %v701
  %718 = vst [vmem:[%s6 + $0x78] sm:$0xff] %v702
  // Predicated region
  $region26: #{decoder_group_forward.9} parent=0 // pred_check
    _
  $region27: #{decoder_group_forward.9} parent=0 // pred_check_branch
    %720 = sbr.rel (0) target = $region29
  $region28: #{decoder_group_forward.9} parent=0 // pred_region
    _
  $region29: #{decoder_group_forward.9} parent=0 // pred_fallthru
    _
  // Predicated region
  $region30: #{decoder_group_forward.9} parent=0 // pred_check
    _
  $region31: #{decoder_group_forward.9} parent=0 // pred_check_branch
    %722 = sbr.rel (0) target = $region33
  $region32: #{decoder_group_forward.9} parent=0 // pred_region
    _
  $region33: #{decoder_group_forward.9} parent=0 // pred_fallthru
    _

// kernel: decoder_group_forward.10
$region0: #{decoder_group_forward.10}
  #allocation0 [shape = 'u32[]', space=smem, size = 0x4, offset = 0x4, fixed_abs, tag = 'smem constant byte address 0x4 - core index']
  #allocation1 [shape = 'u32[144,128]{1,0:T(1,128)}', space=vmem, size = 0x12000, scoped, tag = 'internal scratch']
  %s0 = inlined_call_operand.vmem [shape: bf16[128,384], index: 0, kind: input, shape index: {}]
  %s1 = inlined_call_operand.vmem [shape: bf16[384,128], index: 1, kind: input, shape index: {}]
  %s2 = inlined_call_operand.vmem [shape: f32[1,128], index: 2, kind: input, shape index: {}]
  %s3 = inlined_call_operand.vmem [shape: f32[1,128], index: 3, kind: input, shape index: {}]
  %s4 = inlined_call_operand.vmem [shape: f32[1,128], index: 4, kind: input, shape index: {}]
  %s5 = inlined_call_operand.vmem [shape: f32[128,128], index: 5, kind: output, shape index: {}]
  %s6 = sld [smem:[#allocation0]]
  $region30: #{decoder_group_forward.10} parent=0
    _
  %s8 = ssub.s32 1, %s6
  %s9 = scalar_select 0, %s8, %s6
  // Predicated region
  $region2: #{decoder_group_forward.10} parent=0 // pred_check
    _
  $region3: #{decoder_group_forward.10} parent=0 // pred_check_branch
    %11 = sbr.rel (0) target = $region5
  $region4: #{decoder_group_forward.10} parent=0 // pred_region
    _
  $region5: #{decoder_group_forward.10} parent=0 // pred_fallthru
    _
  // Predicated region
  $region6: #{decoder_group_forward.10} parent=0 // pred_check
    _
  $region7: #{decoder_group_forward.10} parent=0 // pred_check_branch
    %13 = sbr.rel (0) target = $region9
  $region8: #{decoder_group_forward.10} parent=0 // pred_region
    _
  $region9: #{decoder_group_forward.10} parent=0 // pred_fallthru
    _
  // Predicated region
  $region10: #{decoder_group_forward.10} parent=0 // pred_check
    _
  $region11: #{decoder_group_forward.10} parent=0 // pred_check_branch
    %15 = sbr.rel (0) target = $region13
  $region12: #{decoder_group_forward.10} parent=0 // pred_region
    _
  $region13: #{decoder_group_forward.10} parent=0 // pred_fallthru
    _
  // Predicated region
  $region14: #{decoder_group_forward.10} parent=0 // pred_check
    _
  $region15: #{decoder_group_forward.10} parent=0 // pred_check_branch
    %17 = sbr.rel (0) target = $region17
  $region16: #{decoder_group_forward.10} parent=0 // pred_region
    _
  $region17: #{decoder_group_forward.10} parent=0 // pred_fallthru
    _
  // Predicated region
  $region18: #{decoder_group_forward.10} parent=0 // pred_check
    _
  $region19: #{decoder_group_forward.10} parent=0 // pred_check_branch
    %19 = sbr.rel (0) target = $region21
  $region20: #{decoder_group_forward.10} parent=0 // pred_region
    _
  $region21: #{decoder_group_forward.10} parent=0 // pred_fallthru
    _
  %v21 = vld [vmem:[%s0] sm:$0xff]
  %v22 = vld [vmem:[%s0 + $0x8] sm:$0xf]
  %v23 = vld [vmem:[%s0 + $0xc] sm:$0xff]
  %v24 = vld [vmem:[%s0 + $0x14] sm:$0xf]
  %v25 = vld [vmem:[%s0 + $0x18] sm:$0xff]
  %v26 = vld [vmem:[%s0 + $0x20] sm:$0xf]
  %v27 = vld [vmem:[%s0 + $0x24] sm:$0xff]
  %v28 = vld [vmem:[%s0 + $0x2c] sm:$0xf]
  %v29 = vld [vmem:[%s0 + $0x30] sm:$0xff]
  %v30 = vld [vmem:[%s0 + $0x38] sm:$0xf]
  %v31 = vld [vmem:[%s0 + $0x3c] sm:$0xff]
  %v32 = vld [vmem:[%s0 + $0x44] sm:$0xf]
  %v33 = vld [vmem:[%s0 + $0x48] sm:$0xff]
  %v34 = vld [vmem:[%s0 + $0x50] sm:$0xf]
  %v35 = vld [vmem:[%s0 + $0x54] sm:$0xff]
  %v36 = vld [vmem:[%s0 + $0x5c] sm:$0xf]
  %v37 = vld [vmem:[%s0 + $0x60] sm:$0xff]
  %v38 = vld [vmem:[%s0 + $0x68] sm:$0xf]
  %v39 = vld [vmem:[%s0 + $0x6c] sm:$0xff]
  %v40 = vld [vmem:[%s0 + $0x74] sm:$0xf]
  %v41 = vld [vmem:[%s0 + $0x78] sm:$0xff]
  %v42 = vld [vmem:[%s0 + $0x80] sm:$0xf]
  %v43 = vld [vmem:[%s0 + $0x84] sm:$0xff]
  %v44 = vld [vmem:[%s0 + $0x8c] sm:$0xf]
  %v45 = vld [vmem:[%s0 + $0x90] sm:$0xff]
  %v46 = vld [vmem:[%s0 + $0x98] sm:$0xf]
  %v47 = vld [vmem:[%s0 + $0x9c] sm:$0xff]
  %v48 = vld [vmem:[%s0 + $0xa4] sm:$0xf]
  %v49 = vld [vmem:[%s0 + $0xa8] sm:$0xff]
  %v50 = vld [vmem:[%s0 + $0xb0] sm:$0xf]
  %v51 = vld [vmem:[%s0 + $0xb4] sm:$0xff]
  %v52 = vld [vmem:[%s0 + $0xbc] sm:$0xf]
  %v53 = vld [vmem:[%s1] sm:$0xf]
  %v54 = vld [vmem:[%s1 + $0x4] sm:$0xf]
  %v55 = vld [vmem:[%s1 + $0x8] sm:$0xf]
  %v56 = vld [vmem:[%s1 + $0xc] sm:$0xf]
  %v57 = vld [vmem:[%s1 + $0x10] sm:$0xf]
  %v58 = vld [vmem:[%s1 + $0x14] sm:$0xf]
  %v59 = vld [vmem:[%s1 + $0x18] sm:$0xf]
  %v60 = vld [vmem:[%s1 + $0x1c] sm:$0xf]
  %v61 = vld [vmem:[%s1 + $0x20] sm:$0xf]
  %v62 = vld [vmem:[%s1 + $0x24] sm:$0xf]
  %v63 = vld [vmem:[%s1 + $0x28] sm:$0xf]
  %v64 = vld [vmem:[%s1 + $0x2c] sm:$0xf]
  %v65 = vld [vmem:[%s1 + $0x30] sm:$0xf]
  %v66 = vld [vmem:[%s1 + $0x34] sm:$0xf]
  %v67 = vld [vmem:[%s1 + $0x38] sm:$0xf]
  %v68 = vld [vmem:[%s1 + $0x3c] sm:$0xf]
  %v69 = vld [vmem:[%s1 + $0x40] sm:$0xf]
  %v70 = vld [vmem:[%s1 + $0x44] sm:$0xf]
  %v71 = vld [vmem:[%s1 + $0x48] sm:$0xf]
  %v72 = vld [vmem:[%s1 + $0x4c] sm:$0xf]
  %v73 = vld [vmem:[%s1 + $0x50] sm:$0xf]
  %v74 = vld [vmem:[%s1 + $0x54] sm:$0xf]
  %v75 = vld [vmem:[%s1 + $0x58] sm:$0xf]
  %v76 = vld [vmem:[%s1 + $0x5c] sm:$0xf]
  %v77 = vld [vmem:[%s1 + $0x60] sm:$0xf]
  %v78 = vld [vmem:[%s1 + $0x64] sm:$0xf]
  %v79 = vld [vmem:[%s1 + $0x68] sm:$0xf]
  %v80 = vld [vmem:[%s1 + $0x6c] sm:$0xf]
  %v81 = vld [vmem:[%s1 + $0x70] sm:$0xf]
  %v82 = vld [vmem:[%s1 + $0x74] sm:$0xf]
  %v83 = vld [vmem:[%s1 + $0x78] sm:$0xf]
  %v84 = vld [vmem:[%s1 + $0x7c] sm:$0xf]
  %v85 = vld [vmem:[%s1 + $0x80] sm:$0xf]
  %v86 = vld [vmem:[%s1 + $0x84] sm:$0xf]
  %v87 = vld [vmem:[%s1 + $0x88] sm:$0xf]
  %v88 = vld [vmem:[%s1 + $0x8c] sm:$0xf]
  %v89 = vld [vmem:[%s1 + $0x90] sm:$0xf]
  %v90 = vld [vmem:[%s1 + $0x94] sm:$0xf]
  %v91 = vld [vmem:[%s1 + $0x98] sm:$0xf]
  %v92 = vld [vmem:[%s1 + $0x9c] sm:$0xf]
  %v93 = vld [vmem:[%s1 + $0xa0] sm:$0xf]
  %v94 = vld [vmem:[%s1 + $0xa4] sm:$0xf]
  %v95 = vld [vmem:[%s1 + $0xa8] sm:$0xf]
  %v96 = vld [vmem:[%s1 + $0xac] sm:$0xf]
  %v97 = vld [vmem:[%s1 + $0xb0] sm:$0xf]
  %v98 = vld [vmem:[%s1 + $0xb4] sm:$0xf]
  %v99 = vld [vmem:[%s1 + $0xb8] sm:$0xf]
  %v100 = vld [vmem:[%s1 + $0xbc] sm:$0xf]
  %v133 = vunpack.c.l.b16 %v21
  %v134 = vunpack.c.h.b16 %v21
  %v135 = vunpack.c.l.b16 %v22
  %v136 = vunpack.c.l.b16 %v23
  %v137 = vunpack.c.h.b16 %v23
  %v138 = vunpack.c.l.b16 %v24
  %v139 = vunpack.c.l.b16 %v25
  %v140 = vunpack.c.h.b16 %v25
  %v141 = vunpack.c.l.b16 %v26
  %v142 = vunpack.c.l.b16 %v27
  %v143 = vunpack.c.h.b16 %v27
  %v144 = vunpack.c.l.b16 %v28
  %v145 = vunpack.c.l.b16 %v29
  %v146 = vunpack.c.h.b16 %v29
  %v147 = vunpack.c.l.b16 %v30
  %v148 = vunpack.c.l.b16 %v31
  %v149 = vunpack.c.h.b16 %v31
  %v150 = vunpack.c.l.b16 %v32
  %v151 = vunpack.c.l.b16 %v33
  %v152 = vunpack.c.h.b16 %v33
  %v153 = vunpack.c.l.b16 %v34
  %v154 = vunpack.c.l.b16 %v35
  %v155 = vunpack.c.h.b16 %v35
  %v156 = vunpack.c.l.b16 %v36
  %v157 = vunpack.c.l.b16 %v37
  %v158 = vunpack.c.h.b16 %v37
  %v159 = vunpack.c.l.b16 %v38
  %v160 = vunpack.c.l.b16 %v39
  %v161 = vunpack.c.h.b16 %v39
  %v162 = vunpack.c.l.b16 %v40
  %v163 = vunpack.c.l.b16 %v41
  %v164 = vunpack.c.h.b16 %v41
  %v165 = vunpack.c.l.b16 %v42
  %v166 = vunpack.c.l.b16 %v43
  %v167 = vunpack.c.h.b16 %v43
  %v168 = vunpack.c.l.b16 %v44
  %v169 = vunpack.c.l.b16 %v45
  %v170 = vunpack.c.h.b16 %v45
  %v171 = vunpack.c.l.b16 %v46
  %v172 = vunpack.c.l.b16 %v47
  %v173 = vunpack.c.h.b16 %v47
  %v174 = vunpack.c.l.b16 %v48
  %v175 = vunpack.c.l.b16 %v49
  %v176 = vunpack.c.h.b16 %v49
  %v177 = vunpack.c.l.b16 %v50
  %v178 = vunpack.c.l.b16 %v51
  %v179 = vunpack.c.h.b16 %v51
  %v180 = vunpack.c.l.b16 %v52
  %v181 = vpack.c.b16 %v136, %v133
  %v182 = vpack.c.b16 %v137, %v134
  %v183 = vpack.c.b16 %v138, %v135
  %v184 = vpack.c.b16 %v142, %v139
  %v185 = vpack.c.b16 %v143, %v140
  %v186 = vpack.c.b16 %v144, %v141
  %v187 = vpack.c.b16 %v148, %v145
  %v188 = vpack.c.b16 %v149, %v146
  %v189 = vpack.c.b16 %v150, %v147
  %v190 = vpack.c.b16 %v154, %v151
  %v191 = vpack.c.b16 %v155, %v152
  %v192 = vpack.c.b16 %v156, %v153
  %v193 = vpack.c.b16 %v160, %v157
  %v194 = vpack.c.b16 %v161, %v158
  %v195 = vpack.c.b16 %v162, %v159
  %v196 = vpack.c.b16 %v166, %v163
  %v197 = vpack.c.b16 %v167, %v164
  %v198 = vpack.c.b16 %v168, %v165
  %v199 = vpack.c.b16 %v172, %v169
  %v200 = vpack.c.b16 %v173, %v170
  %v201 = vpack.c.b16 %v174, %v171
  %v202 = vpack.c.b16 %v178, %v175
  %v203 = vpack.c.b16 %v179, %v176
  %v204 = vpack.c.b16 %v180, %v177
  %v277 = vunpack.c.l.b16 %v53
  %v278 = vunpack.c.l.b16 %v54
  %v279 = vunpack.c.l.b16 %v55
  %v280 = vunpack.c.l.b16 %v56
  %v281 = vunpack.c.l.b16 %v57
  %v282 = vunpack.c.l.b16 %v58
  %v283 = vunpack.c.l.b16 %v59
  %v284 = vunpack.c.l.b16 %v60
  %v285 = vunpack.c.l.b16 %v61
  %v286 = vunpack.c.l.b16 %v62
  %v287 = vunpack.c.l.b16 %v63
  %v288 = vunpack.c.l.b16 %v64
  %v289 = vunpack.c.l.b16 %v65
  %v290 = vunpack.c.l.b16 %v66
  %v291 = vunpack.c.l.b16 %v67
  %v292 = vunpack.c.l.b16 %v68
  %v293 = vunpack.c.l.b16 %v69
  %v294 = vunpack.c.l.b16 %v70
  %v295 = vunpack.c.l.b16 %v71
  %v296 = vunpack.c.l.b16 %v72
  %v297 = vunpack.c.l.b16 %v73
  %v298 = vunpack.c.l.b16 %v74
  %v299 = vunpack.c.l.b16 %v75
  %v300 = vunpack.c.l.b16 %v76
  %v301 = vunpack.c.l.b16 %v77
  %v302 = vunpack.c.l.b16 %v78
  %v303 = vunpack.c.l.b16 %v79
  %v304 = vunpack.c.l.b16 %v80
  %v305 = vunpack.c.l.b16 %v81
  %v306 = vunpack.c.l.b16 %v82
  %v307 = vunpack.c.l.b16 %v83
  %v308 = vunpack.c.l.b16 %v84
  %v309 = vunpack.c.l.b16 %v85
  %v310 = vunpack.c.l.b16 %v86
  %v311 = vunpack.c.l.b16 %v87
  %v312 = vunpack.c.l.b16 %v88
  %v313 = vunpack.c.l.b16 %v89
  %v314 = vunpack.c.l.b16 %v90
  %v315 = vunpack.c.l.b16 %v91
  %v316 = vunpack.c.l.b16 %v92
  %v317 = vunpack.c.l.b16 %v93
  %v318 = vunpack.c.l.b16 %v94
  %v319 = vunpack.c.l.b16 %v95
  %v320 = vunpack.c.l.b16 %v96
  %v321 = vunpack.c.l.b16 %v97
  %v322 = vunpack.c.l.b16 %v98
  %v323 = vunpack.c.l.b16 %v99
  %v324 = vunpack.c.l.b16 %v100
  %v325 = vpack.c.b16 %v278, %v277
  %v326 = vpack.c.b16 %v280, %v279
  %v327 = vpack.c.b16 %v282, %v281
  %v328 = vpack.c.b16 %v284, %v283
  %v329 = vpack.c.b16 %v286, %v285
  %v330 = vpack.c.b16 %v288, %v287
  %v331 = vpack.c.b16 %v290, %v289
  %v332 = vpack.c.b16 %v292, %v291
  %v333 = vpack.c.b16 %v294, %v293
  %v334 = vpack.c.b16 %v296, %v295
  %v335 = vpack.c.b16 %v298, %v297
  %v336 = vpack.c.b16 %v300, %v299
  %v337 = vpack.c.b16 %v302, %v301
  %v338 = vpack.c.b16 %v304, %v303
  %v339 = vpack.c.b16 %v306, %v305
  %v340 = vpack.c.b16 %v308, %v307
  %v341 = vpack.c.b16 %v310, %v309
  %v342 = vpack.c.b16 %v312, %v311
  %v343 = vpack.c.b16 %v314, %v313
  %v344 = vpack.c.b16 %v316, %v315
  %v345 = vpack.c.b16 %v318, %v317
  %v346 = vpack.c.b16 %v320, %v319
  %v347 = vpack.c.b16 %v322, %v321
  %v348 = vpack.c.b16 %v324, %v323
  %373 = vmatprep.subr.bf16.mxu0 0
  %374 = vmatpush1.bf16.msra.mxu0 %v325
  %375 = vmatprep.subr.bf16.mxu0 0
  %376 = vmatpush1.bf16.msra.mxu0 %v326
  %377 = vmatprep.subr.bf16.mxu0 0
  %378 = vmatpush1.bf16.msra.mxu0 %v327
  %379 = vmatprep.subr.bf16.mxu0 0
  %380 = vmatpush1.bf16.msra.mxu0 %v328
  %381 = vmatprep.subr.bf16.mxu0 0
  %382 = vmatpush1.bf16.msra.mxu0 %v329
  %383 = vmatprep.subr.bf16.mxu0 0
  %384 = vmatpush1.bf16.msra.mxu0 %v330
  %385 = vmatprep.subr.bf16.mxu0 0
  %386 = vmatpush1.bf16.msra.mxu0 %v331
  %387 = vmatprep.subr.bf16.mxu0 0
  %388 = vmatpush1.bf16.msra.mxu0 %v332
  %389 = vmatprep.subr.bf16.mxu0 0
  %390 = vmatpush1.bf16.msra.mxu0 %v333
  %391 = vmatprep.subr.bf16.mxu0 0
  %392 = vmatpush1.bf16.msra.mxu0 %v334
  %393 = vmatprep.subr.bf16.mxu0 0
  %394 = vmatpush1.bf16.msra.mxu0 %v335
  %395 = vmatprep.subr.bf16.mxu0 0
  %396 = vmatpush1.bf16.msra.mxu0 %v336
  %397 = vmatprep.subr.bf16.mxu0 0
  %398 = vmatpush1.bf16.msra.mxu0 %v337
  %399 = vmatprep.subr.bf16.mxu0 0
  %400 = vmatpush1.bf16.msra.mxu0 %v338
  %401 = vmatprep.subr.bf16.mxu0 0
  %402 = vmatpush1.bf16.msra.mxu0 %v339
  %403 = vmatprep.subr.bf16.mxu0 0
  %404 = vmatpush1.bf16.msra.mxu0 %v340
  %405 = vmatprep.mubr.bf16.mxu0 %v182
  %406 = vmatmul.mubr.bf16.gmra.mrb[0].mxu0 %v181
  %v407 = vpop.f32.mrb[0].mxu0
  %v408 = vadd.f32 0.0, %v407
  %v409 = vpop.f32.mrb[0].mxu0
  %v410 = vpop.f32.mrb[0].mxu0
  %v411 = vadd.f32 0.0, %v410
  %v412 = vpop.f32.mrb[0].mxu0
  %413 = vmatprep.mubr.bf16.mxu0 %v185
  %414 = vmatmul.mubr.bf16.gmra.mrb[0].mxu0 %v184
  %v415 = vpop.f32.mrb[0].mxu0
  %v416 = vadd.f32 0.0, %v415
  %v417 = vpop.f32.mrb[0].mxu0
  %v418 = vpop.f32.mrb[0].mxu0
  %v419 = vadd.f32 0.0, %v418
  %v420 = vpop.f32.mrb[0].mxu0
  %421 = vmatprep.mubr.bf16.mxu0 %v188
  %422 = vmatmul.mubr.bf16.gmra.mrb[0].mxu0 %v187
  %v423 = vpop.f32.mrb[0].mxu0
  %v424 = vadd.f32 0.0, %v423
  %v425 = vpop.f32.mrb[0].mxu0
  %v426 = vpop.f32.mrb[0].mxu0
  %v427 = vadd.f32 0.0, %v426
  %v428 = vpop.f32.mrb[0].mxu0
  %429 = vmatprep.mubr.bf16.mxu0 %v191
  %430 = vmatmul.mubr.bf16.gmra.mrb[0].mxu0 %v190
  %v431 = vpop.f32.mrb[0].mxu0
  %v432 = vadd.f32 0.0, %v431
  %v433 = vpop.f32.mrb[0].mxu0
  %v434 = vpop.f32.mrb[0].mxu0
  %v435 = vadd.f32 0.0, %v434
  %v436 = vpop.f32.mrb[0].mxu0
  %437 = vmatprep.mubr.bf16.mxu0 %v194
  %438 = vmatmul.mubr.bf16.gmra.mrb[0].mxu0 %v193
  %v439 = vpop.f32.mrb[0].mxu0
  %v440 = vadd.f32 0.0, %v439
  %v441 = vpop.f32.mrb[0].mxu0
  %v442 = vpop.f32.mrb[0].mxu0
  %v443 = vadd.f32 0.0, %v442
  %v444 = vpop.f32.mrb[0].mxu0
  %445 = vmatprep.mubr.bf16.mxu0 %v197
  %446 = vmatmul.mubr.bf16.gmra.mrb[0].mxu0 %v196
  %v447 = vpop.f32.mrb[0].mxu0
  %v448 = vadd.f32 0.0, %v447
  %v449 = vpop.f32.mrb[0].mxu0
  %v450 = vpop.f32.mrb[0].mxu0
  %v451 = vadd.f32 0.0, %v450
  %v452 = vpop.f32.mrb[0].mxu0
  %453 = vmatprep.mubr.bf16.mxu0 %v200
  %454 = vmatmul.mubr.bf16.gmra.mrb[0].mxu0 %v199
  %v455 = vpop.f32.mrb[0].mxu0
  %v456 = vadd.f32 0.0, %v455
  %v457 = vpop.f32.mrb[0].mxu0
  %v458 = vpop.f32.mrb[0].mxu0
  %v459 = vadd.f32 0.0, %v458
  %v460 = vpop.f32.mrb[0].mxu0
  %461 = vmatprep.mubr.bf16.mxu0 %v203
  %462 = vmatmul.mubr.bf16.gmra.mrb[0].mxu0 %v202
  %v463 = vpop.f32.mrb[0].mxu0
  %v464 = vadd.f32 0.0, %v463
  %v465 = vpop.f32.mrb[0].mxu0
  %v466 = vpop.f32.mrb[0].mxu0
  %v467 = vadd.f32 0.0, %v466
  %v468 = vpop.f32.mrb[0].mxu0
  %469 = vdwg.mxu0
  %470 = vmatprep.subr.bf16.mxu0 0
  %471 = vmatpush1.bf16.msra.mxu0 %v341
  %472 = vmatprep.subr.bf16.mxu0 0
  %473 = vmatpush1.bf16.msra.mxu0 %v342
  %474 = vmatprep.subr.bf16.mxu0 0
  %475 = vmatpush1.bf16.msra.mxu0 %v343
  %476 = vmatprep.subr.bf16.mxu0 0
  %477 = vmatpush1.bf16.msra.mxu0 %v344
  %478 = vmatprep.subr.bf16.mxu0 0
  %479 = vmatpush1.bf16.msra.mxu0 %v345
  %480 = vmatprep.subr.bf16.mxu0 0
  %481 = vmatpush1.bf16.msra.mxu0 %v346
  %482 = vmatprep.subr.bf16.mxu0 0
  %483 = vmatpush1.bf16.msra.mxu0 %v347
  %484 = vmatprep.subr.bf16.mxu0 0
  %485 = vmatpush1.bf16.msra.mxu0 %v348
  %486 = vmatprep.subr.bf16.mxu0 0
  %487 = vmatpush1.bf16.msra.mxu0 0
  %488 = vmatprep.subr.bf16.mxu0 0
  %489 = vmatpush1.bf16.msra.mxu0 0
  %490 = vmatprep.subr.bf16.mxu0 0
  %491 = vmatpush1.bf16.msra.mxu0 0
  %492 = vmatprep.subr.bf16.mxu0 0
  %493 = vmatpush1.bf16.msra.mxu0 0
  %494 = vmatprep.subr.bf16.mxu0 0
  %495 = vmatpush1.bf16.msra.mxu0 0
  %496 = vmatprep.subr.bf16.mxu0 0
  %497 = vmatpush1.bf16.msra.mxu0 0
  %498 = vmatprep.subr.bf16.mxu0 0
  %499 = vmatpush1.bf16.msra.mxu0 0
  %500 = vmatprep.subr.bf16.mxu0 0
  %501 = vmatpush1.bf16.msra.mxu0 0
  %502 = vmatprep.mubr.bf16.mxu0 0
  %503 = vmatmul.mubr.bf16.gmra.mrb[0].mxu0 %v183
  %v504 = vpop.f32.mrb[0].mxu0
  %v505 = vadd.f32 %v408, %v504
  %v506 = vpop.f32.mrb[0].mxu0
  %v507 = vpop.f32.mrb[0].mxu0
  %v508 = vadd.f32 %v411, %v507
  %v509 = vpop.f32.mrb[0].mxu0
  %510 = vmatprep.mubr.bf16.mxu0 0
  %511 = vmatmul.mubr.bf16.gmra.mrb[0].mxu0 %v186
  %v512 = vpop.f32.mrb[0].mxu0
  %v513 = vadd.f32 %v416, %v512
  %v514 = vpop.f32.mrb[0].mxu0
  %v515 = vpop.f32.mrb[0].mxu0
  %v516 = vadd.f32 %v419, %v515
  %v517 = vpop.f32.mrb[0].mxu0
  %518 = vmatprep.mubr.bf16.mxu0 0
  %519 = vmatmul.mubr.bf16.gmra.mrb[0].mxu0 %v189
  %v520 = vpop.f32.mrb[0].mxu0
  %v521 = vadd.f32 %v424, %v520
  %v522 = vpop.f32.mrb[0].mxu0
  %v523 = vpop.f32.mrb[0].mxu0
  %v524 = vadd.f32 %v427, %v523
  %v525 = vpop.f32.mrb[0].mxu0
  %526 = vmatprep.mubr.bf16.mxu0 0
  %527 = vmatmul.mubr.bf16.gmra.mrb[0].mxu0 %v192
  %v528 = vpop.f32.mrb[0].mxu0
  %v529 = vadd.f32 %v432, %v528
  %v530 = vpop.f32.mrb[0].mxu0
  %v531 = vpop.f32.mrb[0].mxu0
  %v532 = vadd.f32 %v435, %v531
  %v533 = vpop.f32.mrb[0].mxu0
  %534 = vmatprep.mubr.bf16.mxu0 0
  %535 = vmatmul.mubr.bf16.gmra.mrb[0].mxu0 %v195
  %v536 = vpop.f32.mrb[0].mxu0
  %v537 = vadd.f32 %v440, %v536
  %v538 = vpop.f32.mrb[0].mxu0
  %v539 = vpop.f32.mrb[0].mxu0
  %v540 = vadd.f32 %v443, %v539
  %v541 = vpop.f32.mrb[0].mxu0
  %542 = vmatprep.mubr.bf16.mxu0 0
  %543 = vmatmul.mubr.bf16.gmra.mrb[0].mxu0 %v198
  %v544 = vpop.f32.mrb[0].mxu0
  %v545 = vadd.f32 %v448, %v544
  %v546 = vpop.f32.mrb[0].mxu0
  %v547 = vpop.f32.mrb[0].mxu0
  %v548 = vadd.f32 %v451, %v547
  %v549 = vpop.f32.mrb[0].mxu0
  %550 = vmatprep.mubr.bf16.mxu0 0
  %551 = vmatmul.mubr.bf16.gmra.mrb[0].mxu0 %v201
  %v552 = vpop.f32.mrb[0].mxu0
  %v553 = vadd.f32 %v456, %v552
  %v554 = vpop.f32.mrb[0].mxu0
  %v555 = vpop.f32.mrb[0].mxu0
  %v556 = vadd.f32 %v459, %v555
  %v557 = vpop.f32.mrb[0].mxu0
  %558 = vmatprep.mubr.bf16.mxu0 0
  %559 = vmatmul.mubr.bf16.gmra.mrb[0].mxu0 %v204
  %v560 = vpop.f32.mrb[0].mxu0
  %v561 = vadd.f32 %v464, %v560
  %v562 = vpop.f32.mrb[0].mxu0
  %v563 = vpop.f32.mrb[0].mxu0
  %v564 = vadd.f32 %v467, %v563
  %v565 = vpop.f32.mrb[0].mxu0
  %566 = vdwg.mxu0
  %v567 = vld [vmem:[%s2] sm:$0x1]
  %v569 = vlaneseq
  %v570 = vshrl.u32 %v569, 7
  %v571 = vsub.s32 0, %v570
  %v572 = vrot.slane %v567, %v571
  %v574 = vmul.f32 %v505, %v572
  %v575 = vmul.f32 %v508, %v572
  %v576 = vmul.f32 %v513, %v572
  %v577 = vmul.f32 %v516, %v572
  %v578 = vmul.f32 %v521, %v572
  %v579 = vmul.f32 %v524, %v572
  %v580 = vmul.f32 %v529, %v572
  %v581 = vmul.f32 %v532, %v572
  %v582 = vmul.f32 %v537, %v572
  %v583 = vmul.f32 %v540, %v572
  %v584 = vmul.f32 %v545, %v572
  %v585 = vmul.f32 %v548, %v572
  %v586 = vmul.f32 %v553, %v572
  %v587 = vmul.f32 %v556, %v572
  %v588 = vmul.f32 %v561, %v572
  %v589 = vmul.f32 %v564, %v572
  %v590 = vld [vmem:[%s3] sm:$0x1]
  %v592 = vlaneseq
  %v593 = vshrl.u32 %v592, 7
  %v594 = vsub.s32 0, %v593
  %v595 = vrot.slane %v590, %v594
  %v597 = vadd.f32 %v574, %v595
  %v598 = vadd.f32 %v575, %v595
  %v599 = vadd.f32 %v576, %v595
  %v600 = vadd.f32 %v577, %v595
  %v601 = vadd.f32 %v578, %v595
  %v602 = vadd.f32 %v579, %v595
  %v603 = vadd.f32 %v580, %v595
  %v604 = vadd.f32 %v581, %v595
  %v605 = vadd.f32 %v582, %v595
  %v606 = vadd.f32 %v583, %v595
  %v607 = vadd.f32 %v584, %v595
  %v608 = vadd.f32 %v585, %v595
  %v609 = vadd.f32 %v586, %v595
  %v610 = vadd.f32 %v587, %v595
  %v611 = vadd.f32 %v588, %v595
  %v612 = vadd.f32 %v589, %v595
  %vm613 = vcmp.ge.f32.partialorder %v597, 0.0
  %vm614 = vcmp.ge.f32.partialorder %v598, 0.0
  %vm615 = vcmp.ge.f32.partialorder %v599, 0.0
  %vm616 = vcmp.ge.f32.partialorder %v600, 0.0
  %vm617 = vcmp.ge.f32.partialorder %v601, 0.0
  %vm618 = vcmp.ge.f32.partialorder %v602, 0.0
  %vm619 = vcmp.ge.f32.partialorder %v603, 0.0
  %vm620 = vcmp.ge.f32.partialorder %v604, 0.0
  %vm621 = vcmp.ge.f32.partialorder %v605, 0.0
  %vm622 = vcmp.ge.f32.partialorder %v606, 0.0
  %vm623 = vcmp.ge.f32.partialorder %v607, 0.0
  %vm624 = vcmp.ge.f32.partialorder %v608, 0.0
  %vm625 = vcmp.ge.f32.partialorder %v609, 0.0
  %vm626 = vcmp.ge.f32.partialorder %v610, 0.0
  %vm627 = vcmp.ge.f32.partialorder %v611, 0.0
  %vm628 = vcmp.ge.f32.partialorder %v612, 0.0
  %v629 = vld [vmem:[%s4] sm:$0x1]
  %v631 = vlaneseq
  %v632 = vshrl.u32 %v631, 7
  %v633 = vsub.s32 0, %v632
  %v634 = vrot.slane %v629, %v633
  %v636 = vmul.f32 %v634, %v597
  %v637 = vmul.f32 %v634, %v598
  %v638 = vmul.f32 %v634, %v599
  %v639 = vmul.f32 %v634, %v600
  %v640 = vmul.f32 %v634, %v601
  %v641 = vmul.f32 %v634, %v602
  %v642 = vmul.f32 %v634, %v603
  %v643 = vmul.f32 %v634, %v604
  %v644 = vmul.f32 %v634, %v605
  %v645 = vmul.f32 %v634, %v606
  %v646 = vmul.f32 %v634, %v607
  %v647 = vmul.f32 %v634, %v608
  %v648 = vmul.f32 %v634, %v609
  %v649 = vmul.f32 %v634, %v610
  %v650 = vmul.f32 %v634, %v611
  %v651 = vmul.f32 %v634, %v612
  %v652 = vsel %vm613, %v597, %v636
  %v653 = vsel %vm614, %v598, %v637
  %v654 = vsel %vm615, %v599, %v638
  %v655 = vsel %vm616, %v600, %v639
  %v656 = vsel %vm617, %v601, %v640
  %v657 = vsel %vm618, %v602, %v641
  %v658 = vsel %vm619, %v603, %v642
  %v659 = vsel %vm620, %v604, %v643
  %v660 = vsel %vm621, %v605, %v644
  %v661 = vsel %vm622, %v606, %v645
  %v662 = vsel %vm623, %v607, %v646
  %v663 = vsel %vm624, %v608, %v647
  %v664 = vsel %vm625, %v609, %v648
  %v665 = vsel %vm626, %v610, %v649
  %v666 = vsel %vm627, %v611, %v650
  %v667 = vsel %vm628, %v612, %v651
  %668 = vst [vmem:[%s5] sm:$0xff] %v652
  %669 = vst [vmem:[%s5 + $0x8] sm:$0xff] %v653
  %670 = vst [vmem:[%s5 + $0x10] sm:$0xff] %v654
  %671 = vst [vmem:[%s5 + $0x18] sm:$0xff] %v655
  %672 = vst [vmem:[%s5 + $0x20] sm:$0xff] %v656
  %673 = vst [vmem:[%s5 + $0x28] sm:$0xff] %v657
  %674 = vst [vmem:[%s5 + $0x30] sm:$0xff] %v658
  %675 = vst [vmem:[%s5 + $0x38] sm:$0xff] %v659
  %676 = vst [vmem:[%s5 + $0x40] sm:$0xff] %v660
  %677 = vst [vmem:[%s5 + $0x48] sm:$0xff] %v661
  %678 = vst [vmem:[%s5 + $0x50] sm:$0xff] %v662
  %679 = vst [vmem:[%s5 + $0x58] sm:$0xff] %v663
  %680 = vst [vmem:[%s5 + $0x60] sm:$0xff] %v664
  %681 = vst [vmem:[%s5 + $0x68] sm:$0xff] %v665
  %682 = vst [vmem:[%s5 + $0x70] sm:$0xff] %v666
  %683 = vst [vmem:[%s5 + $0x78] sm:$0xff] %v667
  // Predicated region
  $region22: #{decoder_group_forward.10} parent=0 // pred_check
    _
  $region23: #{decoder_group_forward.10} parent=0 // pred_check_branch
    %685 = sbr.rel (0) target = $region25
  $region24: #{decoder_group_forward.10} parent=0 // pred_region
    _
  $region25: #{decoder_group_forward.10} parent=0 // pred_fallthru
    _
  // Predicated region
  $region26: #{decoder_group_forward.10} parent=0 // pred_check
    _
  $region27: #{decoder_group_forward.10} parent=0 // pred_check_branch
    %687 = sbr.rel (0) target = $region29
  $region28: #{decoder_group_forward.10} parent=0 // pred_region
    _
  $region29: #{decoder_group_forward.10} parent=0 // pred_fallthru
    _

// kernel: decoder_group_forward.11
$region0: #{decoder_group_forward.11}
  #allocation0 [shape = 'u32[]', space=smem, size = 0x4, offset = 0x4, fixed_abs, tag = 'smem constant byte address 0x4 - core index']
  #allocation1 [shape = 'u32[144,128]{1,0:T(1,128)}', space=vmem, size = 0x12000, scoped, tag = 'internal scratch']
  %s0 = inlined_call_operand.vmem [shape: bf16[512,256], index: 0, kind: input, shape index: {}]
  %s1 = inlined_call_operand.vmem [shape: bf16[256,128], index: 1, kind: input, shape index: {}]
  %s2 = inlined_call_operand.vmem [shape: f32[1,128], index: 2, kind: input, shape index: {}]
  %s3 = inlined_call_operand.vmem [shape: f32[1,128], index: 3, kind: input, shape index: {}]
  %s4 = inlined_call_operand.vmem [shape: f32[1,128], index: 4, kind: input, shape index: {}]
  %s5 = inlined_call_operand.vmem [shape: f32[512,128], index: 5, kind: input, shape index: {}]
  %s6 = inlined_call_operand.vmem [shape: f32[128,128], index: 6, kind: input, shape index: {}]
  %s7 = inlined_call_operand.vmem [shape: f32[512,128], index: 7, kind: output, shape index: {}]
  %s8 = sld [smem:[#allocation0]]
  $region61: #{decoder_group_forward.11} parent=0
    _
  %s10 = ssub.s32 1, %s8
  %s11 = scalar_select 0, %s10, %s8
  loop: start=0, step=1, limit=4
  $region2: #{decoder_group_forward.11} parent=0 // loop_pre_header
    _
  $region3: #{decoder_group_forward.11} parent=0 // loop_header
    %s13 = sphi 0, %s17
    %p14 = scmp.ge.s32.totalorder %s13, 4
    %s23 = sphi 0, %s25
    %s26 = sphi 0, %s23
    %s27 = sphi 0, %s26
    %s43 = sphi 0, %s27
    %s47 = sphi 0, %s47
    %s49 = sphi 0, %s47
    %s50 = sphi 0, %s49
    %s64 = sphi 0, %s50
    %s68 = sphi 0, %s68
    %s70 = sphi 0, %s68
    %s71 = sphi 0, %s70
    %s85 = sphi 0, %s71
    %s89 = sphi 0, %s89
    %s91 = sphi 0, %s89
    %s92 = sphi 0, %s91
    %s106 = sphi 0, %s92
    %s110 = sphi 0, %s110
    %s112 = sphi 0, %s110
    %s113 = sphi 0, %s112
    %s127 = sphi 0, %s113
    %s133 = sphi 0, %s135
    %s136 = sphi 0, %s133
    %s137 = sphi 0, %s136
    %s153 = sphi 0, %s137
    %s157 = sphi 0, %s157
    %s159 = sphi 0, %s157
    %s160 = sphi 0, %s159
    %s174 = sphi 0, %s160
    %s180 = sphi 0, %s182
    %s183 = sphi 0, %s180
    %s184 = sphi 0, %s183
    %s200 = sphi 0, %s184
  $region4: #{decoder_group_forward.11} parent=0 // loop_header_branch
    %16 = sbr.rel (%p14) target = $region8
  $region5: #{decoder_group_forward.11} parent=0 // loop_body
    %s18 = ssub.s32 %s13, 1
    %s19 = ssub.s32 %s13, 2
    %s20 = sadd.s32 %s13, 1
    %s21 = ssub.s32 %s13, %s20
    %p22 = scmp.eq.s32.totalorder %s21, 0
    %s24 = sadd.s32 %s23, 1
    %s25 = scalar_select %p22, %s23, %s24
    %p28 = pneg %p22
    %p29 = scmp.eq.s32.totalorder %s13, 1
    %p30 = por %p28, %p29
    %p31 = scmp.ne.s32.totalorder %s23, %s26
    %p32 = scmp.eq.s32.totalorder %s13, 0
    %p33 = por %p31, %p32
    %p34 = scmp.ne.s32.totalorder %s23, %s26
    %p35 = scmp.eq.s32.totalorder %s18, 1
    %p36 = por %p34, %p35
    %p37 = scmp.ne.s32.totalorder %s26, %s27
    %p38 = scmp.eq.s32.totalorder %s18, 0
    %p39 = por %p37, %p38
    %p40 = scmp.ne.s32.totalorder %s26, %s27
    %p41 = scmp.eq.s32.totalorder %s19, 1
    %p42 = por %p40, %p41
    %p44 = scmp.ne.s32.totalorder %s27, %s43
    %p45 = scmp.eq.s32.totalorder %s19, 0
    %p46 = por %p44, %p45
    %s48 = sadd.s32 %s47, 1
    %p51 = scmp.eq.s32.totalorder %s13, 1
    %p52 = scmp.ne.s32.totalorder %s47, %s49
    %p53 = scmp.eq.s32.totalorder %s13, 0
    %p54 = por %p52, %p53
    %p55 = scmp.ne.s32.totalorder %s47, %s49
    %p56 = scmp.eq.s32.totalorder %s18, 1
    %p57 = por %p55, %p56
    %p58 = scmp.ne.s32.totalorder %s49, %s50
    %p59 = scmp.eq.s32.totalorder %s18, 0
    %p60 = por %p58, %p59
    %p61 = scmp.ne.s32.totalorder %s49, %s50
    %p62 = scmp.eq.s32.totalorder %s19, 1
    %p63 = por %p61, %p62
    %p65 = scmp.ne.s32.totalorder %s50, %s64
    %p66 = scmp.eq.s32.totalorder %s19, 0
    %p67 = por %p65, %p66
    %s69 = sadd.s32 %s68, 1
    %p72 = scmp.eq.s32.totalorder %s13, 1
    %p73 = scmp.ne.s32.totalorder %s68, %s70
    %p74 = scmp.eq.s32.totalorder %s13, 0
    %p75 = por %p73, %p74
    %p76 = scmp.ne.s32.totalorder %s68, %s70
    %p77 = scmp.eq.s32.totalorder %s18, 1
    %p78 = por %p76, %p77
    %p79 = scmp.ne.s32.totalorder %s70, %s71
    %p80 = scmp.eq.s32.totalorder %s18, 0
    %p81 = por %p79, %p80
    %p82 = scmp.ne.s32.totalorder %s70, %s71
    %p83 = scmp.eq.s32.totalorder %s19, 1
    %p84 = por %p82, %p83
    %p86 = scmp.ne.s32.totalorder %s71, %s85
    %p87 = scmp.eq.s32.totalorder %s19, 0
    %p88 = por %p86, %p87
    %s90 = sadd.s32 %s89, 1
    %p93 = scmp.eq.s32.totalorder %s13, 1
    %p94 = scmp.ne.s32.totalorder %s89, %s91
    %p95 = scmp.eq.s32.totalorder %s13, 0
    %p96 = por %p94, %p95
    %p97 = scmp.ne.s32.totalorder %s89, %s91
    %p98 = scmp.eq.s32.totalorder %s18, 1
    %p99 = por %p97, %p98
    %p100 = scmp.ne.s32.totalorder %s91, %s92
    %p101 = scmp.eq.s32.totalorder %s18, 0
    %p102 = por %p100, %p101
    %p103 = scmp.ne.s32.totalorder %s91, %s92
    %p104 = scmp.eq.s32.totalorder %s19, 1
    %p105 = por %p103, %p104
    %p107 = scmp.ne.s32.totalorder %s92, %s106
    %p108 = scmp.eq.s32.totalorder %s19, 0
    %p109 = por %p107, %p108
    %s111 = sadd.s32 %s110, 1
    %p114 = scmp.eq.s32.totalorder %s13, 1
    %p115 = scmp.ne.s32.totalorder %s110, %s112
    %p116 = scmp.eq.s32.totalorder %s13, 0
    %p117 = por %p115, %p116
    %p118 = scmp.ne.s32.totalorder %s110, %s112
    %p119 = scmp.eq.s32.totalorder %s18, 1
    %p120 = por %p118, %p119
    %p121 = scmp.ne.s32.totalorder %s112, %s113
    %p122 = scmp.eq.s32.totalorder %s18, 0
    %p123 = por %p121, %p122
    %p124 = scmp.ne.s32.totalorder %s112, %s113
    %p125 = scmp.eq.s32.totalorder %s19, 1
    %p126 = por %p124, %p125
    %p128 = scmp.ne.s32.totalorder %s113, %s127
    %p129 = scmp.eq.s32.totalorder %s19, 0
    %p130 = por %p128, %p129
    %s131 = ssub.s32 %s13, %s20
    %p132 = scmp.eq.s32.totalorder %s131, 0
    %s134 = sadd.s32 %s133, 1
    %s135 = scalar_select %p132, %s133, %s134
    %p138 = pneg %p132
    %p139 = scmp.eq.s32.totalorder %s13, 1
    %p140 = por %p138, %p139
    %p141 = scmp.ne.s32.totalorder %s133, %s136
    %p142 = scmp.eq.s32.totalorder %s13, 0
    %p143 = por %p141, %p142
    %p144 = scmp.ne.s32.totalorder %s133, %s136
    %p145 = scmp.eq.s32.totalorder %s18, 1
    %p146 = por %p144, %p145
    %p147 = scmp.ne.s32.totalorder %s136, %s137
    %p148 = scmp.eq.s32.totalorder %s18, 0
    %p149 = por %p147, %p148
    %p150 = scmp.ne.s32.totalorder %s136, %s137
    %p151 = scmp.eq.s32.totalorder %s19, 1
    %p152 = por %p150, %p151
    %p154 = scmp.ne.s32.totalorder %s137, %s153
    %p155 = scmp.eq.s32.totalorder %s19, 0
    %p156 = por %p154, %p155
    %s158 = sadd.s32 %s157, 1
    %p161 = scmp.eq.s32.totalorder %s13, 1
    %p162 = scmp.ne.s32.totalorder %s157, %s159
    %p163 = scmp.eq.s32.totalorder %s13, 0
    %p164 = por %p162, %p163
    %p165 = scmp.ne.s32.totalorder %s157, %s159
    %p166 = scmp.eq.s32.totalorder %s18, 1
    %p167 = por %p165, %p166
    %p168 = scmp.ne.s32.totalorder %s159, %s160
    %p169 = scmp.eq.s32.totalorder %s18, 0
    %p170 = por %p168, %p169
    %p171 = scmp.ne.s32.totalorder %s159, %s160
    %p172 = scmp.eq.s32.totalorder %s19, 1
    %p173 = por %p171, %p172
    %p175 = scmp.ne.s32.totalorder %s160, %s174
    %p176 = scmp.eq.s32.totalorder %s19, 0
    %p177 = por %p175, %p176
    %s178 = ssub.s32 %s13, %s20
    %p179 = scmp.eq.s32.totalorder %s178, 0
    %s181 = sadd.s32 %s180, 1
    %s182 = scalar_select %p179, %s180, %s181
    %p185 = pneg %p179
    %p186 = scmp.eq.s32.totalorder %s13, 1
    %p187 = por %p185, %p186
    %p188 = scmp.ne.s32.totalorder %s180, %s183
    %p189 = scmp.eq.s32.totalorder %s13, 0
    %p190 = por %p188, %p189
    %p191 = scmp.ne.s32.totalorder %s180, %s183
    %p192 = scmp.eq.s32.totalorder %s18, 1
    %p193 = por %p191, %p192
    %p194 = scmp.ne.s32.totalorder %s183, %s184
    %p195 = scmp.eq.s32.totalorder %s18, 0
    %p196 = por %p194, %p195
    %p197 = scmp.ne.s32.totalorder %s183, %s184
    %p198 = scmp.eq.s32.totalorder %s19, 1
    %p199 = por %p197, %p198
    %p201 = scmp.ne.s32.totalorder %s184, %s200
    %p202 = scmp.eq.s32.totalorder %s19, 0
    %p203 = por %p201, %p202
    %p204 = scmp.le.s32.totalorder 1, %s13
    %p205 = scmp.lt.s32.totalorder %s13, 3
    %p206 = pnand %p204, %p205
    %p207 = pneg %p206
    // Predicated region
    $region9: #{decoder_group_forward.11} parent=5 // pred_check
      _
    $region10: #{decoder_group_forward.11} parent=5 // pred_check_branch
      %209 = sbr.rel (%p206) target = $region12
    $region11: #{decoder_group_forward.11} parent=5 // pred_region
      %s210 = ssub.s32 %s13, 1
      // Predicated region
      $region13: #{decoder_group_forward.11} parent=11 // pred_check
        %p211 = pneg %p60
      $region14: #{decoder_group_forward.11} parent=11 // pred_check_branch
        %213 = sbr.rel (%p211) target = $region16
      $region15: #{decoder_group_forward.11} parent=11 // pred_region
        _
      $region16: #{decoder_group_forward.11} parent=11 // pred_fallthru
        _
      // Predicated region
      $region17: #{decoder_group_forward.11} parent=11 // pred_check
        %p214 = pneg %p81
      $region18: #{decoder_group_forward.11} parent=11 // pred_check_branch
        %216 = sbr.rel (%p214) target = $region20
      $region19: #{decoder_group_forward.11} parent=11 // pred_region
        _
      $region20: #{decoder_group_forward.11} parent=11 // pred_fallthru
        _
      // Predicated region
      $region21: #{decoder_group_forward.11} parent=11 // pred_check
        %p217 = pneg %p102
      $region22: #{decoder_group_forward.11} parent=11 // pred_check_branch
        %219 = sbr.rel (%p217) target = $region24
      $region23: #{decoder_group_forward.11} parent=11 // pred_region
        _
      $region24: #{decoder_group_forward.11} parent=11 // pred_fallthru
        _
      // Predicated region
      $region25: #{decoder_group_forward.11} parent=11 // pred_check
        %p220 = pneg %p123
      $region26: #{decoder_group_forward.11} parent=11 // pred_check_branch
        %222 = sbr.rel (%p220) target = $region28
      $region27: #{decoder_group_forward.11} parent=11 // pred_region
        _
      $region28: #{decoder_group_forward.11} parent=11 // pred_fallthru
        _
      // Predicated region
      $region29: #{decoder_group_forward.11} parent=11 // pred_check
        %p223 = pneg %p170
      $region30: #{decoder_group_forward.11} parent=11 // pred_check_branch
        %225 = sbr.rel (%p223) target = $region32
      $region31: #{decoder_group_forward.11} parent=11 // pred_region
        _
      $region32: #{decoder_group_forward.11} parent=11 // pred_fallthru
        _
    $region12: #{decoder_group_forward.11} parent=5 // pred_fallthru
      _
    %p226 = scmp.lt.s32.totalorder %s13, 2
    // Predicated region
    $region33: #{decoder_group_forward.11} parent=5 // pred_check
      %p227 = pneg %p226
    $region34: #{decoder_group_forward.11} parent=5 // pred_check_branch
      %229 = sbr.rel (%p227) target = $region36
    $region35: #{decoder_group_forward.11} parent=5 // pred_region
      // Predicated region
      $region37: #{decoder_group_forward.11} parent=35 // pred_check
        %p230 = pneg %p33
      $region38: #{decoder_group_forward.11} parent=35 // pred_check_branch
        %232 = sbr.rel (%p230) target = $region40
      $region39: #{decoder_group_forward.11} parent=35 // pred_region
        %s233 = smul.u32 32, %s13
        %p234 = scmp.lt.s32.totalorder %s233, 63
        %s235 = scalar_select %p234, %s233, 63
        %s236 = smul.addr %s235, 2
        %s237 = smul.addr %s236, 4
        %s238 = scalar_lea.vmem %s0, %s237
        %s239 = smul.u32 32, %s13
      $region40: #{decoder_group_forward.11} parent=35 // pred_fallthru
        _
      // Predicated region
      $region41: #{decoder_group_forward.11} parent=35 // pred_check
        %p240 = pneg %p143
      $region42: #{decoder_group_forward.11} parent=35 // pred_check_branch
        %242 = sbr.rel (%p240) target = $region44
      $region43: #{decoder_group_forward.11} parent=35 // pred_region
        %s243 = smul.u32 32, %s13
        %p244 = scmp.lt.s32.totalorder %s243, 63
        %s245 = scalar_select %p244, %s243, 63
        %s246 = smul.addr %s245, 8
        %s247 = scalar_lea.vmem %s5, %s246
        %s248 = smul.u32 32, %s13
      $region44: #{decoder_group_forward.11} parent=35 // pred_fallthru
        _
    $region36: #{decoder_group_forward.11} parent=5 // pred_fallthru
      _
    %p249 = scmp.le.s32.totalorder 1, %s13
    %p250 = scmp.lt.s32.totalorder %s13, 3
    %p251 = pnand %p249, %p250
    %p252 = pneg %p251
    // Predicated region
    $region45: #{decoder_group_forward.11} parent=5 // pred_check
      _
    $region46: #{decoder_group_forward.11} parent=5 // pred_check_branch
      %254 = sbr.rel (%p251) target = $region48
    $region47: #{decoder_group_forward.11} parent=5 // pred_region
      %s255 = ssub.s32 %s13, 1
      %s256 = smul.u32 32, %s18
      %p257 = scmp.lt.s32.totalorder %s256, 63
      %s258 = scalar_select %p257, %s256, 63
      %s259 = smul.addr %s258, 2
      %s260 = smul.addr %s259, 4
      %s261 = scalar_lea.vmem %s0, %s260
      %p262 = pneg %p39
      %p263 = pneg %p36
      %p264 = pneg %p60
      %p265 = pneg %p57
      %p266 = pneg %p81
      %p267 = pneg %p78
      %p268 = pneg %p102
      %p269 = pneg %p99
      %p270 = pneg %p123
      %p271 = pneg %p120
      %s272 = smul.u32 32, %s18
      %p273 = scmp.lt.s32.totalorder %s272, 63
      %s274 = scalar_select %p273, %s272, 63
      %s275 = smul.addr %s274, 8
      %s276 = scalar_lea.vmem %s5, %s275
      %p277 = pneg %p149
      %p278 = pneg %p146
      %p279 = pneg %p170
      %p280 = pneg %p167
      %p281 = pneg %p196
      %p282 = pneg %p193
      %s283 = smul.u32 32, %s18
      %p284 = scmp.lt.s32.totalorder %s283, 63
      %s285 = scalar_select %p284, %s283, 63
      %s286 = smul.addr %s285, 8
      %s287 = scalar_lea.vmem %s7, %s286
      %s288 = smul.u32 32, %s18
      %p289 = scmp.lt.s32.totalorder %s288, 63
      %s290 = scalar_select %p289, %s288, 63
      %s291 = smul.addr %s290, 2
      %s292 = smul.addr %s291, 4
      %s293 = scalar_lea.vmem %s0, %s292
      %s294 = smul.u32 32, %s18
      %s295 = smul.u32 32, %s18
      %p296 = scmp.lt.s32.totalorder %s295, 63
      %s297 = scalar_select %p296, %s295, 63
      %s298 = smul.addr %s297, 8
      %s299 = scalar_lea.vmem %s5, %s298
      %s300 = smul.u32 32, %s18
      %s301 = smul.u32 32, %s18
      %p302 = scmp.lt.s32.totalorder %s301, 63
      %s303 = scalar_select %p302, %s301, 63
      %s304 = smul.addr %s303, 8
      %s305 = scalar_lea.vmem %s7, %s304
      %s306 = smul.u32 32, %s18
      %v308 = vld [vmem:[%s293] sm:$0xff]
      %v309 = vld [vmem:[%s293 + $0x8] sm:$0xff]
      %v310 = vld [vmem:[%s293 + $0x10] sm:$0xff]
      %v311 = vld [vmem:[%s293 + $0x18] sm:$0xff]
      %v312 = vld [vmem:[%s293 + $0x20] sm:$0xff]
      %v313 = vld [vmem:[%s293 + $0x28] sm:$0xff]
      %v314 = vld [vmem:[%s293 + $0x30] sm:$0xff]
      %v315 = vld [vmem:[%s293 + $0x38] sm:$0xff]
      %v316 = vld [vmem:[%s293 + $0x40] sm:$0xff]
      %v317 = vld [vmem:[%s293 + $0x48] sm:$0xff]
      %v318 = vld [vmem:[%s293 + $0x50] sm:$0xff]
      %v319 = vld [vmem:[%s293 + $0x58] sm:$0xff]
      %v320 = vld [vmem:[%s293 + $0x60] sm:$0xff]
      %v321 = vld [vmem:[%s293 + $0x68] sm:$0xff]
      %v322 = vld [vmem:[%s293 + $0x70] sm:$0xff]
      %v323 = vld [vmem:[%s293 + $0x78] sm:$0xff]
      %v324 = vld [vmem:[%s293 + $0x80] sm:$0xff]
      %v325 = vld [vmem:[%s293 + $0x88] sm:$0xff]
      %v326 = vld [vmem:[%s293 + $0x90] sm:$0xff]
      %v327 = vld [vmem:[%s293 + $0x98] sm:$0xff]
      %v328 = vld [vmem:[%s293 + $0xa0] sm:$0xff]
      %v329 = vld [vmem:[%s293 + $0xa8] sm:$0xff]
      %v330 = vld [vmem:[%s293 + $0xb0] sm:$0xff]
      %v331 = vld [vmem:[%s293 + $0xb8] sm:$0xff]
      %v332 = vld [vmem:[%s293 + $0xc0] sm:$0xff]
      %v333 = vld [vmem:[%s293 + $0xc8] sm:$0xff]
      %v334 = vld [vmem:[%s293 + $0xd0] sm:$0xff]
      %v335 = vld [vmem:[%s293 + $0xd8] sm:$0xff]
      %v336 = vld [vmem:[%s293 + $0xe0] sm:$0xff]
      %v337 = vld [vmem:[%s293 + $0xe8] sm:$0xff]
      %v338 = vld [vmem:[%s293 + $0xf0] sm:$0xff]
      %v339 = vld [vmem:[%s293 + $0xf8] sm:$0xff]
      %v340 = vld [vmem:[%s1] sm:$0xf]
      %v341 = vld [vmem:[%s1 + $0x4] sm:$0xf]
      %v342 = vld [vmem:[%s1 + $0x8] sm:$0xf]
      %v343 = vld [vmem:[%s1 + $0xc] sm:$0xf]
      %v344 = vld [vmem:[%s1 + $0x10] sm:$0xf]
      %v345 = vld [vmem:[%s1 + $0x14] sm:$0xf]
      %v346 = vld [vmem:[%s1 + $0x18] sm:$0xf]
      %v347 = vld [vmem:[%s1 + $0x1c] sm:$0xf]
      %v348 = vld [vmem:[%s1 + $0x20] sm:$0xf]
      %v349 = vld [vmem:[%s1 + $0x24] sm:$0xf]
      %v350 = vld [vmem:[%s1 + $0x28] sm:$0xf]
      %v351 = vld [vmem:[%s1 + $0x2c] sm:$0xf]
      %v352 = vld [vmem:[%s1 + $0x30] sm:$0xf]
      %v353 = vld [vmem:[%s1 + $0x34] sm:$0xf]
      %v354 = vld [vmem:[%s1 + $0x38] sm:$0xf]
      %v355 = vld [vmem:[%s1 + $0x3c] sm:$0xf]
      %v356 = vld [vmem:[%s1 + $0x40] sm:$0xf]
      %v357 = vld [vmem:[%s1 + $0x44] sm:$0xf]
      %v358 = vld [vmem:[%s1 + $0x48] sm:$0xf]
      %v359 = vld [vmem:[%s1 + $0x4c] sm:$0xf]
      %v360 = vld [vmem:[%s1 + $0x50] sm:$0xf]
      %v361 = vld [vmem:[%s1 + $0x54] sm:$0xf]
      %v362 = vld [vmem:[%s1 + $0x58] sm:$0xf]
      %v363 = vld [vmem:[%s1 + $0x5c] sm:$0xf]
      %v364 = vld [vmem:[%s1 + $0x60] sm:$0xf]
      %v365 = vld [vmem:[%s1 + $0x64] sm:$0xf]
      %v366 = vld [vmem:[%s1 + $0x68] sm:$0xf]
      %v367 = vld [vmem:[%s1 + $0x6c] sm:$0xf]
      %v368 = vld [vmem:[%s1 + $0x70] sm:$0xf]
      %v369 = vld [vmem:[%s1 + $0x74] sm:$0xf]
      %v370 = vld [vmem:[%s1 + $0x78] sm:$0xf]
      %v371 = vld [vmem:[%s1 + $0x7c] sm:$0xf]
      %v404 = vunpack.c.l.b16 %v308
      %v405 = vunpack.c.h.b16 %v308
      %v406 = vunpack.c.l.b16 %v309
      %v407 = vunpack.c.h.b16 %v309
      %v408 = vunpack.c.l.b16 %v310
      %v409 = vunpack.c.h.b16 %v310
      %v410 = vunpack.c.l.b16 %v311
      %v411 = vunpack.c.h.b16 %v311
      %v412 = vunpack.c.l.b16 %v312
      %v413 = vunpack.c.h.b16 %v312
      %v414 = vunpack.c.l.b16 %v313
      %v415 = vunpack.c.h.b16 %v313
      %v416 = vunpack.c.l.b16 %v314
      %v417 = vunpack.c.h.b16 %v314
      %v418 = vunpack.c.l.b16 %v315
      %v419 = vunpack.c.h.b16 %v315
      %v420 = vunpack.c.l.b16 %v316
      %v421 = vunpack.c.h.b16 %v316
      %v422 = vunpack.c.l.b16 %v317
      %v423 = vunpack.c.h.b16 %v317
      %v424 = vunpack.c.l.b16 %v318
      %v425 = vunpack.c.h.b16 %v318
      %v426 = vunpack.c.l.b16 %v319
      %v427 = vunpack.c.h.b16 %v319
      %v428 = vunpack.c.l.b16 %v320
      %v429 = vunpack.c.h.b16 %v320
      %v430 = vunpack.c.l.b16 %v321
      %v431 = vunpack.c.h.b16 %v321
      %v432 = vunpack.c.l.b16 %v322
      %v433 = vunpack.c.h.b16 %v322
      %v434 = vunpack.c.l.b16 %v323
      %v435 = vunpack.c.h.b16 %v323
      %v436 = vunpack.c.l.b16 %v324
      %v437 = vunpack.c.h.b16 %v324
      %v438 = vunpack.c.l.b16 %v325
      %v439 = vunpack.c.h.b16 %v325
      %v440 = vunpack.c.l.b16 %v326
      %v441 = vunpack.c.h.b16 %v326
      %v442 = vunpack.c.l.b16 %v327
      %v443 = vunpack.c.h.b16 %v327
      %v444 = vunpack.c.l.b16 %v328
      %v445 = vunpack.c.h.b16 %v328
      %v446 = vunpack.c.l.b16 %v329
      %v447 = vunpack.c.h.b16 %v329
      %v448 = vunpack.c.l.b16 %v330
      %v449 = vunpack.c.h.b16 %v330
      %v450 = vunpack.c.l.b16 %v331
      %v451 = vunpack.c.h.b16 %v331
      %v452 = vunpack.c.l.b16 %v332
      %v453 = vunpack.c.h.b16 %v332
      %v454 = vunpack.c.l.b16 %v333
      %v455 = vunpack.c.h.b16 %v333
      %v456 = vunpack.c.l.b16 %v334
      %v457 = vunpack.c.h.b16 %v334
      %v458 = vunpack.c.l.b16 %v335
      %v459 = vunpack.c.h.b16 %v335
      %v460 = vunpack.c.l.b16 %v336
      %v461 = vunpack.c.h.b16 %v336
      %v462 = vunpack.c.l.b16 %v337
      %v463 = vunpack.c.h.b16 %v337
      %v464 = vunpack.c.l.b16 %v338
      %v465 = vunpack.c.h.b16 %v338
      %v466 = vunpack.c.l.b16 %v339
      %v467 = vunpack.c.h.b16 %v339
      %v468 = vpack.c.b16 %v406, %v404
      %v469 = vpack.c.b16 %v407, %v405
      %v470 = vpack.c.b16 %v410, %v408
      %v471 = vpack.c.b16 %v411, %v409
      %v472 = vpack.c.b16 %v414, %v412
      %v473 = vpack.c.b16 %v415, %v413
      %v474 = vpack.c.b16 %v418, %v416
      %v475 = vpack.c.b16 %v419, %v417
      %v476 = vpack.c.b16 %v422, %v420
      %v477 = vpack.c.b16 %v423, %v421
      %v478 = vpack.c.b16 %v426, %v424
      %v479 = vpack.c.b16 %v427, %v425
      %v480 = vpack.c.b16 %v430, %v428
      %v481 = vpack.c.b16 %v431, %v429
      %v482 = vpack.c.b16 %v434, %v432
      %v483 = vpack.c.b16 %v435, %v433
      %v484 = vpack.c.b16 %v438, %v436
      %v485 = vpack.c.b16 %v439, %v437
      %v486 = vpack.c.b16 %v442, %v440
      %v487 = vpack.c.b16 %v443, %v441
      %v488 = vpack.c.b16 %v446, %v444
      %v489 = vpack.c.b16 %v447, %v445
      %v490 = vpack.c.b16 %v450, %v448
      %v491 = vpack.c.b16 %v451, %v449
      %v492 = vpack.c.b16 %v454, %v452
      %v493 = vpack.c.b16 %v455, %v453
      %v494 = vpack.c.b16 %v458, %v456
      %v495 = vpack.c.b16 %v459, %v457
      %v496 = vpack.c.b16 %v462, %v460
      %v497 = vpack.c.b16 %v463, %v461
      %v498 = vpack.c.b16 %v466, %v464
      %v499 = vpack.c.b16 %v467, %v465
      %v564 = vunpack.c.l.b16 %v340
      %v565 = vunpack.c.l.b16 %v341
      %v566 = vunpack.c.l.b16 %v342
      %v567 = vunpack.c.l.b16 %v343
      %v568 = vunpack.c.l.b16 %v344
      %v569 = vunpack.c.l.b16 %v345
      %v570 = vunpack.c.l.b16 %v346
      %v571 = vunpack.c.l.b16 %v347
      %v572 = vunpack.c.l.b16 %v348
      %v573 = vunpack.c.l.b16 %v349
      %v574 = vunpack.c.l.b16 %v350
      %v575 = vunpack.c.l.b16 %v351
      %v576 = vunpack.c.l.b16 %v352
      %v577 = vunpack.c.l.b16 %v353
      %v578 = vunpack.c.l.b16 %v354
      %v579 = vunpack.c.l.b16 %v355
      %v580 = vunpack.c.l.b16 %v356
      %v581 = vunpack.c.l.b16 %v357
      %v582 = vunpack.c.l.b16 %v358
      %v583 = vunpack.c.l.b16 %v359
      %v584 = vunpack.c.l.b16 %v360
      %v585 = vunpack.c.l.b16 %v361
      %v586 = vunpack.c.l.b16 %v362
      %v587 = vunpack.c.l.b16 %v363
      %v588 = vunpack.c.l.b16 %v364
      %v589 = vunpack.c.l.b16 %v365
      %v590 = vunpack.c.l.b16 %v366
      %v591 = vunpack.c.l.b16 %v367
      %v592 = vunpack.c.l.b16 %v368
      %v593 = vunpack.c.l.b16 %v369
      %v594 = vunpack.c.l.b16 %v370
      %v595 = vunpack.c.l.b16 %v371
      %v596 = vpack.c.b16 %v565, %v564
      %v597 = vpack.c.b16 %v567, %v566
      %v598 = vpack.c.b16 %v569, %v568
      %v599 = vpack.c.b16 %v571, %v570
      %v600 = vpack.c.b16 %v573, %v572
      %v601 = vpack.c.b16 %v575, %v574
      %v602 = vpack.c.b16 %v577, %v576
      %v603 = vpack.c.b16 %v579, %v578
      %v604 = vpack.c.b16 %v581, %v580
      %v605 = vpack.c.b16 %v583, %v582
      %v606 = vpack.c.b16 %v585, %v584
      %v607 = vpack.c.b16 %v587, %v586
      %v608 = vpack.c.b16 %v589, %v588
      %v609 = vpack.c.b16 %v591, %v590
      %v610 = vpack.c.b16 %v593, %v592
      %v611 = vpack.c.b16 %v595, %v594
      %628 = vmatprep.subr.bf16.mxu0 0
      %629 = vmatpush1.bf16.msra.mxu0 %v596
      %630 = vmatprep.subr.bf16.mxu0 0
      %631 = vmatpush1.bf16.msra.mxu0 %v597
      %632 = vmatprep.subr.bf16.mxu0 0
      %633 = vmatpush1.bf16.msra.mxu0 %v598
      %634 = vmatprep.subr.bf16.mxu0 0
      %635 = vmatpush1.bf16.msra.mxu0 %v599
      %636 = vmatprep.subr.bf16.mxu0 0
      %637 = vmatpush1.bf16.msra.mxu0 %v600
      %638 = vmatprep.subr.bf16.mxu0 0
      %639 = vmatpush1.bf16.msra.mxu0 %v601
      %640 = vmatprep.subr.bf16.mxu0 0
      %641 = vmatpush1.bf16.msra.mxu0 %v602
      %642 = vmatprep.subr.bf16.mxu0 0
      %643 = vmatpush1.bf16.msra.mxu0 %v603
      %644 = vmatprep.subr.bf16.mxu0 0
      %645 = vmatpush1.bf16.msra.mxu0 %v604
      %646 = vmatprep.subr.bf16.mxu0 0
      %647 = vmatpush1.bf16.msra.mxu0 %v605
      %648 = vmatprep.subr.bf16.mxu0 0
      %649 = vmatpush1.bf16.msra.mxu0 %v606
      %650 = vmatprep.subr.bf16.mxu0 0
      %651 = vmatpush1.bf16.msra.mxu0 %v607
      %652 = vmatprep.subr.bf16.mxu0 0
      %653 = vmatpush1.bf16.msra.mxu0 %v608
      %654 = vmatprep.subr.bf16.mxu0 0
      %655 = vmatpush1.bf16.msra.mxu0 %v609
      %656 = vmatprep.subr.bf16.mxu0 0
      %657 = vmatpush1.bf16.msra.mxu0 %v610
      %658 = vmatprep.subr.bf16.mxu0 0
      %659 = vmatpush1.bf16.msra.mxu0 %v611
      %660 = vmatprep.mubr.bf16.mxu0 %v469
      %661 = vmatmul.mubr.bf16.gmra.mrb[0].mxu0 %v468
      %v662 = vpop.f32.mrb[0].mxu0
      %v663 = vadd.f32 0.0, %v662
      %v664 = vpop.f32.mrb[0].mxu0
      %v665 = vpop.f32.mrb[0].mxu0
      %v666 = vadd.f32 0.0, %v665
      %v667 = vpop.f32.mrb[0].mxu0
      %668 = vmatprep.mubr.bf16.mxu0 %v471
      %669 = vmatmul.mubr.bf16.gmra.mrb[0].mxu0 %v470
      %v670 = vpop.f32.mrb[0].mxu0
      %v671 = vadd.f32 0.0, %v670
      %v672 = vpop.f32.mrb[0].mxu0
      %v673 = vpop.f32.mrb[0].mxu0
      %v674 = vadd.f32 0.0, %v673
      %v675 = vpop.f32.mrb[0].mxu0
      %676 = vmatprep.mubr.bf16.mxu0 %v473
      %677 = vmatmul.mubr.bf16.gmra.mrb[0].mxu0 %v472
      %v678 = vpop.f32.mrb[0].mxu0
      %v679 = vadd.f32 0.0, %v678
      %v680 = vpop.f32.mrb[0].mxu0
      %v681 = vpop.f32.mrb[0].mxu0
      %v682 = vadd.f32 0.0, %v681
      %v683 = vpop.f32.mrb[0].mxu0
      %684 = vmatprep.mubr.bf16.mxu0 %v475
      %685 = vmatmul.mubr.bf16.gmra.mrb[0].mxu0 %v474
      %v686 = vpop.f32.mrb[0].mxu0
      %v687 = vadd.f32 0.0, %v686
      %v688 = vpop.f32.mrb[0].mxu0
      %v689 = vpop.f32.mrb[0].mxu0
      %v690 = vadd.f32 0.0, %v689
      %v691 = vpop.f32.mrb[0].mxu0
      %692 = vmatprep.mubr.bf16.mxu0 %v477
      %693 = vmatmul.mubr.bf16.gmra.mrb[0].mxu0 %v476
      %v694 = vpop.f32.mrb[0].mxu0
      %v695 = vadd.f32 0.0, %v694
      %v696 = vpop.f32.mrb[0].mxu0
      %v697 = vpop.f32.mrb[0].mxu0
      %v698 = vadd.f32 0.0, %v697
      %v699 = vpop.f32.mrb[0].mxu0
      %700 = vmatprep.mubr.bf16.mxu0 %v479
      %701 = vmatmul.mubr.bf16.gmra.mrb[0].mxu0 %v478
      %v702 = vpop.f32.mrb[0].mxu0
      %v703 = vadd.f32 0.0, %v702
      %v704 = vpop.f32.mrb[0].mxu0
      %v705 = vpop.f32.mrb[0].mxu0
      %v706 = vadd.f32 0.0, %v705
      %v707 = vpop.f32.mrb[0].mxu0
      %708 = vmatprep.mubr.bf16.mxu0 %v481
      %709 = vmatmul.mubr.bf16.gmra.mrb[0].mxu0 %v480
      %v710 = vpop.f32.mrb[0].mxu0
      %v711 = vadd.f32 0.0, %v710
      %v712 = vpop.f32.mrb[0].mxu0
      %v713 = vpop.f32.mrb[0].mxu0
      %v714 = vadd.f32 0.0, %v713
      %v715 = vpop.f32.mrb[0].mxu0
      %716 = vmatprep.mubr.bf16.mxu0 %v483
      %717 = vmatmul.mubr.bf16.gmra.mrb[0].mxu0 %v482
      %v718 = vpop.f32.mrb[0].mxu0
      %v719 = vadd.f32 0.0, %v718
      %v720 = vpop.f32.mrb[0].mxu0
      %v721 = vpop.f32.mrb[0].mxu0
      %v722 = vadd.f32 0.0, %v721
      %v723 = vpop.f32.mrb[0].mxu0
      %724 = vmatprep.mubr.bf16.mxu0 %v485
      %725 = vmatmul.mubr.bf16.gmra.mrb[0].mxu0 %v484
      %v726 = vpop.f32.mrb[0].mxu0
      %v727 = vadd.f32 0.0, %v726
      %v728 = vpop.f32.mrb[0].mxu0
      %v729 = vpop.f32.mrb[0].mxu0
      %v730 = vadd.f32 0.0, %v729
      %v731 = vpop.f32.mrb[0].mxu0
      %732 = vmatprep.mubr.bf16.mxu0 %v487
      %733 = vmatmul.mubr.bf16.gmra.mrb[0].mxu0 %v486
      %v734 = vpop.f32.mrb[0].mxu0
      %v735 = vadd.f32 0.0, %v734
      %v736 = vpop.f32.mrb[0].mxu0
      %v737 = vpop.f32.mrb[0].mxu0
      %v738 = vadd.f32 0.0, %v737
      %v739 = vpop.f32.mrb[0].mxu0
      %740 = vmatprep.mubr.bf16.mxu0 %v489
      %741 = vmatmul.mubr.bf16.gmra.mrb[0].mxu0 %v488
      %v742 = vpop.f32.mrb[0].mxu0
      %v743 = vadd.f32 0.0, %v742
      %v744 = vpop.f32.mrb[0].mxu0
      %v745 = vpop.f32.mrb[0].mxu0
      %v746 = vadd.f32 0.0, %v745
      %v747 = vpop.f32.mrb[0].mxu0
      %748 = vmatprep.mubr.bf16.mxu0 %v491
      %749 = vmatmul.mubr.bf16.gmra.mrb[0].mxu0 %v490
      %v750 = vpop.f32.mrb[0].mxu0
      %v751 = vadd.f32 0.0, %v750
      %v752 = vpop.f32.mrb[0].mxu0
      %v753 = vpop.f32.mrb[0].mxu0
      %v754 = vadd.f32 0.0, %v753
      %v755 = vpop.f32.mrb[0].mxu0
      %756 = vmatprep.mubr.bf16.mxu0 %v493
      %757 = vmatmul.mubr.bf16.gmra.mrb[0].mxu0 %v492
      %v758 = vpop.f32.mrb[0].mxu0
      %v759 = vadd.f32 0.0, %v758
      %v760 = vpop.f32.mrb[0].mxu0
      %v761 = vpop.f32.mrb[0].mxu0
      %v762 = vadd.f32 0.0, %v761
      %v763 = vpop.f32.mrb[0].mxu0
      %764 = vmatprep.mubr.bf16.mxu0 %v495
      %765 = vmatmul.mubr.bf16.gmra.mrb[0].mxu0 %v494
      %v766 = vpop.f32.mrb[0].mxu0
      %v767 = vadd.f32 0.0, %v766
      %v768 = vpop.f32.mrb[0].mxu0
      %v769 = vpop.f32.mrb[0].mxu0
      %v770 = vadd.f32 0.0, %v769
      %v771 = vpop.f32.mrb[0].mxu0
      %772 = vmatprep.mubr.bf16.mxu0 %v497
      %773 = vmatmul.mubr.bf16.gmra.mrb[0].mxu0 %v496
      %v774 = vpop.f32.mrb[0].mxu0
      %v775 = vadd.f32 0.0, %v774
      %v776 = vpop.f32.mrb[0].mxu0
      %v777 = vpop.f32.mrb[0].mxu0
      %v778 = vadd.f32 0.0, %v777
      %v779 = vpop.f32.mrb[0].mxu0
      %780 = vmatprep.mubr.bf16.mxu0 %v499
      %781 = vmatmul.mubr.bf16.gmra.mrb[0].mxu0 %v498
      %v782 = vpop.f32.mrb[0].mxu0
      %v783 = vadd.f32 0.0, %v782
      %v784 = vpop.f32.mrb[0].mxu0
      %v785 = vpop.f32.mrb[0].mxu0
      %v786 = vadd.f32 0.0, %v785
      %v787 = vpop.f32.mrb[0].mxu0
      %788 = vdwg.mxu0
      %v789 = vld [vmem:[%s2] sm:$0x1]
      %v791 = vlaneseq
      %v792 = vshrl.u32 %v791, 7
      %v793 = vsub.s32 0, %v792
      %v794 = vrot.slane %v789, %v793
      %v796 = vmul.f32 %v663, %v794
      %v797 = vmul.f32 %v666, %v794
      %v798 = vmul.f32 %v671, %v794
      %v799 = vmul.f32 %v674, %v794
      %v800 = vmul.f32 %v679, %v794
      %v801 = vmul.f32 %v682, %v794
      %v802 = vmul.f32 %v687, %v794
      %v803 = vmul.f32 %v690, %v794
      %v804 = vmul.f32 %v695, %v794
      %v805 = vmul.f32 %v698, %v794
      %v806 = vmul.f32 %v703, %v794
      %v807 = vmul.f32 %v706, %v794
      %v808 = vmul.f32 %v711, %v794
      %v809 = vmul.f32 %v714, %v794
      %v810 = vmul.f32 %v719, %v794
      %v811 = vmul.f32 %v722, %v794
      %v812 = vmul.f32 %v727, %v794
      %v813 = vmul.f32 %v730, %v794
      %v814 = vmul.f32 %v735, %v794
      %v815 = vmul.f32 %v738, %v794
      %v816 = vmul.f32 %v743, %v794
      %v817 = vmul.f32 %v746, %v794
      %v818 = vmul.f32 %v751, %v794
      %v819 = vmul.f32 %v754, %v794
      %v820 = vmul.f32 %v759, %v794
      %v821 = vmul.f32 %v762, %v794
      %v822 = vmul.f32 %v767, %v794
      %v823 = vmul.f32 %v770, %v794
      %v824 = vmul.f32 %v775, %v794
      %v825 = vmul.f32 %v778, %v794
      %v826 = vmul.f32 %v783, %v794
      %v827 = vmul.f32 %v786, %v794
      %v828 = vld [vmem:[%s3] sm:$0x1]
      %v830 = vlaneseq
      %v831 = vshrl.u32 %v830, 7
      %v832 = vsub.s32 0, %v831
      %v833 = vrot.slane %v828, %v832
      %v835 = vadd.f32 %v796, %v833
      %v836 = vadd.f32 %v797, %v833
      %v837 = vadd.f32 %v798, %v833
      %v838 = vadd.f32 %v799, %v833
      %v839 = vadd.f32 %v800, %v833
      %v840 = vadd.f32 %v801, %v833
      %v841 = vadd.f32 %v802, %v833
      %v842 = vadd.f32 %v803, %v833
      %v843 = vadd.f32 %v804, %v833
      %v844 = vadd.f32 %v805, %v833
      %v845 = vadd.f32 %v806, %v833
      %v846 = vadd.f32 %v807, %v833
      %v847 = vadd.f32 %v808, %v833
      %v848 = vadd.f32 %v809, %v833
      %v849 = vadd.f32 %v810, %v833
      %v850 = vadd.f32 %v811, %v833
      %v851 = vadd.f32 %v812, %v833
      %v852 = vadd.f32 %v813, %v833
      %v853 = vadd.f32 %v814, %v833
      %v854 = vadd.f32 %v815, %v833
      %v855 = vadd.f32 %v816, %v833
      %v856 = vadd.f32 %v817, %v833
      %v857 = vadd.f32 %v818, %v833
      %v858 = vadd.f32 %v819, %v833
      %v859 = vadd.f32 %v820, %v833
      %v860 = vadd.f32 %v821, %v833
      %v861 = vadd.f32 %v822, %v833
      %v862 = vadd.f32 %v823, %v833
      %v863 = vadd.f32 %v824, %v833
      %v864 = vadd.f32 %v825, %v833
      %v865 = vadd.f32 %v826, %v833
      %v866 = vadd.f32 %v827, %v833
      %v867 = vld [vmem:[%s299] sm:$0xff]
      %v868 = vld [vmem:[%s299 + $0x8] sm:$0xff]
      %v869 = vld [vmem:[%s299 + $0x10] sm:$0xff]
      %v870 = vld [vmem:[%s299 + $0x18] sm:$0xff]
      %v871 = vld [vmem:[%s299 + $0x20] sm:$0xff]
      %v872 = vld [vmem:[%s299 + $0x28] sm:$0xff]
      %v873 = vld [vmem:[%s299 + $0x30] sm:$0xff]
      %v874 = vld [vmem:[%s299 + $0x38] sm:$0xff]
      %v875 = vld [vmem:[%s299 + $0x40] sm:$0xff]
      %v876 = vld [vmem:[%s299 + $0x48] sm:$0xff]
      %v877 = vld [vmem:[%s299 + $0x50] sm:$0xff]
      %v878 = vld [vmem:[%s299 + $0x58] sm:$0xff]
      %v879 = vld [vmem:[%s299 + $0x60] sm:$0xff]
      %v880 = vld [vmem:[%s299 + $0x68] sm:$0xff]
      %v881 = vld [vmem:[%s299 + $0x70] sm:$0xff]
      %v882 = vld [vmem:[%s299 + $0x78] sm:$0xff]
      %v883 = vld [vmem:[%s299 + $0x80] sm:$0xff]
      %v884 = vld [vmem:[%s299 + $0x88] sm:$0xff]
      %v885 = vld [vmem:[%s299 + $0x90] sm:$0xff]
      %v886 = vld [vmem:[%s299 + $0x98] sm:$0xff]
      %v887 = vld [vmem:[%s299 + $0xa0] sm:$0xff]
      %v888 = vld [vmem:[%s299 + $0xa8] sm:$0xff]
      %v889 = vld [vmem:[%s299 + $0xb0] sm:$0xff]
      %v890 = vld [vmem:[%s299 + $0xb8] sm:$0xff]
      %v891 = vld [vmem:[%s299 + $0xc0] sm:$0xff]
      %v892 = vld [vmem:[%s299 + $0xc8] sm:$0xff]
      %v893 = vld [vmem:[%s299 + $0xd0] sm:$0xff]
      %v894 = vld [vmem:[%s299 + $0xd8] sm:$0xff]
      %v895 = vld [vmem:[%s299 + $0xe0] sm:$0xff]
      %v896 = vld [vmem:[%s299 + $0xe8] sm:$0xff]
      %v897 = vld [vmem:[%s299 + $0xf0] sm:$0xff]
      %v898 = vld [vmem:[%s299 + $0xf8] sm:$0xff]
      %v899 = vadd.f32 %v835, %v867
      %v900 = vadd.f32 %v836, %v868
      %v901 = vadd.f32 %v837, %v869
      %v902 = vadd.f32 %v838, %v870
      %v903 = vadd.f32 %v839, %v871
      %v904 = vadd.f32 %v840, %v872
      %v905 = vadd.f32 %v841, %v873
      %v906 = vadd.f32 %v842, %v874
      %v907 = vadd.f32 %v843, %v875
      %v908 = vadd.f32 %v844, %v876
      %v909 = vadd.f32 %v845, %v877
      %v910 = vadd.f32 %v846, %v878
      %v911 = vadd.f32 %v847, %v879
      %v912 = vadd.f32 %v848, %v880
      %v913 = vadd.f32 %v849, %v881
      %v914 = vadd.f32 %v850, %v882
      %v915 = vadd.f32 %v851, %v883
      %v916 = vadd.f32 %v852, %v884
      %v917 = vadd.f32 %v853, %v885
      %v918 = vadd.f32 %v854, %v886
      %v919 = vadd.f32 %v855, %v887
      %v920 = vadd.f32 %v856, %v888
      %v921 = vadd.f32 %v857, %v889
      %v922 = vadd.f32 %v858, %v890
      %v923 = vadd.f32 %v859, %v891
      %v924 = vadd.f32 %v860, %v892
      %v925 = vadd.f32 %v861, %v893
      %v926 = vadd.f32 %v862, %v894
      %v927 = vadd.f32 %v863, %v895
      %v928 = vadd.f32 %v864, %v896
      %v929 = vadd.f32 %v865, %v897
      %v930 = vadd.f32 %v866, %v898
      %vm931 = vcmp.ge.f32.partialorder %v899, 0.0
      %vm932 = vcmp.ge.f32.partialorder %v900, 0.0
      %vm933 = vcmp.ge.f32.partialorder %v901, 0.0
      %vm934 = vcmp.ge.f32.partialorder %v902, 0.0
      %vm935 = vcmp.ge.f32.partialorder %v903, 0.0
      %vm936 = vcmp.ge.f32.partialorder %v904, 0.0
      %vm937 = vcmp.ge.f32.partialorder %v905, 0.0
      %vm938 = vcmp.ge.f32.partialorder %v906, 0.0
      %vm939 = vcmp.ge.f32.partialorder %v907, 0.0
      %vm940 = vcmp.ge.f32.partialorder %v908, 0.0
      %vm941 = vcmp.ge.f32.partialorder %v909, 0.0
      %vm942 = vcmp.ge.f32.partialorder %v910, 0.0
      %vm943 = vcmp.ge.f32.partialorder %v911, 0.0
      %vm944 = vcmp.ge.f32.partialorder %v912, 0.0
      %vm945 = vcmp.ge.f32.partialorder %v913, 0.0
      %vm946 = vcmp.ge.f32.partialorder %v914, 0.0
      %vm947 = vcmp.ge.f32.partialorder %v915, 0.0
      %vm948 = vcmp.ge.f32.partialorder %v916, 0.0
      %vm949 = vcmp.ge.f32.partialorder %v917, 0.0
      %vm950 = vcmp.ge.f32.partialorder %v918, 0.0
      %vm951 = vcmp.ge.f32.partialorder %v919, 0.0
      %vm952 = vcmp.ge.f32.partialorder %v920, 0.0
      %vm953 = vcmp.ge.f32.partialorder %v921, 0.0
      %vm954 = vcmp.ge.f32.partialorder %v922, 0.0
      %vm955 = vcmp.ge.f32.partialorder %v923, 0.0
      %vm956 = vcmp.ge.f32.partialorder %v924, 0.0
      %vm957 = vcmp.ge.f32.partialorder %v925, 0.0
      %vm958 = vcmp.ge.f32.partialorder %v926, 0.0
      %vm959 = vcmp.ge.f32.partialorder %v927, 0.0
      %vm960 = vcmp.ge.f32.partialorder %v928, 0.0
      %vm961 = vcmp.ge.f32.partialorder %v929, 0.0
      %vm962 = vcmp.ge.f32.partialorder %v930, 0.0
      %v963 = vld [vmem:[%s4] sm:$0x1]
      %v965 = vlaneseq
      %v966 = vshrl.u32 %v965, 7
      %v967 = vsub.s32 0, %v966
      %v968 = vrot.slane %v963, %v967
      %v970 = vmul.f32 %v968, %v899
      %v971 = vmul.f32 %v968, %v900
      %v972 = vmul.f32 %v968, %v901
      %v973 = vmul.f32 %v968, %v902
      %v974 = vmul.f32 %v968, %v903
      %v975 = vmul.f32 %v968, %v904
      %v976 = vmul.f32 %v968, %v905
      %v977 = vmul.f32 %v968, %v906
      %v978 = vmul.f32 %v968, %v907
      %v979 = vmul.f32 %v968, %v908
      %v980 = vmul.f32 %v968, %v909
      %v981 = vmul.f32 %v968, %v910
      %v982 = vmul.f32 %v968, %v911
      %v983 = vmul.f32 %v968, %v912
      %v984 = vmul.f32 %v968, %v913
      %v985 = vmul.f32 %v968, %v914
      %v986 = vmul.f32 %v968, %v915
      %v987 = vmul.f32 %v968, %v916
      %v988 = vmul.f32 %v968, %v917
      %v989 = vmul.f32 %v968, %v918
      %v990 = vmul.f32 %v968, %v919
      %v991 = vmul.f32 %v968, %v920
      %v992 = vmul.f32 %v968, %v921
      %v993 = vmul.f32 %v968, %v922
      %v994 = vmul.f32 %v968, %v923
      %v995 = vmul.f32 %v968, %v924
      %v996 = vmul.f32 %v968, %v925
      %v997 = vmul.f32 %v968, %v926
      %v998 = vmul.f32 %v968, %v927
      %v999 = vmul.f32 %v968, %v928
      %v1000 = vmul.f32 %v968, %v929
      %v1001 = vmul.f32 %v968, %v930
      %v1002 = vsel %vm931, %v899, %v970
      %v1003 = vsel %vm932, %v900, %v971
      %v1004 = vsel %vm933, %v901, %v972
      %v1005 = vsel %vm934, %v902, %v973
      %v1006 = vsel %vm935, %v903, %v974
      %v1007 = vsel %vm936, %v904, %v975
      %v1008 = vsel %vm937, %v905, %v976
      %v1009 = vsel %vm938, %v906, %v977
      %v1010 = vsel %vm939, %v907, %v978
      %v1011 = vsel %vm940, %v908, %v979
      %v1012 = vsel %vm941, %v909, %v980
      %v1013 = vsel %vm942, %v910, %v981
      %v1014 = vsel %vm943, %v911, %v982
      %v1015 = vsel %vm944, %v912, %v983
      %v1016 = vsel %vm945, %v913, %v984
      %v1017 = vsel %vm946, %v914, %v985
      %v1018 = vsel %vm947, %v915, %v986
      %v1019 = vsel %vm948, %v916, %v987
      %v1020 = vsel %vm949, %v917, %v988
      %v1021 = vsel %vm950, %v918, %v989
      %v1022 = vsel %vm951, %v919, %v990
      %v1023 = vsel %vm952, %v920, %v991
      %v1024 = vsel %vm953, %v921, %v992
      %v1025 = vsel %vm954, %v922, %v993
      %v1026 = vsel %vm955, %v923, %v994
      %v1027 = vsel %vm956, %v924, %v995
      %v1028 = vsel %vm957, %v925, %v996
      %v1029 = vsel %vm958, %v926, %v997
      %v1030 = vsel %vm959, %v927, %v998
      %v1031 = vsel %vm960, %v928, %v999
      %v1032 = vsel %vm961, %v929, %v1000
      %v1033 = vsel %vm962, %v930, %v1001
      %v1034 = vld [vmem:[%s6] sm:$0xff]
      %v1035 = vld [vmem:[%s6 + $0x8] sm:$0xff]
      %v1036 = vld [vmem:[%s6 + $0x10] sm:$0xff]
      %v1037 = vld [vmem:[%s6 + $0x18] sm:$0xff]
      %v1038 = vld [vmem:[%s6 + $0x20] sm:$0xff]
      %v1039 = vld [vmem:[%s6 + $0x28] sm:$0xff]
      %v1040 = vld [vmem:[%s6 + $0x30] sm:$0xff]
      %v1041 = vld [vmem:[%s6 + $0x38] sm:$0xff]
      %v1042 = vld [vmem:[%s6 + $0x40] sm:$0xff]
      %v1043 = vld [vmem:[%s6 + $0x48] sm:$0xff]
      %v1044 = vld [vmem:[%s6 + $0x50] sm:$0xff]
      %v1045 = vld [vmem:[%s6 + $0x58] sm:$0xff]
      %v1046 = vld [vmem:[%s6 + $0x60] sm:$0xff]
      %v1047 = vld [vmem:[%s6 + $0x68] sm:$0xff]
      %v1048 = vld [vmem:[%s6 + $0x70] sm:$0xff]
      %v1049 = vld [vmem:[%s6 + $0x78] sm:$0xff]
      %1050 = vmatprep.subr.mxu0 0.0
      %1051 = vmatpush1.msra.mxu0 %v1034
      %1052 = vmatprep.subr.mxu0 0.0
      %1053 = vmatpush1.msra.mxu0 %v1035
      %1054 = vmatprep.subr.mxu0 0.0
      %1055 = vmatpush1.msra.mxu0 %v1036
      %1056 = vmatprep.subr.mxu0 0.0
      %1057 = vmatpush1.msra.mxu0 %v1037
      %1058 = vmatprep.subr.mxu0 0.0
      %1059 = vmatpush1.msra.mxu0 %v1038
      %1060 = vmatprep.subr.mxu0 0.0
      %1061 = vmatpush1.msra.mxu0 %v1039
      %1062 = vmatprep.subr.mxu0 0.0
      %1063 = vmatpush1.msra.mxu0 %v1040
      %1064 = vmatprep.subr.mxu0 0.0
      %1065 = vmatpush1.msra.mxu0 %v1041
      %1066 = vmatprep.subr.mxu0 0.0
      %1067 = vmatpush1.msra.mxu0 %v1042
      %1068 = vmatprep.subr.mxu0 0.0
      %1069 = vmatpush1.msra.mxu0 %v1043
      %1070 = vmatprep.subr.mxu0 0.0
      %1071 = vmatpush1.msra.mxu0 %v1044
      %1072 = vmatprep.subr.mxu0 0.0
      %1073 = vmatpush1.msra.mxu0 %v1045
      %1074 = vmatprep.subr.mxu0 0.0
      %1075 = vmatpush1.msra.mxu0 %v1046
      %1076 = vmatprep.subr.mxu0 0.0
      %1077 = vmatpush1.msra.mxu0 %v1047
      %1078 = vmatprep.subr.mxu0 0.0
      %1079 = vmatpush1.msra.mxu0 %v1048
      %1080 = vmatprep.subr.mxu0 0.0
      %1081 = vmatpush1.msra.mxu0 %v1049
      %1082 = vmatprep.subr.mxu0 0.0
      %1083 = vmatpush1.msra.mxu0 0.0
      %1084 = vmatprep.subr.mxu0 0.0
      %1085 = vmatpush1.msra.mxu0 0.0
      %1086 = vmatprep.subr.mxu0 0.0
      %1087 = vmatpush1.msra.mxu0 0.0
      %1088 = vmatprep.subr.mxu0 0.0
      %1089 = vmatpush1.msra.mxu0 0.0
      %1090 = vmatprep.subr.mxu0 0.0
      %1091 = vmatpush1.msra.mxu0 0.0
      %1092 = vmatprep.subr.mxu0 0.0
      %1093 = vmatpush1.msra.mxu0 0.0
      %1094 = vmatprep.subr.mxu0 0.0
      %1095 = vmatpush1.msra.mxu0 0.0
      %1096 = vmatprep.subr.mxu0 0.0
      %1097 = vmatpush1.msra.mxu0 0.0
      %1098 = vmatprep.subr.mxu0 0.0
      %1099 = vmatpush1.msra.mxu0 0.0
      %1100 = vmatprep.subr.mxu0 0.0
      %1101 = vmatpush1.msra.mxu0 0.0
      %1102 = vmatprep.subr.mxu0 0.0
      %1103 = vmatpush1.msra.mxu0 0.0
      %1104 = vmatprep.subr.mxu0 0.0
      %1105 = vmatpush1.msra.mxu0 0.0
      %1106 = vmatprep.subr.mxu0 0.0
      %1107 = vmatpush1.msra.mxu0 0.0
      %1108 = vmatprep.subr.mxu0 0.0
      %1109 = vmatpush1.msra.mxu0 0.0
      %1110 = vmatprep.subr.mxu0 0.0
      %1111 = vmatpush1.msra.mxu0 0.0
      %1112 = vmatprep.subr.mxu0 0.0
      %1113 = vmatpush1.msra.mxu0 0.0
      %1114 = vmatprep.mubr.f32.mxu0 0.0
      %1115 = vmatmul.mubr.f32.gmra.mrb[0].mxu0 %v1002
      %v1116 = vpop.f32.mrb[0].mxu0
      %v1117 = vadd.f32 0.0, %v1116
      %v1118 = vpop.f32.mrb[0].mxu0
      %1119 = vmatprep.mubr.f32.mxu0 0.0
      %1120 = vmatmul.mubr.f32.gmra.mrb[0].mxu0 %v1003
      %v1121 = vpop.f32.mrb[0].mxu0
      %v1122 = vadd.f32 0.0, %v1121
      %v1123 = vpop.f32.mrb[0].mxu0
      %1124 = vmatprep.mubr.f32.mxu0 0.0
      %1125 = vmatmul.mubr.f32.gmra.mrb[0].mxu0 %v1004
      %v1126 = vpop.f32.mrb[0].mxu0
      %v1127 = vadd.f32 0.0, %v1126
      %v1128 = vpop.f32.mrb[0].mxu0
      %1129 = vmatprep.mubr.f32.mxu0 0.0
      %1130 = vmatmul.mubr.f32.gmra.mrb[0].mxu0 %v1005
      %v1131 = vpop.f32.mrb[0].mxu0
      %v1132 = vadd.f32 0.0, %v1131
      %v1133 = vpop.f32.mrb[0].mxu0
      %1134 = vmatprep.mubr.f32.mxu0 0.0
      %1135 = vmatmul.mubr.f32.gmra.mrb[0].mxu0 %v1006
      %v1136 = vpop.f32.mrb[0].mxu0
      %v1137 = vadd.f32 0.0, %v1136
      %v1138 = vpop.f32.mrb[0].mxu0
      %1139 = vmatprep.mubr.f32.mxu0 0.0
      %1140 = vmatmul.mubr.f32.gmra.mrb[0].mxu0 %v1007
      %v1141 = vpop.f32.mrb[0].mxu0
      %v1142 = vadd.f32 0.0, %v1141
      %v1143 = vpop.f32.mrb[0].mxu0
      %1144 = vmatprep.mubr.f32.mxu0 0.0
      %1145 = vmatmul.mubr.f32.gmra.mrb[0].mxu0 %v1008
      %v1146 = vpop.f32.mrb[0].mxu0
      %v1147 = vadd.f32 0.0, %v1146
      %v1148 = vpop.f32.mrb[0].mxu0
      %1149 = vmatprep.mubr.f32.mxu0 0.0
      %1150 = vmatmul.mubr.f32.gmra.mrb[0].mxu0 %v1009
      %v1151 = vpop.f32.mrb[0].mxu0
      %v1152 = vadd.f32 0.0, %v1151
      %v1153 = vpop.f32.mrb[0].mxu0
      %1154 = vmatprep.mubr.f32.mxu0 0.0
      %1155 = vmatmul.mubr.f32.gmra.mrb[0].mxu0 %v1010
      %v1156 = vpop.f32.mrb[0].mxu0
      %v1157 = vadd.f32 0.0, %v1156
      %v1158 = vpop.f32.mrb[0].mxu0
      %1159 = vmatprep.mubr.f32.mxu0 0.0
      %1160 = vmatmul.mubr.f32.gmra.mrb[0].mxu0 %v1011
      %v1161 = vpop.f32.mrb[0].mxu0
      %v1162 = vadd.f32 0.0, %v1161
      %v1163 = vpop.f32.mrb[0].mxu0
      %1164 = vmatprep.mubr.f32.mxu0 0.0
      %1165 = vmatmul.mubr.f32.gmra.mrb[0].mxu0 %v1012
      %v1166 = vpop.f32.mrb[0].mxu0
      %v1167 = vadd.f32 0.0, %v1166
      %v1168 = vpop.f32.mrb[0].mxu0
      %1169 = vmatprep.mubr.f32.mxu0 0.0
      %1170 = vmatmul.mubr.f32.gmra.mrb[0].mxu0 %v1013
      %v1171 = vpop.f32.mrb[0].mxu0
      %v1172 = vadd.f32 0.0, %v1171
      %v1173 = vpop.f32.mrb[0].mxu0
      %1174 = vmatprep.mubr.f32.mxu0 0.0
      %1175 = vmatmul.mubr.f32.gmra.mrb[0].mxu0 %v1014
      %v1176 = vpop.f32.mrb[0].mxu0
      %v1177 = vadd.f32 0.0, %v1176
      %v1178 = vpop.f32.mrb[0].mxu0
      %1179 = vmatprep.mubr.f32.mxu0 0.0
      %1180 = vmatmul.mubr.f32.gmra.mrb[0].mxu0 %v1015
      %v1181 = vpop.f32.mrb[0].mxu0
      %v1182 = vadd.f32 0.0, %v1181
      %v1183 = vpop.f32.mrb[0].mxu0
      %1184 = vmatprep.mubr.f32.mxu0 0.0
      %1185 = vmatmul.mubr.f32.gmra.mrb[0].mxu0 %v1016
      %v1186 = vpop.f32.mrb[0].mxu0
      %v1187 = vadd.f32 0.0, %v1186
      %v1188 = vpop.f32.mrb[0].mxu0
      %1189 = vmatprep.mubr.f32.mxu0 0.0
      %1190 = vmatmul.mubr.f32.gmra.mrb[0].mxu0 %v1017
      %v1191 = vpop.f32.mrb[0].mxu0
      %v1192 = vadd.f32 0.0, %v1191
      %v1193 = vpop.f32.mrb[0].mxu0
      %1194 = vmatprep.mubr.f32.mxu0 0.0
      %1195 = vmatmul.mubr.f32.gmra.mrb[0].mxu0 %v1018
      %v1196 = vpop.f32.mrb[0].mxu0
      %v1197 = vadd.f32 0.0, %v1196
      %v1198 = vpop.f32.mrb[0].mxu0
      %1199 = vmatprep.mubr.f32.mxu0 0.0
      %1200 = vmatmul.mubr.f32.gmra.mrb[0].mxu0 %v1019
      %v1201 = vpop.f32.mrb[0].mxu0
      %v1202 = vadd.f32 0.0, %v1201
      %v1203 = vpop.f32.mrb[0].mxu0
      %1204 = vmatprep.mubr.f32.mxu0 0.0
      %1205 = vmatmul.mubr.f32.gmra.mrb[0].mxu0 %v1020
      %v1206 = vpop.f32.mrb[0].mxu0
      %v1207 = vadd.f32 0.0, %v1206
      %v1208 = vpop.f32.mrb[0].mxu0
      %1209 = vmatprep.mubr.f32.mxu0 0.0
      %1210 = vmatmul.mubr.f32.gmra.mrb[0].mxu0 %v1021
      %v1211 = vpop.f32.mrb[0].mxu0
      %v1212 = vadd.f32 0.0, %v1211
      %v1213 = vpop.f32.mrb[0].mxu0
      %1214 = vmatprep.mubr.f32.mxu0 0.0
      %1215 = vmatmul.mubr.f32.gmra.mrb[0].mxu0 %v1022
      %v1216 = vpop.f32.mrb[0].mxu0
      %v1217 = vadd.f32 0.0, %v1216
      %v1218 = vpop.f32.mrb[0].mxu0
      %1219 = vmatprep.mubr.f32.mxu0 0.0
      %1220 = vmatmul.mubr.f32.gmra.mrb[0].mxu0 %v1023
      %v1221 = vpop.f32.mrb[0].mxu0
      %v1222 = vadd.f32 0.0, %v1221
      %v1223 = vpop.f32.mrb[0].mxu0
      %1224 = vmatprep.mubr.f32.mxu0 0.0
      %1225 = vmatmul.mubr.f32.gmra.mrb[0].mxu0 %v1024
      %v1226 = vpop.f32.mrb[0].mxu0
      %v1227 = vadd.f32 0.0, %v1226
      %v1228 = vpop.f32.mrb[0].mxu0
      %1229 = vmatprep.mubr.f32.mxu0 0.0
      %1230 = vmatmul.mubr.f32.gmra.mrb[0].mxu0 %v1025
      %v1231 = vpop.f32.mrb[0].mxu0
      %v1232 = vadd.f32 0.0, %v1231
      %v1233 = vpop.f32.mrb[0].mxu0
      %1234 = vmatprep.mubr.f32.mxu0 0.0
      %1235 = vmatmul.mubr.f32.gmra.mrb[0].mxu0 %v1026
      %v1236 = vpop.f32.mrb[0].mxu0
      %v1237 = vadd.f32 0.0, %v1236
      %v1238 = vpop.f32.mrb[0].mxu0
      %1239 = vmatprep.mubr.f32.mxu0 0.0
      %1240 = vmatmul.mubr.f32.gmra.mrb[0].mxu0 %v1027
      %v1241 = vpop.f32.mrb[0].mxu0
      %v1242 = vadd.f32 0.0, %v1241
      %v1243 = vpop.f32.mrb[0].mxu0
      %1244 = vmatprep.mubr.f32.mxu0 0.0
      %1245 = vmatmul.mubr.f32.gmra.mrb[0].mxu0 %v1028
      %v1246 = vpop.f32.mrb[0].mxu0
      %v1247 = vadd.f32 0.0, %v1246
      %v1248 = vpop.f32.mrb[0].mxu0
      %1249 = vmatprep.mubr.f32.mxu0 0.0
      %1250 = vmatmul.mubr.f32.gmra.mrb[0].mxu0 %v1029
      %v1251 = vpop.f32.mrb[0].mxu0
      %v1252 = vadd.f32 0.0, %v1251
      %v1253 = vpop.f32.mrb[0].mxu0
      %1254 = vmatprep.mubr.f32.mxu0 0.0
      %1255 = vmatmul.mubr.f32.gmra.mrb[0].mxu0 %v1030
      %v1256 = vpop.f32.mrb[0].mxu0
      %v1257 = vadd.f32 0.0, %v1256
      %v1258 = vpop.f32.mrb[0].mxu0
      %1259 = vmatprep.mubr.f32.mxu0 0.0
      %1260 = vmatmul.mubr.f32.gmra.mrb[0].mxu0 %v1031
      %v1261 = vpop.f32.mrb[0].mxu0
      %v1262 = vadd.f32 0.0, %v1261
      %v1263 = vpop.f32.mrb[0].mxu0
      %1264 = vmatprep.mubr.f32.mxu0 0.0
      %1265 = vmatmul.mubr.f32.gmra.mrb[0].mxu0 %v1032
      %v1266 = vpop.f32.mrb[0].mxu0
      %v1267 = vadd.f32 0.0, %v1266
      %v1268 = vpop.f32.mrb[0].mxu0
      %1269 = vmatprep.mubr.f32.mxu0 0.0
      %1270 = vmatmul.mubr.f32.gmra.mrb[0].mxu0 %v1033
      %v1271 = vpop.f32.mrb[0].mxu0
      %v1272 = vadd.f32 0.0, %v1271
      %v1273 = vpop.f32.mrb[0].mxu0
      %1274 = vdwg.mxu0
      %1275 = vst [vmem:[%s305] sm:$0xff] %v1117
      %1276 = vst [vmem:[%s305 + $0x8] sm:$0xff] %v1122
      %1277 = vst [vmem:[%s305 + $0x10] sm:$0xff] %v1127
      %1278 = vst [vmem:[%s305 + $0x18] sm:$0xff] %v1132
      %1279 = vst [vmem:[%s305 + $0x20] sm:$0xff] %v1137
      %1280 = vst [vmem:[%s305 + $0x28] sm:$0xff] %v1142
      %1281 = vst [vmem:[%s305 + $0x30] sm:$0xff] %v1147
      %1282 = vst [vmem:[%s305 + $0x38] sm:$0xff] %v1152
      %1283 = vst [vmem:[%s305 + $0x40] sm:$0xff] %v1157
      %1284 = vst [vmem:[%s305 + $0x48] sm:$0xff] %v1162
      %1285 = vst [vmem:[%s305 + $0x50] sm:$0xff] %v1167
      %1286 = vst [vmem:[%s305 + $0x58] sm:$0xff] %v1172
      %1287 = vst [vmem:[%s305 + $0x60] sm:$0xff] %v1177
      %1288 = vst [vmem:[%s305 + $0x68] sm:$0xff] %v1182
      %1289 = vst [vmem:[%s305 + $0x70] sm:$0xff] %v1187
      %1290 = vst [vmem:[%s305 + $0x78] sm:$0xff] %v1192
      %1291 = vst [vmem:[%s305 + $0x80] sm:$0xff] %v1197
      %1292 = vst [vmem:[%s305 + $0x88] sm:$0xff] %v1202
      %1293 = vst [vmem:[%s305 + $0x90] sm:$0xff] %v1207
      %1294 = vst [vmem:[%s305 + $0x98] sm:$0xff] %v1212
      %1295 = vst [vmem:[%s305 + $0xa0] sm:$0xff] %v1217
      %1296 = vst [vmem:[%s305 + $0xa8] sm:$0xff] %v1222
      %1297 = vst [vmem:[%s305 + $0xb0] sm:$0xff] %v1227
      %1298 = vst [vmem:[%s305 + $0xb8] sm:$0xff] %v1232
      %1299 = vst [vmem:[%s305 + $0xc0] sm:$0xff] %v1237
      %1300 = vst [vmem:[%s305 + $0xc8] sm:$0xff] %v1242
      %1301 = vst [vmem:[%s305 + $0xd0] sm:$0xff] %v1247
      %1302 = vst [vmem:[%s305 + $0xd8] sm:$0xff] %v1252
      %1303 = vst [vmem:[%s305 + $0xe0] sm:$0xff] %v1257
      %1304 = vst [vmem:[%s305 + $0xe8] sm:$0xff] %v1262
      %1305 = vst [vmem:[%s305 + $0xf0] sm:$0xff] %v1267
      %1306 = vst [vmem:[%s305 + $0xf8] sm:$0xff] %v1272
      %s1307 = smul.u32 32, %s18
      %p1308 = scmp.lt.s32.totalorder %s1307, 63
      %s1309 = scalar_select %p1308, %s1307, 63
      %s1310 = smul.addr %s1309, 8
      %s1311 = scalar_lea.vmem %s7, %s1310
      // Predicated region
      $region49: #{decoder_group_forward.11} parent=47 // pred_check
        %p1312 = pneg %p193
      $region50: #{decoder_group_forward.11} parent=47 // pred_check_branch
        %1314 = sbr.rel (%p1312) target = $region52
      $region51: #{decoder_group_forward.11} parent=47 // pred_region
        %s1315 = smul.u32 32, %s18
      $region52: #{decoder_group_forward.11} parent=47 // pred_fallthru
        _
    $region48: #{decoder_group_forward.11} parent=5 // pred_fallthru
      _
    %p1316 = scmp.le.s32.totalorder 2, %s13
    // Predicated region
    $region53: #{decoder_group_forward.11} parent=5 // pred_check
      %p1317 = pneg %p1316
    $region54: #{decoder_group_forward.11} parent=5 // pred_check_branch
      %1319 = sbr.rel (%p1317) target = $region56
    $region55: #{decoder_group_forward.11} parent=5 // pred_region
      %s1320 = ssub.s32 %s13, 2
      // Predicated region
      $region57: #{decoder_group_forward.11} parent=55 // pred_check
        %p1321 = pneg %p199
      $region58: #{decoder_group_forward.11} parent=55 // pred_check_branch
        %1323 = sbr.rel (%p1321) target = $region60
      $region59: #{decoder_group_forward.11} parent=55 // pred_region
        %s1324 = smul.u32 32, %s19
        %p1325 = scmp.lt.s32.totalorder %s1324, 63
        %s1326 = scalar_select %p1325, %s1324, 63
        %s1327 = smul.addr %s1326, 8
        %s1328 = scalar_lea.vmem %s7, %s1327
      $region60: #{decoder_group_forward.11} parent=55 // pred_fallthru
        _
    $region56: #{decoder_group_forward.11} parent=5 // pred_fallthru
      _
  $region6: #{decoder_group_forward.11} parent=0 // loop_footer
    %s17 = sadd.s32 1, %s13
  $region7: #{decoder_group_forward.11} parent=0 // loop_footer_branch
    %12 = sbr.rel target = $region3
  $region8: #{decoder_group_forward.11} parent=0 // loop_exit
    _

</llo_original>
